<compile_context>
chip_gen: v6e
topology: v6e:2x2x1
jax: 0.10.0
libtpu: 0.0.40
codegen_flags: <defaults>
</compile_context>

<pallas_src>
import functools

import numpy as np
import jax
import jax.numpy as jnp
from jax.experimental import pallas as pl
from jax.experimental.pallas import tpu as pltpu


# ----------------------------- Pallas kernels --------------------------------
def _mm_affine_kernel(x_ref, w_ref, sb_ref, o_ref, *, apply_relu):
    # Fused:  out = relu?((x @ w) * scale + bias)   (bf16 MXU, f32 epilogue)
    acc = jnp.dot(x_ref[...].astype(jnp.bfloat16), w_ref[...],
                  preferred_element_type=jnp.float32)
    y = acc * sb_ref[0:1, :] + sb_ref[1:2, :]
    if apply_relu:
        y = jnp.maximum(y, 0.0)
    o_ref[...] = y.astype(o_ref.dtype)


def _conv3x3_kernel(x_ref, w_ref, sb_ref, o_ref, *, width, out_rows):
    # x_ref : (1, (H+2)*W, 3*Cin) f32   W-im2col'd (dx taps on channels), H-padded, flattened
    # w_ref : (3, 3*Cin, Cout)    bf16  one (3*Cin, Cout) matrix per row tap dy
    # sb_ref: (2, Cout)           f32   row 0 = folded-BN scale, row 1 = bias
    acc = None
    for dy in range(3):                          # in-kernel row-tap accumulation
        start = dy * width                       # multiples of W (8-sublane aligned, f32)
        patch = x_ref[0, start:start + out_rows, :].astype(jnp.bfloat16)
        part = jnp.dot(patch, w_ref[dy], preferred_element_type=jnp.float32)
        acc = part if acc is None else acc + part
    y = jnp.maximum(acc * sb_ref[0:1, :] + sb_ref[1:2, :], 0.0)
    o_ref[0] = y.astype(o_ref.dtype)


def _conv3x3_head_kernel(x_ref, w_ref, sb_ref, wh_ref, bh_ref, o_ref, *, width, out_rows):
    # Same as _conv3x3_kernel, plus a fused 1x1 head:  logits = relu(conv+bn) @ wh + bh
    # wh_ref: (Cout, NP) bf16 (NP = num_classes padded to 128 lanes), bh_ref: (1, NP) f32.
    acc = None
    for dy in range(3):
        start = dy * width
        patch = x_ref[0, start:start + out_rows, :].astype(jnp.bfloat16)
        part = jnp.dot(patch, w_ref[dy], preferred_element_type=jnp.float32)
        acc = part if acc is None else acc + part
    y = jnp.maximum(acc * sb_ref[0:1, :] + sb_ref[1:2, :], 0.0)
    logits = jnp.dot(y.astype(jnp.bfloat16), wh_ref[...],
                     preferred_element_type=jnp.float32) + bh_ref[...]
    o_ref[0] = logits.astype(o_ref.dtype)        # 128-lane dense stores


# ----------------------------- kernel wrappers --------------------------------
def matmul_affine(x, w, sb, *, apply_relu, out_dtype=jnp.float32):
    """out = relu?((x @ w) * scale + bias).  x:(M,K) f32, w:(K,N) bf16, sb:(2,N) f32."""
    M, K = x.shape
    Kw, N = w.shape
    assert K == Kw
    # Pick a row tile dividing M (no XLA-side padding copy); keep grid >= 2 parallel steps.
    tm = None
    for cand in (512, 256, 128, 64, 32, 16, 8):
        if M % cand == 0 and M // cand >= 2:
            tm = cand
            break
    padded = False
    if tm is None:                                # fallback: pad M up (rare)
        tm = min(256, max(8, -(-M // 8) * 8))
        Mp = -(-M // tm) * tm
        if Mp != M:
            x = jnp.pad(x, ((0, Mp - M), (0, 0)))
            padded = True
        M_run = Mp
    else:
        M_run = M

    out = pl.pallas_call(
        functools.partial(_mm_affine_kernel, apply_relu=apply_relu),
        out_shape=jax.ShapeDtypeStruct((M_run, N), out_dtype),
        grid_spec=pltpu.PrefetchScalarGridSpec(
            num_scalar_prefetch=0,
            grid=(M_run // tm,),
            in_specs=[
                pl.BlockSpec((tm, K), lambda i: (i, 0)),   # activations tile
                pl.BlockSpec((K, N), lambda i: (0, 0)),    # full weight (resident)
                pl.BlockSpec((2, N), lambda i: (0, 0)),    # merged scale/bias
            ],
            out_specs=pl.BlockSpec((tm, N), lambda i: (i, 0)),
        ),
        compiler_params=pltpu.CompilerParams(dimension_semantics=("parallel",)),
    )(x, w, sb)
    return out[:M] if padded else out


def _wtaps_pad_flatten(x_nhwc):
    """W-only im2col (3 dx taps concatenated on channels), H zero-pad, flatten per image.

    (N,H,W,C) f32 -> (N, (H+2)*W, 3C) f32.  Kept f32 so the in-kernel row-tap slices
    (offsets dy*W) stay sublane-aligned.
    """
    N, H, W, C = x_nhwc.shape
    xpw = jnp.pad(x_nhwc, ((0, 0), (0, 0), (1, 1), (0, 0)))                    # pad W
    xw = jnp.concatenate([xpw[:, :, dx:dx + W, :] for dx in range(3)], axis=-1)  # (N,H,W,3C)
    xwp = jnp.pad(xw, ((0, 0), (1, 1), (0, 0), (0, 0)))                        # pad H
    return xwp.reshape(N, (H + 2) * W, 3 * C)


def _conv3x3_call(kernel, x_nhwc, w_taps, sb, extra_inputs, extra_specs, n_out, out_dtype):
    N, H, W, C = x_nhwc.shape
    assert W % 8 == 0, "W must be a multiple of 8 for aligned in-kernel row-tap slices"
    P = (H + 2) * W
    HW = H * W
    xf = _wtaps_pad_flatten(x_nhwc)

    out = pl.pallas_call(
        functools.partial(kernel, width=W, out_rows=HW),
        out_shape=jax.ShapeDtypeStruct((N, HW, n_out), out_dtype),
        grid_spec=pltpu.PrefetchScalarGridSpec(
            num_scalar_prefetch=0,
            grid=(N,),                                   # per-image block, parallel steps
            in_specs=[
                pl.BlockSpec((1, P, 3 * C), lambda n: (n, 0, 0)),
                pl.BlockSpec((3, 3 * C, w_taps.shape[-1]), lambda n: (0, 0, 0)),
                pl.BlockSpec((2, w_taps.shape[-1]), lambda n: (0, 0)),
            ] + extra_specs,
            out_specs=pl.BlockSpec((1, HW, n_out), lambda n: (n, 0, 0)),
        ),
        compiler_params=pltpu.CompilerParams(dimension_semantics=("parallel",)),
    )(xf, w_taps, sb, *extra_inputs)
    return out.reshape(N, H, W, n_out)


def conv3x3_bn_relu(x_nhwc, w_taps, sb):
    """3x3 conv (stride 1, pad 1, no bias) + folded BN + ReLU."""
    return _conv3x3_call(_conv3x3_kernel, x_nhwc, w_taps, sb,
                         extra_inputs=[], extra_specs=[],
                         n_out=w_taps.shape[-1], out_dtype=jnp.float32)


def conv3x3_bn_relu_head(x_nhwc, w_taps, sb, w_head, b_head):
    """3x3 conv + BN + ReLU, fused with the final 1x1 conv (bias, no BN/ReLU)."""
    NP = w_head.shape[-1]
    extra_specs = [
        pl.BlockSpec((w_head.shape[0], NP), lambda n: (0, 0)),   # head weight (resident)
        pl.BlockSpec((1, NP), lambda n: (0, 0)),                  # head bias
    ]
    return _conv3x3_call(_conv3x3_head_kernel, x_nhwc, w_taps, sb,
                         extra_inputs=[w_head, b_head], extra_specs=extra_specs,
                         n_out=NP, out_dtype=jnp.float32)


# ------------------------------- JAX glue ------------------------------------
def _bilinear_align_corners(x_nhwc, out_h, out_w):
    """Bilinear resize matching F.interpolate(..., mode='bilinear', align_corners=True)."""
    N, H, W, C = x_nhwc.shape

    def coords(in_size, out_size):
        if out_size == 1:
            src = np.zeros((out_size,), np.float32)
        else:
            src = np.arange(out_size, dtype=np.float32) * (in_size - 1) / (out_size - 1)
        lo = np.clip(np.floor(src).astype(np.int32), 0, in_size - 1)
        hi = np.clip(lo + 1, 0, in_size - 1)
        frac = (src - lo).astype(np.float32)
        return jnp.asarray(lo), jnp.asarray(hi), jnp.asarray(frac)

    ylo, yhi, yf = coords(H, out_h)
    xlo, xhi, xf = coords(W, out_w)
    top = (x_nhwc[:, ylo] * (1.0 - yf)[None, :, None, None]
           + x_nhwc[:, yhi] * yf[None, :, None, None])
    out = (top[:, :, xlo] * (1.0 - xf)[None, None, :, None]
           + top[:, :, xhi] * xf[None, None, :, None])
    return out


# --------------------------- parameter creation -------------------------------
_BN_EPS = 1e-5


def _fold_bn(key, c):
    k1, k2, k3, k4 = jax.random.split(key, 4)
    gamma = 1.0 + 0.1 * jax.random.normal(k1, (c,), jnp.float32)
    beta = 0.1 * jax.random.normal(k2, (c,), jnp.float32)
    mean = 0.1 * jax.random.normal(k3, (c,), jnp.float32)
    var = 1.0 + 0.1 * jnp.abs(jax.random.normal(k4, (c,), jnp.float32))
    scale = gamma * jax.lax.rsqrt(var + _BN_EPS)
    bias = beta - mean * scale
    return scale.reshape(1, c), bias.reshape(1, c)


def init_decoder_params(key, num_classes, low_level_inplanes):
    ks = jax.random.split(key, 8)

    def conv_w(k, kh, kw, cin, cout):           # HWIO layout
        fan_in = kh * kw * cin
        return jax.random.normal(k, (kh, kw, cin, cout), jnp.float32) / np.sqrt(fan_in)

    p = {}
    # conv1 (1x1, low_level_inplanes -> 48, no bias) + bn1 (folded)
    w1 = conv_w(ks[0], 1, 1, low_level_inplanes, 48)
    s1, b1 = _fold_bn(ks[1], 48)
    p["w1"] = w1.reshape(low_level_inplanes, 48).astype(jnp.bfloat16)
    p["sb1"] = jnp.concatenate([s1, b1], axis=0)                       # (2, 48) f32

    # last_conv[0]: 3x3, 304 -> 256, no bias, + BN (folded)
    w2 = conv_w(ks[2], 3, 3, 304, 256)
    s2, b2 = _fold_bn(ks[3], 256)
    p["w2"] = w2.reshape(3, 3 * 304, 256).astype(jnp.bfloat16)         # per-dy (3*Cin, Cout)
    p["sb2"] = jnp.concatenate([s2, b2], axis=0)                       # (2, 256)

    # last_conv[4]: 3x3, 256 -> 256, no bias, + BN (folded)
    w3 = conv_w(ks[4], 3, 3, 256, 256)
    s3, b3 = _fold_bn(ks[5], 256)
    p["w3"] = w3.reshape(3, 3 * 256, 256).astype(jnp.bfloat16)
    p["sb3"] = jnp.concatenate([s3, b3], axis=0)

    # last_conv[8]: 1x1, 256 -> num_classes, with bias; pad out-channels to 128 lanes.
    ncp = max(128, -(-num_classes // 128) * 128)
    w4 = conv_w(ks[6], 1, 1, 256, num_classes).reshape(256, num_classes)
    b4 = 0.1 * jax.random.normal(ks[7], (num_classes,), jnp.float32)
    p["w4"] = jnp.pad(w4, ((0, 0), (0, ncp - num_classes))).astype(jnp.bfloat16)   # (256, ncp)
    p["b4"] = jnp.pad(b4, (0, ncp - num_classes)).reshape(1, ncp)                   # (1, ncp) f32
    return p


# ------------------------------ forward pass ----------------------------------
def decoder_forward(params, x_nchw, low_nchw, num_classes):
    x = jnp.transpose(x_nchw, (0, 2, 3, 1)).astype(jnp.float32)      # NHWC
    low = jnp.transpose(low_nchw, (0, 2, 3, 1)).astype(jnp.float32)  # NHWC
    N, Hl, Wl, Cl = low.shape

    # conv1 (1x1) + bn1 + relu  -> Pallas fused matmul kernel
    low2 = matmul_affine(low.reshape(N * Hl * Wl, Cl), params["w1"], params["sb1"],
                         apply_relu=True)
    low2 = low2.reshape(N, Hl, Wl, 48)

    # bilinear upsample x to low-level spatial size (align_corners=True) -- JAX glue
    x_up = _bilinear_align_corners(x, Hl, Wl)

    # channel concat: torch.cat((x, low_level_feat), dim=1) -> channels-last concat
    cat = jnp.concatenate([x_up, low2], axis=-1)                      # (N, Hl, Wl, 304)

    # last_conv[0..3]: 3x3 conv + BN + ReLU (+Dropout(0.5)=identity in eval)
    h = conv3x3_bn_relu(cat, params["w2"], params["sb2"])             # (N, Hl, Wl, 256)

    # last_conv[4..8]: 3x3 conv + BN + ReLU (+Dropout(0.1)=identity) fused with the
    # final 1x1 conv (bias, no BN/ReLU); output channels padded to 128 lanes.
    logits = conv3x3_bn_relu_head(h, params["w3"], params["sb3"],
                                  params["w4"], params["b4"])         # (N, Hl, Wl, 128)
    out = logits[..., :num_classes]
    return jnp.transpose(out, (0, 3, 1, 2))                           # back to NCHW


# ---------------------------------- main ---------------------------------------
if __name__ == "__main__":
    num_classes = 3
    low_level_inplanes = 4

    key = jax.random.PRNGKey(0)
    k_params, k_x, k_low = jax.random.split(key, 3)

    params = init_decoder_params(k_params, num_classes, low_level_inplanes)

    # x comes from the ASPP head: 256 channels (required since 256 + 48 = 304),
    # at a coarser spatial resolution than the low-level features.
    x = jax.random.normal(k_x, (2, 256, 4, 4), jnp.float32)                       # NCHW
    low_level_feat = jax.random.normal(k_low, (2, low_level_inplanes, 8, 8), jnp.float32)  # NCHW

    fwd = jax.jit(decoder_forward, static_argnames=("num_classes",))
    out = fwd(params, x, low_level_feat, num_classes=num_classes)
    out = jax.block_until_ready(out)
    assert out.shape == (2, num_classes, 8, 8), out.shape
    assert bool(jnp.all(jnp.isfinite(out)))
    print("KERNEL_OK")
</pallas_src>

<mosaic_0001>
module attributes {stable_mosaic.version = 11 : i64} {
  func.func @_mm_affine_kernel(%arg0: i32, %arg1: memref<64x4xf32, #tpu.memory_space<vmem>>, %arg2: memref<4x48xbf16, #tpu.memory_space<vmem>>, %arg3: memref<2x48xf32, #tpu.memory_space<vmem>>, %arg4: memref<64x48xf32, #tpu.memory_space<vmem>>) attributes {dimension_semantics = [#tpu.dimension_semantics<parallel>], iteration_bounds = array<i64: 2>, scalar_prefetch = 0 : i64, scratch_operands = 0 : i64, tpu.core_type = #tpu.core_type<tc>, window_params = [{transform_indices = @transform_0, window_bounds = array<i64: 64, 4>}, {pipeline_mode = #tpu.pipeline_mode<synchronous>, transform_indices = @transform_1, window_bounds = array<i64: 4, 48>}, {pipeline_mode = #tpu.pipeline_mode<synchronous>, transform_indices = @transform_2, window_bounds = array<i64: 2, 48>}, {transform_indices = @transform_3, window_bounds = array<i64: 64, 48>}]} {
    %c0 = arith.constant 0 : index
    %c0_0 = arith.constant 0 : index
    %0 = vector.load %arg1[%c0, %c0_0] : memref<64x4xf32, #tpu.memory_space<vmem>>, vector<64x4xf32>
    %1 = arith.truncf %0 : vector<64x4xf32> to vector<64x4xbf16>
    %c0_1 = arith.constant 0 : index
    %c0_2 = arith.constant 0 : index
    %2 = vector.load %arg2[%c0_1, %c0_2] : memref<4x48xbf16, #tpu.memory_space<vmem>>, vector<4x48xbf16>
    %cst = arith.constant dense<0.000000e+00> : vector<64x48xf32>
    %3 = tpu.matmul %1, %2, %cst {dimension_numbers = #tpu.dot_dimension_numbers<[1], [0], [0], [1], [0, 0, 1, 1], [], []>} : vector<64x4xbf16>, vector<4x48xbf16>, vector<64x48xf32> -> vector<64x48xf32>
    %c0_3 = arith.constant 0 : index
    %c0_4 = arith.constant 0 : index
    %4 = vector.load %arg3[%c0_3, %c0_4] : memref<2x48xf32, #tpu.memory_space<vmem>>, vector<1x48xf32>
    %5 = vector.broadcast %4 : vector<1x48xf32> to vector<64x48xf32>
    %6 = arith.mulf %3, %5 : vector<64x48xf32>
    %c1 = arith.constant 1 : index
    %c0_5 = arith.constant 0 : index
    %7 = vector.load %arg3[%c1, %c0_5] : memref<2x48xf32, #tpu.memory_space<vmem>>, vector<1x48xf32>
    %8 = vector.broadcast %7 : vector<1x48xf32> to vector<64x48xf32>
    %9 = arith.addf %6, %8 : vector<64x48xf32>
    %cst_6 = arith.constant 0.000000e+00 : f32
    %10 = vector.broadcast %cst_6 : f32 to vector<64x48xf32>
    %11 = arith.maximumf %9, %10 : vector<64x48xf32>
    %c0_7 = arith.constant 0 : index
    %c0_8 = arith.constant 0 : index
    %12 = vector.load %arg4[%c0_7, %c0_8] : memref<64x48xf32, #tpu.memory_space<vmem>>, vector<64x48xf32>
    tpu.vector_store %arg4[%c0_7, %c0_8], %11 {strides = array<i32>} : memref<64x48xf32, #tpu.memory_space<vmem>>, vector<64x48xf32>,
    return
  }
  func.func @transform_0(%arg0: i32) -> (i32, i32) {
    %c0_i32 = arith.constant 0 : i32
    %c0_i32_0 = arith.constant 0 : i32
    return %arg0, %c0_i32 : i32, i32
  }
  func.func @transform_1(%arg0: i32) -> (i32, i32) {
    %c0_i32 = arith.constant 0 : i32
    %c0_i32_0 = arith.constant 0 : i32
    %c0_i32_1 = arith.constant 0 : i32
    return %c0_i32, %c0_i32_0 : i32, i32
  }
  func.func @transform_2(%arg0: i32) -> (i32, i32) {
    %c0_i32 = arith.constant 0 : i32
    %c0_i32_0 = arith.constant 0 : i32
    %c0_i32_1 = arith.constant 0 : i32
    return %c0_i32, %c0_i32_0 : i32, i32
  }
  func.func @transform_3(%arg0: i32) -> (i32, i32) {
    %c0_i32 = arith.constant 0 : i32
    %c0_i32_0 = arith.constant 0 : i32
    return %arg0, %c0_i32 : i32, i32
  }
}

module attributes {stable_mosaic.version = 11 : i64} {
  func.func @_conv3x3_kernel(%arg0: i32, %arg1: memref<1x80x912xf32, #tpu.memory_space<vmem>>, %arg2: memref<3x912x256xbf16, #tpu.memory_space<vmem>>, %arg3: memref<2x256xf32, #tpu.memory_space<vmem>>, %arg4: memref<1x64x256xf32, #tpu.memory_space<vmem>>) attributes {dimension_semantics = [#tpu.dimension_semantics<parallel>], iteration_bounds = array<i64: 2>, scalar_prefetch = 0 : i64, scratch_operands = 0 : i64, tpu.core_type = #tpu.core_type<tc>, window_params = [{transform_indices = @transform_0, window_bounds = array<i64: 1, 80, 912>}, {pipeline_mode = #tpu.pipeline_mode<synchronous>, transform_indices = @transform_1, window_bounds = array<i64: 3, 912, 256>}, {pipeline_mode = #tpu.pipeline_mode<synchronous>, transform_indices = @transform_2, window_bounds = array<i64: 2, 256>}, {transform_indices = @transform_3, window_bounds = array<i64: 1, 64, 256>}]} {
    %c0 = arith.constant 0 : index
    %c0_0 = arith.constant 0 : index
    %c0_1 = arith.constant 0 : index
    %0 = vector.load %arg1[%c0, %c0_0, %c0_1] : memref<1x80x912xf32, #tpu.memory_space<vmem>>, vector<1x64x912xf32>
    %1 = vector.shape_cast %0 : vector<1x64x912xf32> to vector<64x912xf32>
    %2 = arith.truncf %1 : vector<64x912xf32> to vector<64x912xbf16>
    %c0_2 = arith.constant 0 : index
    %c0_3 = arith.constant 0 : index
    %c0_4 = arith.constant 0 : index
    %3 = vector.load %arg2[%c0_2, %c0_3, %c0_4] : memref<3x912x256xbf16, #tpu.memory_space<vmem>>, vector<1x912x256xbf16>
    %4 = vector.shape_cast %3 : vector<1x912x256xbf16> to vector<912x256xbf16>
    %cst = arith.constant dense<0.000000e+00> : vector<64x256xf32>
    %5 = tpu.matmul %2, %4, %cst {dimension_numbers = #tpu.dot_dimension_numbers<[1], [0], [0], [1], [0, 0, 1, 1], [], []>} : vector<64x912xbf16>, vector<912x256xbf16>, vector<64x256xf32> -> vector<64x256xf32>
    %c0_5 = arith.constant 0 : index
    %c8 = arith.constant 8 : index
    %c0_6 = arith.constant 0 : index
    %6 = vector.load %arg1[%c0_5, %c8, %c0_6] : memref<1x80x912xf32, #tpu.memory_space<vmem>>, vector<1x64x912xf32>
    %7 = vector.shape_cast %6 : vector<1x64x912xf32> to vector<64x912xf32>
    %8 = arith.truncf %7 : vector<64x912xf32> to vector<64x912xbf16>
    %c1 = arith.constant 1 : index
    %c0_7 = arith.constant 0 : index
    %c0_8 = arith.constant 0 : index
    %9 = vector.load %arg2[%c1, %c0_7, %c0_8] : memref<3x912x256xbf16, #tpu.memory_space<vmem>>, vector<1x912x256xbf16>
    %10 = vector.shape_cast %9 : vector<1x912x256xbf16> to vector<912x256xbf16>
    %cst_9 = arith.constant dense<0.000000e+00> : vector<64x256xf32>
    %11 = tpu.matmul %8, %10, %cst_9 {dimension_numbers = #tpu.dot_dimension_numbers<[1], [0], [0], [1], [0, 0, 1, 1], [], []>} : vector<64x912xbf16>, vector<912x256xbf16>, vector<64x256xf32> -> vector<64x256xf32>
    %12 = arith.addf %5, %11 : vector<64x256xf32>
    %c0_10 = arith.constant 0 : index
    %c16 = arith.constant 16 : index
    %c0_11 = arith.constant 0 : index
    %13 = vector.load %arg1[%c0_10, %c16, %c0_11] : memref<1x80x912xf32, #tpu.memory_space<vmem>>, vector<1x64x912xf32>
    %14 = vector.shape_cast %13 : vector<1x64x912xf32> to vector<64x912xf32>
    %15 = arith.truncf %14 : vector<64x912xf32> to vector<64x912xbf16>
    %c2 = arith.constant 2 : index
    %c0_12 = arith.constant 0 : index
    %c0_13 = arith.constant 0 : index
    %16 = vector.load %arg2[%c2, %c0_12, %c0_13] : memref<3x912x256xbf16, #tpu.memory_space<vmem>>, vector<1x912x256xbf16>
    %17 = vector.shape_cast %16 : vector<1x912x256xbf16> to vector<912x256xbf16>
    %cst_14 = arith.constant dense<0.000000e+00> : vector<64x256xf32>
    %18 = tpu.matmul %15, %17, %cst_14 {dimension_numbers = #tpu.dot_dimension_numbers<[1], [0], [0], [1], [0, 0, 1, 1], [], []>} : vector<64x912xbf16>, vector<912x256xbf16>, vector<64x256xf32> -> vector<64x256xf32>
    %19 = arith.addf %12, %18 : vector<64x256xf32>
    %c0_15 = arith.constant 0 : index
    %c0_16 = arith.constant 0 : index
    %20 = vector.load %arg3[%c0_15, %c0_16] : memref<2x256xf32, #tpu.memory_space<vmem>>, vector<1x256xf32>
    %21 = vector.broadcast %20 : vector<1x256xf32> to vector<64x256xf32>
    %22 = arith.mulf %19, %21 : vector<64x256xf32>
    %c1_17 = arith.constant 1 : index
    %c0_18 = arith.constant 0 : index
    %23 = vector.load %arg3[%c1_17, %c0_18] : memref<2x256xf32, #tpu.memory_space<vmem>>, vector<1x256xf32>
    %24 = vector.broadcast %23 : vector<1x256xf32> to vector<64x256xf32>
    %25 = arith.addf %22, %24 : vector<64x256xf32>
    %cst_19 = arith.constant 0.000000e+00 : f32
    %26 = vector.broadcast %cst_19 : f32 to vector<64x256xf32>
    %27 = arith.maximumf %25, %26 : vector<64x256xf32>
    %c0_20 = arith.constant 0 : index
    %c0_21 = arith.constant 0 : index
    %c0_22 = arith.constant 0 : index
    %28 = vector.load %arg4[%c0_20, %c0_21, %c0_22] : memref<1x64x256xf32, #tpu.memory_space<vmem>>, vector<1x64x256xf32>
    %29 = vector.shape_cast %28 : vector<1x64x256xf32> to vector<64x256xf32>
    %30 = vector.shape_cast %27 : vector<64x256xf32> to vector<1x64x256xf32>
    tpu.vector_store %arg4[%c0_20, %c0_21, %c0_22], %30 {strides = array<i32>} : memref<1x64x256xf32, #tpu.memory_space<vmem>>, vector<1x64x256xf32>,
    return
  }
  func.func @transform_0(%arg0: i32) -> (i32, i32, i32) {
    %c0_i32 = arith.constant 0 : i32
    %c0_i32_0 = arith.constant 0 : i32
    %c0_i32_1 = arith.constant 0 : i32
    return %arg0, %c0_i32, %c0_i32_0 : i32, i32, i32
  }
  func.func @transform_1(%arg0: i32) -> (i32, i32, i32) {
    %c0_i32 = arith.constant 0 : i32
    %c0_i32_0 = arith.constant 0 : i32
    %c0_i32_1 = arith.constant 0 : i32
    %c0_i32_2 = arith.constant 0 : i32
    return %c0_i32, %c0_i32_0, %c0_i32_1 : i32, i32, i32
  }
  func.func @transform_2(%arg0: i32) -> (i32, i32) {
    %c0_i32 = arith.constant 0 : i32
    %c0_i32_0 = arith.constant 0 : i32
    %c0_i32_1 = arith.constant 0 : i32
    return %c0_i32, %c0_i32_0 : i32, i32
  }
  func.func @transform_3(%arg0: i32) -> (i32, i32, i32) {
    %c0_i32 = arith.constant 0 : i32
    %c0_i32_0 = arith.constant 0 : i32
    %c0_i32_1 = arith.constant 0 : i32
    return %arg0, %c0_i32, %c0_i32_0 : i32, i32, i32
  }
}

module attributes {stable_mosaic.version = 11 : i64} {
  func.func @_conv3x3_head_kernel(%arg0: i32, %arg1: memref<1x80x768xf32, #tpu.memory_space<vmem>>, %arg2: memref<3x768x256xbf16, #tpu.memory_space<vmem>>, %arg3: memref<2x256xf32, #tpu.memory_space<vmem>>, %arg4: memref<256x128xbf16, #tpu.memory_space<vmem>>, %arg5: memref<1x128xf32, #tpu.memory_space<vmem>>, %arg6: memref<1x64x128xf32, #tpu.memory_space<vmem>>) attributes {dimension_semantics = [#tpu.dimension_semantics<parallel>], iteration_bounds = array<i64: 2>, scalar_prefetch = 0 : i64, scratch_operands = 0 : i64, tpu.core_type = #tpu.core_type<tc>, window_params = [{transform_indices = @transform_0, window_bounds = array<i64: 1, 80, 768>}, {pipeline_mode = #tpu.pipeline_mode<synchronous>, transform_indices = @transform_1, window_bounds = array<i64: 3, 768, 256>}, {pipeline_mode = #tpu.pipeline_mode<synchronous>, transform_indices = @transform_2, window_bounds = array<i64: 2, 256>}, {pipeline_mode = #tpu.pipeline_mode<synchronous>, transform_indices = @transform_3, window_bounds = array<i64: 256, 128>}, {pipeline_mode = #tpu.pipeline_mode<synchronous>, transform_indices = @transform_4, window_bounds = array<i64: 1, 128>}, {transform_indices = @transform_5, window_bounds = array<i64: 1, 64, 128>}]} {
    %c0 = arith.constant 0 : index
    %c0_0 = arith.constant 0 : index
    %c0_1 = arith.constant 0 : index
    %0 = vector.load %arg1[%c0, %c0_0, %c0_1] : memref<1x80x768xf32, #tpu.memory_space<vmem>>, vector<1x64x768xf32>
    %1 = vector.shape_cast %0 : vector<1x64x768xf32> to vector<64x768xf32>
    %2 = arith.truncf %1 : vector<64x768xf32> to vector<64x768xbf16>
    %c0_2 = arith.constant 0 : index
    %c0_3 = arith.constant 0 : index
    %c0_4 = arith.constant 0 : index
    %3 = vector.load %arg2[%c0_2, %c0_3, %c0_4] : memref<3x768x256xbf16, #tpu.memory_space<vmem>>, vector<1x768x256xbf16>
    %4 = vector.shape_cast %3 : vector<1x768x256xbf16> to vector<768x256xbf16>
    %cst = arith.constant dense<0.000000e+00> : vector<64x256xf32>
    %5 = tpu.matmul %2, %4, %cst {dimension_numbers = #tpu.dot_dimension_numbers<[1], [0], [0], [1], [0, 0, 1, 1], [], []>} : vector<64x768xbf16>, vector<768x256xbf16>, vector<64x256xf32> -> vector<64x256xf32>
    %c0_5 = arith.constant 0 : index
    %c8 = arith.constant 8 : index
    %c0_6 = arith.constant 0 : index
    %6 = vector.load %arg1[%c0_5, %c8, %c0_6] : memref<1x80x768xf32, #tpu.memory_space<vmem>>, vector<1x64x768xf32>
    %7 = vector.shape_cast %6 : vector<1x64x768xf32> to vector<64x768xf32>
    %8 = arith.truncf %7 : vector<64x768xf32> to vector<64x768xbf16>
    %c1 = arith.constant 1 : index
    %c0_7 = arith.constant 0 : index
    %c0_8 = arith.constant 0 : index
    %9 = vector.load %arg2[%c1, %c0_7, %c0_8] : memref<3x768x256xbf16, #tpu.memory_space<vmem>>, vector<1x768x256xbf16>
    %10 = vector.shape_cast %9 : vector<1x768x256xbf16> to vector<768x256xbf16>
    %cst_9 = arith.constant dense<0.000000e+00> : vector<64x256xf32>
    %11 = tpu.matmul %8, %10, %cst_9 {dimension_numbers = #tpu.dot_dimension_numbers<[1], [0], [0], [1], [0, 0, 1, 1], [], []>} : vector<64x768xbf16>, vector<768x256xbf16>, vector<64x256xf32> -> vector<64x256xf32>
    %12 = arith.addf %5, %11 : vector<64x256xf32>
    %c0_10 = arith.constant 0 : index
    %c16 = arith.constant 16 : index
    %c0_11 = arith.constant 0 : index
    %13 = vector.load %arg1[%c0_10, %c16, %c0_11] : memref<1x80x768xf32, #tpu.memory_space<vmem>>, vector<1x64x768xf32>
    %14 = vector.shape_cast %13 : vector<1x64x768xf32> to vector<64x768xf32>
    %15 = arith.truncf %14 : vector<64x768xf32> to vector<64x768xbf16>
    %c2 = arith.constant 2 : index
    %c0_12 = arith.constant 0 : index
    %c0_13 = arith.constant 0 : index
    %16 = vector.load %arg2[%c2, %c0_12, %c0_13] : memref<3x768x256xbf16, #tpu.memory_space<vmem>>, vector<1x768x256xbf16>
    %17 = vector.shape_cast %16 : vector<1x768x256xbf16> to vector<768x256xbf16>
    %cst_14 = arith.constant dense<0.000000e+00> : vector<64x256xf32>
    %18 = tpu.matmul %15, %17, %cst_14 {dimension_numbers = #tpu.dot_dimension_numbers<[1], [0], [0], [1], [0, 0, 1, 1], [], []>} : vector<64x768xbf16>, vector<768x256xbf16>, vector<64x256xf32> -> vector<64x256xf32>
    %19 = arith.addf %12, %18 : vector<64x256xf32>
    %c0_15 = arith.constant 0 : index
    %c0_16 = arith.constant 0 : index
    %20 = vector.load %arg3[%c0_15, %c0_16] : memref<2x256xf32, #tpu.memory_space<vmem>>, vector<1x256xf32>
    %21 = vector.broadcast %20 : vector<1x256xf32> to vector<64x256xf32>
    %22 = arith.mulf %19, %21 : vector<64x256xf32>
    %c1_17 = arith.constant 1 : index
    %c0_18 = arith.constant 0 : index
    %23 = vector.load %arg3[%c1_17, %c0_18] : memref<2x256xf32, #tpu.memory_space<vmem>>, vector<1x256xf32>
    %24 = vector.broadcast %23 : vector<1x256xf32> to vector<64x256xf32>
    %25 = arith.addf %22, %24 : vector<64x256xf32>
    %cst_19 = arith.constant 0.000000e+00 : f32
    %26 = vector.broadcast %cst_19 : f32 to vector<64x256xf32>
    %27 = arith.maximumf %25, %26 : vector<64x256xf32>
    %28 = arith.truncf %27 : vector<64x256xf32> to vector<64x256xbf16>
    %c0_20 = arith.constant 0 : index
    %c0_21 = arith.constant 0 : index
    %29 = vector.load %arg4[%c0_20, %c0_21] : memref<256x128xbf16, #tpu.memory_space<vmem>>, vector<256x128xbf16>
    %cst_22 = arith.constant dense<0.000000e+00> : vector<64x128xf32>
    %30 = tpu.matmul %28, %29, %cst_22 {dimension_numbers = #tpu.dot_dimension_numbers<[1], [0], [0], [1], [0, 0, 1, 1], [], []>} : vector<64x256xbf16>, vector<256x128xbf16>, vector<64x128xf32> -> vector<64x128xf32>
    %c0_23 = arith.constant 0 : index
    %c0_24 = arith.constant 0 : index
    %31 = vector.load %arg5[%c0_23, %c0_24] : memref<1x128xf32, #tpu.memory_space<vmem>>, vector<1x128xf32>
    %32 = vector.broadcast %31 : vector<1x128xf32> to vector<64x128xf32>
    %33 = arith.addf %30, %32 : vector<64x128xf32>
    %c0_25 = arith.constant 0 : index
    %c0_26 = arith.constant 0 : index
    %c0_27 = arith.constant 0 : index
    %34 = vector.load %arg6[%c0_25, %c0_26, %c0_27] : memref<1x64x128xf32, #tpu.memory_space<vmem>>, vector<1x64x128xf32>
    %35 = vector.shape_cast %34 : vector<1x64x128xf32> to vector<64x128xf32>
    %36 = vector.shape_cast %33 : vector<64x128xf32> to vector<1x64x128xf32>
    tpu.vector_store %arg6[%c0_25, %c0_26, %c0_27], %36 {strides = array<i32>} : memref<1x64x128xf32, #tpu.memory_space<vmem>>, vector<1x64x128xf32>,
    return
  }
  func.func @transform_0(%arg0: i32) -> (i32, i32, i32) {
    %c0_i32 = arith.constant 0 : i32
    %c0_i32_0 = arith.constant 0 : i32
    %c0_i32_1 = arith.constant 0 : i32
    return %arg0, %c0_i32, %c0_i32_0 : i32, i32, i32
  }
  func.func @transform_1(%arg0: i32) -> (i32, i32, i32) {
    %c0_i32 = arith.constant 0 : i32
    %c0_i32_0 = arith.constant 0 : i32
    %c0_i32_1 = arith.constant 0 : i32
    %c0_i32_2 = arith.constant 0 : i32
    return %c0_i32, %c0_i32_0, %c0_i32_1 : i32, i32, i32
  }
  func.func @transform_2(%arg0: i32) -> (i32, i32) {
    %c0_i32 = arith.constant 0 : i32
    %c0_i32_0 = arith.constant 0 : i32
    %c0_i32_1 = arith.constant 0 : i32
    return %c0_i32, %c0_i32_0 : i32, i32
  }
  func.func @transform_3(%arg0: i32) -> (i32, i32) {
    %c0_i32 = arith.constant 0 : i32
    %c0_i32_0 = arith.constant 0 : i32
    %c0_i32_1 = arith.constant 0 : i32
    return %c0_i32, %c0_i32_0 : i32, i32
  }
  func.func @transform_4(%arg0: i32) -> (i32, i32) {
    %c0_i32 = arith.constant 0 : i32
    %c0_i32_0 = arith.constant 0 : i32
    %c0_i32_1 = arith.constant 0 : i32
    return %c0_i32, %c0_i32_0 : i32, i32
  }
  func.func @transform_5(%arg0: i32) -> (i32, i32, i32) {
    %c0_i32 = arith.constant 0 : i32
    %c0_i32_0 = arith.constant 0 : i32
    %c0_i32_1 = arith.constant 0 : i32
    return %arg0, %c0_i32, %c0_i32_0 : i32, i32, i32
  }
}

</mosaic_0001>

<llo_original>
// kernel: decoder_forward.3
$region0: #{decoder_forward.3}
  #allocation0 [shape = 'u32[]', space=smem, size = 0x4, offset = 0x4, fixed_abs, tag = 'smem constant byte address 0x4 - core index']
  #allocation1 [shape = 'u32[144,128]{1,0:T(1,128)}', space=vmem, size = 0x12000, scoped, tag = 'internal scratch']
  %s0 = inlined_call_operand.vmem [shape: f32[128,4], index: 0, kind: input, shape index: {}]
  %s1 = inlined_call_operand.hbm [shape: bf16[4,48], index: 1, kind: input, shape index: {}]
  %s2 = inlined_call_operand.hbm [shape: f32[2,48], index: 2, kind: input, shape index: {}]
  %s3 = inlined_call_operand.vmem [shape: f32[128,48], index: 3, kind: output, shape index: {}]
  %s4 = sld [smem:[#allocation0]]
  $region53: #{decoder_forward.3} parent=0
    _
  %s6 = ssub.s32 1, %s4
  %s7 = scalar_select 0, %s6, %s4
  $region1: #{decoder_forward.3} parent=0
    #allocation2 [shape = 'u8[1024]{0}', space=vmem, size = 0x400, scoped, tag = 'input window, operand 1, single buffered']
    #allocation3 [shape = 's32[2]{0}', space=sflag, size = 0x8, scoped, tag = 'scoped memory for decoder_forward.3']
    #allocation4 [shape = 'u8[1024]{0}', space=vmem, size = 0x400, scoped, tag = 'input window, operand 2, single buffered']
    #allocation5 [shape = 's32[1]{0}', space=sflag, size = 0x4, scoped, tag = 'scoped memory for decoder_forward.3']
    %8 = vsyncpa [#allocation3], 0
    %9 = vsyncpa [#allocation5], 0
    loop: start=0, step=1, limit=4
    $region2: #{decoder_forward.3} parent=1 // loop_pre_header
      _
    $region3: #{decoder_forward.3} parent=1 // loop_header
      %s11 = sphi 0, %s15
      %p12 = scmp.ge.s32.totalorder %s11, 4
      %s21 = sphi 0, %s23
      %s24 = sphi 0, %s21
      %s25 = sphi 0, %s24
      %s41 = sphi 0, %s25
      %s45 = sphi 0, %s45
      %s47 = sphi 0, %s45
      %s48 = sphi 0, %s47
      %s62 = sphi 0, %s48
      %s66 = sphi 0, %s66
      %s68 = sphi 0, %s66
      %s69 = sphi 0, %s68
      %s83 = sphi 0, %s69
      %s89 = sphi 0, %s91
      %s92 = sphi 0, %s89
      %s93 = sphi 0, %s92
      %s109 = sphi 0, %s93
    $region4: #{decoder_forward.3} parent=1 // loop_header_branch
      %14 = sbr.rel (%p12) target = $region8
    $region5: #{decoder_forward.3} parent=1 // loop_body
      %s16 = ssub.s32 %s11, 1
      %s17 = ssub.s32 %s11, 2
      %s18 = sadd.s32 %s11, 1
      %s19 = ssub.s32 %s11, %s18
      %p20 = scmp.eq.s32.totalorder %s19, 0
      %s22 = sadd.s32 %s21, 1
      %s23 = scalar_select %p20, %s21, %s22
      %p26 = pneg %p20
      %p27 = scmp.eq.s32.totalorder %s11, 1
      %p28 = por %p26, %p27
      %p29 = scmp.ne.s32.totalorder %s21, %s24
      %p30 = scmp.eq.s32.totalorder %s11, 0
      %p31 = por %p29, %p30
      %p32 = scmp.ne.s32.totalorder %s21, %s24
      %p33 = scmp.eq.s32.totalorder %s16, 1
      %p34 = por %p32, %p33
      %p35 = scmp.ne.s32.totalorder %s24, %s25
      %p36 = scmp.eq.s32.totalorder %s16, 0
      %p37 = por %p35, %p36
      %p38 = scmp.ne.s32.totalorder %s24, %s25
      %p39 = scmp.eq.s32.totalorder %s17, 1
      %p40 = por %p38, %p39
      %p42 = scmp.ne.s32.totalorder %s25, %s41
      %p43 = scmp.eq.s32.totalorder %s17, 0
      %p44 = por %p42, %p43
      %s46 = sadd.s32 %s45, 1
      %p49 = scmp.eq.s32.totalorder %s11, 1
      %p50 = scmp.ne.s32.totalorder %s45, %s47
      %p51 = scmp.eq.s32.totalorder %s11, 0
      %p52 = por %p50, %p51
      %p53 = scmp.ne.s32.totalorder %s45, %s47
      %p54 = scmp.eq.s32.totalorder %s16, 1
      %p55 = por %p53, %p54
      %p56 = scmp.ne.s32.totalorder %s47, %s48
      %p57 = scmp.eq.s32.totalorder %s16, 0
      %p58 = por %p56, %p57
      %p59 = scmp.ne.s32.totalorder %s47, %s48
      %p60 = scmp.eq.s32.totalorder %s17, 1
      %p61 = por %p59, %p60
      %p63 = scmp.ne.s32.totalorder %s48, %s62
      %p64 = scmp.eq.s32.totalorder %s17, 0
      %p65 = por %p63, %p64
      %s67 = sadd.s32 %s66, 1
      %p70 = scmp.eq.s32.totalorder %s11, 1
      %p71 = scmp.ne.s32.totalorder %s66, %s68
      %p72 = scmp.eq.s32.totalorder %s11, 0
      %p73 = por %p71, %p72
      %p74 = scmp.ne.s32.totalorder %s66, %s68
      %p75 = scmp.eq.s32.totalorder %s16, 1
      %p76 = por %p74, %p75
      %p77 = scmp.ne.s32.totalorder %s68, %s69
      %p78 = scmp.eq.s32.totalorder %s16, 0
      %p79 = por %p77, %p78
      %p80 = scmp.ne.s32.totalorder %s68, %s69
      %p81 = scmp.eq.s32.totalorder %s17, 1
      %p82 = por %p80, %p81
      %p84 = scmp.ne.s32.totalorder %s69, %s83
      %p85 = scmp.eq.s32.totalorder %s17, 0
      %p86 = por %p84, %p85
      %s87 = ssub.s32 %s11, %s18
      %p88 = scmp.eq.s32.totalorder %s87, 0
      %s90 = sadd.s32 %s89, 1
      %s91 = scalar_select %p88, %s89, %s90
      %p94 = pneg %p88
      %p95 = scmp.eq.s32.totalorder %s11, 1
      %p96 = por %p94, %p95
      %p97 = scmp.ne.s32.totalorder %s89, %s92
      %p98 = scmp.eq.s32.totalorder %s11, 0
      %p99 = por %p97, %p98
      %p100 = scmp.ne.s32.totalorder %s89, %s92
      %p101 = scmp.eq.s32.totalorder %s16, 1
      %p102 = por %p100, %p101
      %p103 = scmp.ne.s32.totalorder %s92, %s93
      %p104 = scmp.eq.s32.totalorder %s16, 0
      %p105 = por %p103, %p104
      %p106 = scmp.ne.s32.totalorder %s92, %s93
      %p107 = scmp.eq.s32.totalorder %s17, 1
      %p108 = por %p106, %p107
      %p110 = scmp.ne.s32.totalorder %s93, %s109
      %p111 = scmp.eq.s32.totalorder %s17, 0
      %p112 = por %p110, %p111
      %p113 = scmp.le.s32.totalorder 1, %s11
      %p114 = scmp.lt.s32.totalorder %s11, 3
      %p115 = pnand %p113, %p114
      %p116 = pneg %p115
      // Predicated region
      $region9: #{decoder_forward.3} parent=5 // pred_check
        _
      $region10: #{decoder_forward.3} parent=5 // pred_check_branch
        %118 = sbr.rel (%p115) target = $region12
      $region11: #{decoder_forward.3} parent=5 // pred_region
        %s119 = ssub.s32 %s11, 1
        // Predicated region
        $region13: #{decoder_forward.3} parent=11 // pred_check
          %p120 = pneg %p58
        $region14: #{decoder_forward.3} parent=11 // pred_check_branch
          %122 = sbr.rel (%p120) target = $region16
        $region15: #{decoder_forward.3} parent=11 // pred_region
          %s124 = ssub.s32 32, 32
          %125 = vsyncadd [#allocation3], %s124
          %s127 = sshll.u32 [#allocation2], 4
          %s128 = int_to_ptr.vmem [resolvable:$true] %s127
          %130 = dma.hbm_to_vmem [thread:$0]  %s1, 32, %s128, [#allocation3]
        $region16: #{decoder_forward.3} parent=11 // pred_fallthru
          _
        // Predicated region
        $region17: #{decoder_forward.3} parent=11 // pred_check
          %p131 = pneg %p79
        $region18: #{decoder_forward.3} parent=11 // pred_check_branch
          %133 = sbr.rel (%p131) target = $region20
        $region19: #{decoder_forward.3} parent=11 // pred_region
          %s135 = ssub.s32 32, 32
          %136 = vsyncadd [#allocation5], %s135
          %s138 = sshll.u32 [#allocation4], 4
          %s139 = int_to_ptr.vmem [resolvable:$true] %s138
          %141 = dma.hbm_to_vmem [thread:$0]  %s2, 32, %s139, [#allocation5]
        $region20: #{decoder_forward.3} parent=11 // pred_fallthru
          _
      $region12: #{decoder_forward.3} parent=5 // pred_fallthru
        _
      %p142 = scmp.lt.s32.totalorder %s11, 2
      // Predicated region
      $region21: #{decoder_forward.3} parent=5 // pred_check
        %p143 = pneg %p142
      $region22: #{decoder_forward.3} parent=5 // pred_check_branch
        %145 = sbr.rel (%p143) target = $region24
      $region23: #{decoder_forward.3} parent=5 // pred_region
        // Predicated region
        $region25: #{decoder_forward.3} parent=23 // pred_check
          %p146 = pneg %p31
        $region26: #{decoder_forward.3} parent=23 // pred_check_branch
          %148 = sbr.rel (%p146) target = $region28
        $region27: #{decoder_forward.3} parent=23 // pred_region
          %s149 = smul.u32 8, %s11
          %p150 = scmp.lt.s32.totalorder %s149, 15
          %s151 = scalar_select %p150, %s149, 15
          %s152 = smul.addr %s151, 8
          %s153 = scalar_lea.vmem %s0, %s152
          %s154 = smul.u32 8, %s11
        $region28: #{decoder_forward.3} parent=23 // pred_fallthru
          _
      $region24: #{decoder_forward.3} parent=5 // pred_fallthru
        _
      %p155 = scmp.le.s32.totalorder 1, %s11
      %p156 = scmp.lt.s32.totalorder %s11, 3
      %p157 = pnand %p155, %p156
      %p158 = pneg %p157
      // Predicated region
      $region29: #{decoder_forward.3} parent=5 // pred_check
        _
      $region30: #{decoder_forward.3} parent=5 // pred_check_branch
        %160 = sbr.rel (%p157) target = $region32
      $region31: #{decoder_forward.3} parent=5 // pred_region
        %s161 = ssub.s32 %s11, 1
        // Predicated region
        $region33: #{decoder_forward.3} parent=31 // pred_check
          %p162 = pneg %p58
        $region34: #{decoder_forward.3} parent=31 // pred_check_branch
          %164 = sbr.rel (%p162) target = $region36
        $region35: #{decoder_forward.3} parent=31 // pred_region
          %165 = dma.done [#allocation3], 32
        $region36: #{decoder_forward.3} parent=31 // pred_fallthru
          _
        // Predicated region
        $region37: #{decoder_forward.3} parent=31 // pred_check
          %p166 = pneg %p79
        $region38: #{decoder_forward.3} parent=31 // pred_check_branch
          %168 = sbr.rel (%p166) target = $region40
        $region39: #{decoder_forward.3} parent=31 // pred_region
          %169 = dma.done [#allocation5], 32
        $region40: #{decoder_forward.3} parent=31 // pred_fallthru
          _
        %s170 = smul.u32 8, %s16
        %p171 = scmp.lt.s32.totalorder %s170, 15
        %s172 = scalar_select %p171, %s170, 15
        %s173 = smul.addr %s172, 8
        %s174 = scalar_lea.vmem %s0, %s173
        %p175 = pneg %p37
        %p176 = pneg %p34
        %p177 = pneg %p58
        %p178 = pneg %p55
        %p179 = pneg %p79
        %p180 = pneg %p76
        %p181 = pneg %p105
        %p182 = pneg %p102
        %s183 = smul.u32 8, %s16
        %p184 = scmp.lt.s32.totalorder %s183, 15
        %s185 = scalar_select %p184, %s183, 15
        %s186 = smul.addr %s185, 8
        %s187 = scalar_lea.vmem %s3, %s186
        %s188 = smul.u32 8, %s16
        %p189 = scmp.lt.s32.totalorder %s188, 15
        %s190 = scalar_select %p189, %s188, 15
        %s191 = smul.addr %s190, 8
        %s192 = scalar_lea.vmem %s0, %s191
        %s193 = smul.u32 8, %s16
        %s194 = smul.u32 8, %s16
        %p195 = scmp.lt.s32.totalorder %s194, 15
        %s196 = scalar_select %p195, %s194, 15
        %s197 = smul.addr %s196, 8
        %s198 = scalar_lea.vmem %s3, %s197
        %s199 = smul.u32 8, %s16
        %v201 = vld [vmem:[%s192] sm:$0xff]
        %v202 = vld [vmem:[%s192 + $0x8] sm:$0xff]
        %v203 = vld [vmem:[%s192 + $0x10] sm:$0xff]
        %v204 = vld [vmem:[%s192 + $0x18] sm:$0xff]
        %v205 = vld [vmem:[%s192 + $0x20] sm:$0xff]
        %v206 = vld [vmem:[%s192 + $0x28] sm:$0xff]
        %v207 = vld [vmem:[%s192 + $0x30] sm:$0xff]
        %v208 = vld [vmem:[%s192 + $0x38] sm:$0xff]
        %v209 = vpack.c.bf16 %v202, %v201
        %v210 = vpack.c.bf16 %v204, %v203
        %v211 = vpack.c.bf16 %v206, %v205
        %v212 = vpack.c.bf16 %v208, %v207
        %v213 = vld [vmem:[#allocation2] sm:$0x3]
        %vm214 = vcmask 31744
        %v216 = vsel %vm214, %v209, 0
        %v219 = vsel %vm214, %v210, 0
        %v222 = vsel %vm214, %v211, 0
        %v225 = vsel %vm214, %v212, 0
        %vm227 = vcmask 1041408
        %v229 = vsel %vm227, %v213, 0
        %231 = vmatprep.subr.bf16.mxu0 0
        %232 = vmatpush1.bf16.msra.mxu0 0
        %233 = vmatprep.subr.bf16.mxu0 0
        %234 = vmatpush1.bf16.msra.mxu0 0
        %235 = vmatprep.subr.bf16.mxu0 0
        %236 = vmatpush1.bf16.msra.mxu0 0
        %237 = vmatprep.subr.bf16.mxu0 0
        %238 = vmatpush1.bf16.msra.mxu0 0
        %239 = vmatprep.subr.bf16.mxu0 0
        %240 = vmatpush1.bf16.msra.mxu0 0
        %241 = vmatprep.subr.bf16.mxu0 0
        %242 = vmatpush1.bf16.msra.mxu0 0
        %243 = vmatprep.subr.bf16.mxu0 0
        %244 = vmatpush1.bf16.msra.mxu0 0
        %245 = vmatprep.subr.bf16.mxu0 0
        %246 = vmatpush1.bf16.msra.mxu0 %v229
        %247 = vmatprep.subr.bf16.mxu0 0
        %248 = vmatpush2.bf16.msra.mxu0 0
        %249 = vmatprep.subr.bf16.mxu0 0
        %250 = vmatpush2.bf16.msra.mxu0 0
        %251 = vmatprep.subr.bf16.mxu0 0
        %252 = vmatpush2.bf16.msra.mxu0 0
        %253 = vmatprep.subr.bf16.mxu0 0
        %254 = vmatpush2.bf16.msra.mxu0 0
        %255 = vmatprep.subr.bf16.mxu0 0
        %256 = vmatpush2.bf16.msra.mxu0 0
        %257 = vmatprep.subr.bf16.mxu0 0
        %258 = vmatpush2.bf16.msra.mxu0 0
        %259 = vmatprep.subr.bf16.mxu0 0
        %260 = vmatpush2.bf16.msra.mxu0 0
        %261 = vmatprep.subr.bf16.mxu0 0
        %262 = vmatpush2.bf16.msra.mxu0 0
        %263 = vmatprep.mubr.bf16.mxu0 0
        %264 = vmatmul.mubr.bf16.gmra.mxu0 %v216
        %v265 = vpop.f32.mrf.mxu0
        %v266 = vadd.f32 0.0, %v265
        %v267 = vpop.f32.mrf.mxu0
        %v268 = vpop.f32.mrf.mxu0
        %v269 = vadd.f32 0.0, %v268
        %v270 = vpop.f32.mrf.mxu0
        %271 = vmatprep.mubr.bf16.mxu0 0
        %272 = vmatmul.mubr.bf16.gmra.mxu0 %v219
        %v273 = vpop.f32.mrf.mxu0
        %v274 = vadd.f32 0.0, %v273
        %v275 = vpop.f32.mrf.mxu0
        %v276 = vpop.f32.mrf.mxu0
        %v277 = vadd.f32 0.0, %v276
        %v278 = vpop.f32.mrf.mxu0
        %279 = vmatprep.mubr.bf16.mxu0 0
        %280 = vmatmul.mubr.bf16.gmra.mxu0 %v222
        %v281 = vpop.f32.mrf.mxu0
        %v282 = vadd.f32 0.0, %v281
        %v283 = vpop.f32.mrf.mxu0
        %v284 = vpop.f32.mrf.mxu0
        %v285 = vadd.f32 0.0, %v284
        %v286 = vpop.f32.mrf.mxu0
        %287 = vmatprep.mubr.bf16.mxu0 0
        %288 = vmatmul.mubr.bf16.gmra.mxu0 %v225
        %v289 = vpop.f32.mrf.mxu0
        %v290 = vadd.f32 0.0, %v289
        %v291 = vpop.f32.mrf.mxu0
        %v292 = vpop.f32.mrf.mxu0
        %v293 = vadd.f32 0.0, %v292
        %v294 = vpop.f32.mrf.mxu0
        %295 = vdwg.mxu0
        %v296 = vld [vmem:[#allocation4] sm:$0x1]
        %v297 = vlaneseq
        %v298 = vshrl.u32 %v297, 7
        %v299 = vsub.s32 0, %v298
        %v300 = vrot.slane %v296, %v299
        %v301 = vmul.f32 %v266, %v300
        %v302 = vmul.f32 %v269, %v300
        %v303 = vmul.f32 %v274, %v300
        %v304 = vmul.f32 %v277, %v300
        %v305 = vmul.f32 %v282, %v300
        %v306 = vmul.f32 %v285, %v300
        %v307 = vmul.f32 %v290, %v300
        %v308 = vmul.f32 %v293, %v300
        %v309 = vld [vmem:[#allocation4 + $0x1] sm:$0x1]
        %v310 = vlaneseq
        %v311 = vshrl.u32 %v310, 7
        %v312 = vsub.s32 0, %v311
        %v313 = vrot.slane %v309, %v312
        %v314 = vadd.f32 %v301, %v313
        %v315 = vadd.f32 %v302, %v313
        %v316 = vadd.f32 %v303, %v313
        %v317 = vadd.f32 %v304, %v313
        %v318 = vadd.f32 %v305, %v313
        %v319 = vadd.f32 %v306, %v313
        %v320 = vadd.f32 %v307, %v313
        %v321 = vadd.f32 %v308, %v313
        %v322 = vmax.f32 %v314, 0.0
        %v323 = vmax.f32 %v315, 0.0
        %v324 = vmax.f32 %v316, 0.0
        %v325 = vmax.f32 %v317, 0.0
        %v326 = vmax.f32 %v318, 0.0
        %v327 = vmax.f32 %v319, 0.0
        %v328 = vmax.f32 %v320, 0.0
        %v329 = vmax.f32 %v321, 0.0
        %vm330 = vcmask 392192
        %331 = vst.msk [vmem:[%s198] sm:$0xff] %vm330, %v322
        %332 = vst.msk [vmem:[%s198 + $0x8] sm:$0xff] %vm330, %v323
        %333 = vst.msk [vmem:[%s198 + $0x10] sm:$0xff] %vm330, %v324
        %334 = vst.msk [vmem:[%s198 + $0x18] sm:$0xff] %vm330, %v325
        %335 = vst.msk [vmem:[%s198 + $0x20] sm:$0xff] %vm330, %v326
        %336 = vst.msk [vmem:[%s198 + $0x28] sm:$0xff] %vm330, %v327
        %337 = vst.msk [vmem:[%s198 + $0x30] sm:$0xff] %vm330, %v328
        %338 = vst.msk [vmem:[%s198 + $0x38] sm:$0xff] %vm330, %v329
        %s339 = smul.u32 8, %s16
        %p340 = scmp.lt.s32.totalorder %s339, 15
        %s341 = scalar_select %p340, %s339, 15
        %s342 = smul.addr %s341, 8
        %s343 = scalar_lea.vmem %s3, %s342
        // Predicated region
        $region41: #{decoder_forward.3} parent=31 // pred_check
          %p344 = pneg %p102
        $region42: #{decoder_forward.3} parent=31 // pred_check_branch
          %346 = sbr.rel (%p344) target = $region44
        $region43: #{decoder_forward.3} parent=31 // pred_region
          %s347 = smul.u32 8, %s16
        $region44: #{decoder_forward.3} parent=31 // pred_fallthru
          _
      $region32: #{decoder_forward.3} parent=5 // pred_fallthru
        _
      %p348 = scmp.le.s32.totalorder 2, %s11
      // Predicated region
      $region45: #{decoder_forward.3} parent=5 // pred_check
        %p349 = pneg %p348
      $region46: #{decoder_forward.3} parent=5 // pred_check_branch
        %351 = sbr.rel (%p349) target = $region48
      $region47: #{decoder_forward.3} parent=5 // pred_region
        %s352 = ssub.s32 %s11, 2
        // Predicated region
        $region49: #{decoder_forward.3} parent=47 // pred_check
          %p353 = pneg %p108
        $region50: #{decoder_forward.3} parent=47 // pred_check_branch
          %355 = sbr.rel (%p353) target = $region52
        $region51: #{decoder_forward.3} parent=47 // pred_region
          %s356 = smul.u32 8, %s17
          %p357 = scmp.lt.s32.totalorder %s356, 15
          %s358 = scalar_select %p357, %s356, 15
          %s359 = smul.addr %s358, 8
          %s360 = scalar_lea.vmem %s3, %s359
        $region52: #{decoder_forward.3} parent=47 // pred_fallthru
          _
      $region48: #{decoder_forward.3} parent=5 // pred_fallthru
        _
    $region6: #{decoder_forward.3} parent=1 // loop_footer
      %s15 = sadd.s32 1, %s11
    $region7: #{decoder_forward.3} parent=1 // loop_footer_branch
      %10 = sbr.rel target = $region3
    $region8: #{decoder_forward.3} parent=1 // loop_exit
      _
    %361 = vsyncpa [#allocation3], 1
    %s362 = scalar_lea.sflag [#allocation3], 1
    %363 = vsyncpa %s362, 1
    %364 = vsyncpa [#allocation5], 1

// kernel: decoder_forward.5
$region0: #{decoder_forward.5}
  #allocation0 [shape = 'u32[]', space=smem, size = 0x4, offset = 0x4, fixed_abs, tag = 'smem constant byte address 0x4 - core index']
  #allocation1 [shape = 'u32[144,128]{1,0:T(1,128)}', space=vmem, size = 0x12000, scoped, tag = 'internal scratch']
  %s0 = inlined_call_operand.vmem [shape: f32[2,80,768], index: 0, kind: input, shape index: {}]
  %s1 = inlined_call_operand.vmem [shape: bf16[3,768,256], index: 1, kind: input, shape index: {}]
  %s2 = inlined_call_operand.vmem [shape: f32[2,256], index: 2, kind: input, shape index: {}]
  %s3 = inlined_call_operand.vmem [shape: bf16[256,128], index: 3, kind: input, shape index: {}]
  %s4 = inlined_call_operand.vmem [shape: f32[1,128], index: 4, kind: input, shape index: {}]
  %s5 = inlined_call_operand.vmem [shape: f32[2,64,128], index: 5, kind: output, shape index: {}]
  %s6 = sld [smem:[#allocation0]]
  $region53: #{decoder_forward.5} parent=0
    _
  %s8 = ssub.s32 1, %s6
  %s9 = scalar_select 0, %s8, %s6
  loop: start=0, step=1, limit=4
  $region2: #{decoder_forward.5} parent=0 // loop_pre_header
    _
  $region3: #{decoder_forward.5} parent=0 // loop_header
    %s11 = sphi 0, %s15
    %p12 = scmp.ge.s32.totalorder %s11, 4
    %s21 = sphi 0, %s23
    %s24 = sphi 0, %s21
    %s25 = sphi 0, %s24
    %s41 = sphi 0, %s25
    %s45 = sphi 0, %s45
    %s47 = sphi 0, %s45
    %s48 = sphi 0, %s47
    %s62 = sphi 0, %s48
    %s66 = sphi 0, %s66
    %s68 = sphi 0, %s66
    %s69 = sphi 0, %s68
    %s83 = sphi 0, %s69
    %s87 = sphi 0, %s87
    %s89 = sphi 0, %s87
    %s90 = sphi 0, %s89
    %s104 = sphi 0, %s90
    %s108 = sphi 0, %s108
    %s110 = sphi 0, %s108
    %s111 = sphi 0, %s110
    %s125 = sphi 0, %s111
    %s131 = sphi 0, %s133
    %s134 = sphi 0, %s131
    %s135 = sphi 0, %s134
    %s151 = sphi 0, %s135
  $region4: #{decoder_forward.5} parent=0 // loop_header_branch
    %14 = sbr.rel (%p12) target = $region8
  $region5: #{decoder_forward.5} parent=0 // loop_body
    %s16 = ssub.s32 %s11, 1
    %s17 = ssub.s32 %s11, 2
    %s18 = sadd.s32 %s11, 1
    %s19 = ssub.s32 %s11, %s18
    %p20 = scmp.eq.s32.totalorder %s19, 0
    %s22 = sadd.s32 %s21, 1
    %s23 = scalar_select %p20, %s21, %s22
    %p26 = pneg %p20
    %p27 = scmp.eq.s32.totalorder %s11, 1
    %p28 = por %p26, %p27
    %p29 = scmp.ne.s32.totalorder %s21, %s24
    %p30 = scmp.eq.s32.totalorder %s11, 0
    %p31 = por %p29, %p30
    %p32 = scmp.ne.s32.totalorder %s21, %s24
    %p33 = scmp.eq.s32.totalorder %s16, 1
    %p34 = por %p32, %p33
    %p35 = scmp.ne.s32.totalorder %s24, %s25
    %p36 = scmp.eq.s32.totalorder %s16, 0
    %p37 = por %p35, %p36
    %p38 = scmp.ne.s32.totalorder %s24, %s25
    %p39 = scmp.eq.s32.totalorder %s17, 1
    %p40 = por %p38, %p39
    %p42 = scmp.ne.s32.totalorder %s25, %s41
    %p43 = scmp.eq.s32.totalorder %s17, 0
    %p44 = por %p42, %p43
    %s46 = sadd.s32 %s45, 1
    %p49 = scmp.eq.s32.totalorder %s11, 1
    %p50 = scmp.ne.s32.totalorder %s45, %s47
    %p51 = scmp.eq.s32.totalorder %s11, 0
    %p52 = por %p50, %p51
    %p53 = scmp.ne.s32.totalorder %s45, %s47
    %p54 = scmp.eq.s32.totalorder %s16, 1
    %p55 = por %p53, %p54
    %p56 = scmp.ne.s32.totalorder %s47, %s48
    %p57 = scmp.eq.s32.totalorder %s16, 0
    %p58 = por %p56, %p57
    %p59 = scmp.ne.s32.totalorder %s47, %s48
    %p60 = scmp.eq.s32.totalorder %s17, 1
    %p61 = por %p59, %p60
    %p63 = scmp.ne.s32.totalorder %s48, %s62
    %p64 = scmp.eq.s32.totalorder %s17, 0
    %p65 = por %p63, %p64
    %s67 = sadd.s32 %s66, 1
    %p70 = scmp.eq.s32.totalorder %s11, 1
    %p71 = scmp.ne.s32.totalorder %s66, %s68
    %p72 = scmp.eq.s32.totalorder %s11, 0
    %p73 = por %p71, %p72
    %p74 = scmp.ne.s32.totalorder %s66, %s68
    %p75 = scmp.eq.s32.totalorder %s16, 1
    %p76 = por %p74, %p75
    %p77 = scmp.ne.s32.totalorder %s68, %s69
    %p78 = scmp.eq.s32.totalorder %s16, 0
    %p79 = por %p77, %p78
    %p80 = scmp.ne.s32.totalorder %s68, %s69
    %p81 = scmp.eq.s32.totalorder %s17, 1
    %p82 = por %p80, %p81
    %p84 = scmp.ne.s32.totalorder %s69, %s83
    %p85 = scmp.eq.s32.totalorder %s17, 0
    %p86 = por %p84, %p85
    %s88 = sadd.s32 %s87, 1
    %p91 = scmp.eq.s32.totalorder %s11, 1
    %p92 = scmp.ne.s32.totalorder %s87, %s89
    %p93 = scmp.eq.s32.totalorder %s11, 0
    %p94 = por %p92, %p93
    %p95 = scmp.ne.s32.totalorder %s87, %s89
    %p96 = scmp.eq.s32.totalorder %s16, 1
    %p97 = por %p95, %p96
    %p98 = scmp.ne.s32.totalorder %s89, %s90
    %p99 = scmp.eq.s32.totalorder %s16, 0
    %p100 = por %p98, %p99
    %p101 = scmp.ne.s32.totalorder %s89, %s90
    %p102 = scmp.eq.s32.totalorder %s17, 1
    %p103 = por %p101, %p102
    %p105 = scmp.ne.s32.totalorder %s90, %s104
    %p106 = scmp.eq.s32.totalorder %s17, 0
    %p107 = por %p105, %p106
    %s109 = sadd.s32 %s108, 1
    %p112 = scmp.eq.s32.totalorder %s11, 1
    %p113 = scmp.ne.s32.totalorder %s108, %s110
    %p114 = scmp.eq.s32.totalorder %s11, 0
    %p115 = por %p113, %p114
    %p116 = scmp.ne.s32.totalorder %s108, %s110
    %p117 = scmp.eq.s32.totalorder %s16, 1
    %p118 = por %p116, %p117
    %p119 = scmp.ne.s32.totalorder %s110, %s111
    %p120 = scmp.eq.s32.totalorder %s16, 0
    %p121 = por %p119, %p120
    %p122 = scmp.ne.s32.totalorder %s110, %s111
    %p123 = scmp.eq.s32.totalorder %s17, 1
    %p124 = por %p122, %p123
    %p126 = scmp.ne.s32.totalorder %s111, %s125
    %p127 = scmp.eq.s32.totalorder %s17, 0
    %p128 = por %p126, %p127
    %s129 = ssub.s32 %s11, %s18
    %p130 = scmp.eq.s32.totalorder %s129, 0
    %s132 = sadd.s32 %s131, 1
    %s133 = scalar_select %p130, %s131, %s132
    %p136 = pneg %p130
    %p137 = scmp.eq.s32.totalorder %s11, 1
    %p138 = por %p136, %p137
    %p139 = scmp.ne.s32.totalorder %s131, %s134
    %p140 = scmp.eq.s32.totalorder %s11, 0
    %p141 = por %p139, %p140
    %p142 = scmp.ne.s32.totalorder %s131, %s134
    %p143 = scmp.eq.s32.totalorder %s16, 1
    %p144 = por %p142, %p143
    %p145 = scmp.ne.s32.totalorder %s134, %s135
    %p146 = scmp.eq.s32.totalorder %s16, 0
    %p147 = por %p145, %p146
    %p148 = scmp.ne.s32.totalorder %s134, %s135
    %p149 = scmp.eq.s32.totalorder %s17, 1
    %p150 = por %p148, %p149
    %p152 = scmp.ne.s32.totalorder %s135, %s151
    %p153 = scmp.eq.s32.totalorder %s17, 0
    %p154 = por %p152, %p153
    %p155 = scmp.le.s32.totalorder 1, %s11
    %p156 = scmp.lt.s32.totalorder %s11, 3
    %p157 = pnand %p155, %p156
    %p158 = pneg %p157
    // Predicated region
    $region9: #{decoder_forward.5} parent=5 // pred_check
      _
    $region10: #{decoder_forward.5} parent=5 // pred_check_branch
      %160 = sbr.rel (%p157) target = $region12
    $region11: #{decoder_forward.5} parent=5 // pred_region
      %s161 = ssub.s32 %s11, 1
      // Predicated region
      $region13: #{decoder_forward.5} parent=11 // pred_check
        %p162 = pneg %p58
      $region14: #{decoder_forward.5} parent=11 // pred_check_branch
        %164 = sbr.rel (%p162) target = $region16
      $region15: #{decoder_forward.5} parent=11 // pred_region
        _
      $region16: #{decoder_forward.5} parent=11 // pred_fallthru
        _
      // Predicated region
      $region17: #{decoder_forward.5} parent=11 // pred_check
        %p165 = pneg %p79
      $region18: #{decoder_forward.5} parent=11 // pred_check_branch
        %167 = sbr.rel (%p165) target = $region20
      $region19: #{decoder_forward.5} parent=11 // pred_region
        _
      $region20: #{decoder_forward.5} parent=11 // pred_fallthru
        _
      // Predicated region
      $region21: #{decoder_forward.5} parent=11 // pred_check
        %p168 = pneg %p100
      $region22: #{decoder_forward.5} parent=11 // pred_check_branch
        %170 = sbr.rel (%p168) target = $region24
      $region23: #{decoder_forward.5} parent=11 // pred_region
        _
      $region24: #{decoder_forward.5} parent=11 // pred_fallthru
        _
      // Predicated region
      $region25: #{decoder_forward.5} parent=11 // pred_check
        %p171 = pneg %p121
      $region26: #{decoder_forward.5} parent=11 // pred_check_branch
        %173 = sbr.rel (%p171) target = $region28
      $region27: #{decoder_forward.5} parent=11 // pred_region
        _
      $region28: #{decoder_forward.5} parent=11 // pred_fallthru
        _
    $region12: #{decoder_forward.5} parent=5 // pred_fallthru
      _
    %p174 = scmp.lt.s32.totalorder %s11, 2
    // Predicated region
    $region29: #{decoder_forward.5} parent=5 // pred_check
      %p175 = pneg %p174
    $region30: #{decoder_forward.5} parent=5 // pred_check_branch
      %177 = sbr.rel (%p175) target = $region32
    $region31: #{decoder_forward.5} parent=5 // pred_region
      // Predicated region
      $region33: #{decoder_forward.5} parent=31 // pred_check
        %p178 = pneg %p31
      $region34: #{decoder_forward.5} parent=31 // pred_check_branch
        %180 = sbr.rel (%p178) target = $region36
      $region35: #{decoder_forward.5} parent=31 // pred_region
        %p181 = scmp.lt.s32.totalorder %s11, 1
        %s182 = scalar_select %p181, %s11, 1
        %s183 = smul.addr %s182, 60
        %s184 = smul.addr %s183, 8
        %s185 = scalar_lea.vmem %s0, %s184
      $region36: #{decoder_forward.5} parent=31 // pred_fallthru
        _
    $region32: #{decoder_forward.5} parent=5 // pred_fallthru
      _
    %p186 = scmp.le.s32.totalorder 1, %s11
    %p187 = scmp.lt.s32.totalorder %s11, 3
    %p188 = pnand %p186, %p187
    %p189 = pneg %p188
    // Predicated region
    $region37: #{decoder_forward.5} parent=5 // pred_check
      _
    $region38: #{decoder_forward.5} parent=5 // pred_check_branch
      %191 = sbr.rel (%p188) target = $region40
    $region39: #{decoder_forward.5} parent=5 // pred_region
      %s192 = ssub.s32 %s11, 1
      %p193 = scmp.lt.s32.totalorder %s16, 1
      %s194 = scalar_select %p193, %s16, 1
      %s195 = smul.addr %s194, 60
      %s196 = smul.addr %s195, 8
      %s197 = scalar_lea.vmem %s0, %s196
      %p198 = pneg %p37
      %p199 = pneg %p34
      %p200 = pneg %p58
      %p201 = pneg %p55
      %p202 = pneg %p79
      %p203 = pneg %p76
      %p204 = pneg %p100
      %p205 = pneg %p97
      %p206 = pneg %p121
      %p207 = pneg %p118
      %p208 = pneg %p147
      %p209 = pneg %p144
      %p210 = scmp.lt.s32.totalorder %s16, 1
      %s211 = scalar_select %p210, %s16, 1
      %s212 = smul.addr %s211, 8
      %s213 = smul.addr %s212, 8
      %s214 = scalar_lea.vmem %s5, %s213
      %p215 = scmp.lt.s32.totalorder %s16, 1
      %s216 = scalar_select %p215, %s16, 1
      %s217 = smul.addr %s216, 60
      %s218 = smul.addr %s217, 8
      %s219 = scalar_lea.vmem %s0, %s218
      %p220 = scmp.lt.s32.totalorder %s16, 1
      %s221 = scalar_select %p220, %s16, 1
      %s222 = smul.addr %s221, 8
      %s223 = smul.addr %s222, 8
      %s224 = scalar_lea.vmem %s5, %s223
      %v226 = vld [vmem:[%s219] sm:$0xff]
      %v227 = vld [vmem:[%s219 + $0x8] sm:$0xff]
      %v228 = vld [vmem:[%s219 + $0x10] sm:$0xff]
      %v229 = vld [vmem:[%s219 + $0x18] sm:$0xff]
      %v230 = vld [vmem:[%s219 + $0x20] sm:$0xff]
      %v231 = vld [vmem:[%s219 + $0x28] sm:$0xff]
      %v232 = vld [vmem:[%s219 + $0x30] sm:$0xff]
      %v233 = vld [vmem:[%s219 + $0x38] sm:$0xff]
      %v234 = vld [vmem:[%s219 + $0x40] sm:$0xff]
      %v235 = vld [vmem:[%s219 + $0x48] sm:$0xff]
      %v236 = vld [vmem:[%s219 + $0x50] sm:$0xff]
      %v237 = vld [vmem:[%s219 + $0x58] sm:$0xff]
      %v238 = vld [vmem:[%s219 + $0x60] sm:$0xff]
      %v239 = vld [vmem:[%s219 + $0x68] sm:$0xff]
      %v240 = vld [vmem:[%s219 + $0x70] sm:$0xff]
      %v241 = vld [vmem:[%s219 + $0x78] sm:$0xff]
      %v242 = vld [vmem:[%s219 + $0x80] sm:$0xff]
      %v243 = vld [vmem:[%s219 + $0x88] sm:$0xff]
      %v244 = vld [vmem:[%s219 + $0x90] sm:$0xff]
      %v245 = vld [vmem:[%s219 + $0x98] sm:$0xff]
      %v246 = vld [vmem:[%s219 + $0xa0] sm:$0xff]
      %v247 = vld [vmem:[%s219 + $0xa8] sm:$0xff]
      %v248 = vld [vmem:[%s219 + $0xb0] sm:$0xff]
      %v249 = vld [vmem:[%s219 + $0xb8] sm:$0xff]
      %v250 = vld [vmem:[%s219 + $0xc0] sm:$0xff]
      %v251 = vld [vmem:[%s219 + $0xc8] sm:$0xff]
      %v252 = vld [vmem:[%s219 + $0xd0] sm:$0xff]
      %v253 = vld [vmem:[%s219 + $0xd8] sm:$0xff]
      %v254 = vld [vmem:[%s219 + $0xe0] sm:$0xff]
      %v255 = vld [vmem:[%s219 + $0xe8] sm:$0xff]
      %v256 = vld [vmem:[%s219 + $0xf0] sm:$0xff]
      %v257 = vld [vmem:[%s219 + $0xf8] sm:$0xff]
      %v258 = vld [vmem:[%s219 + $0x100] sm:$0xff]
      %v259 = vld [vmem:[%s219 + $0x108] sm:$0xff]
      %v260 = vld [vmem:[%s219 + $0x110] sm:$0xff]
      %v261 = vld [vmem:[%s219 + $0x118] sm:$0xff]
      %v262 = vld [vmem:[%s219 + $0x120] sm:$0xff]
      %v263 = vld [vmem:[%s219 + $0x128] sm:$0xff]
      %v264 = vld [vmem:[%s219 + $0x130] sm:$0xff]
      %v265 = vld [vmem:[%s219 + $0x138] sm:$0xff]
      %v266 = vld [vmem:[%s219 + $0x140] sm:$0xff]
      %v267 = vld [vmem:[%s219 + $0x148] sm:$0xff]
      %v268 = vld [vmem:[%s219 + $0x150] sm:$0xff]
      %v269 = vld [vmem:[%s219 + $0x158] sm:$0xff]
      %v270 = vld [vmem:[%s219 + $0x160] sm:$0xff]
      %v271 = vld [vmem:[%s219 + $0x168] sm:$0xff]
      %v272 = vld [vmem:[%s219 + $0x170] sm:$0xff]
      %v273 = vld [vmem:[%s219 + $0x178] sm:$0xff]
      %v274 = vpack.c.bf16 %v232, %v226
      %v275 = vpack.c.bf16 %v233, %v227
      %v276 = vpack.c.bf16 %v234, %v228
      %v277 = vpack.c.bf16 %v235, %v229
      %v278 = vpack.c.bf16 %v236, %v230
      %v279 = vpack.c.bf16 %v237, %v231
      %v280 = vpack.c.bf16 %v244, %v238
      %v281 = vpack.c.bf16 %v245, %v239
      %v282 = vpack.c.bf16 %v246, %v240
      %v283 = vpack.c.bf16 %v247, %v241
      %v284 = vpack.c.bf16 %v248, %v242
      %v285 = vpack.c.bf16 %v249, %v243
      %v286 = vpack.c.bf16 %v256, %v250
      %v287 = vpack.c.bf16 %v257, %v251
      %v288 = vpack.c.bf16 %v258, %v252
      %v289 = vpack.c.bf16 %v259, %v253
      %v290 = vpack.c.bf16 %v260, %v254
      %v291 = vpack.c.bf16 %v261, %v255
      %v292 = vpack.c.bf16 %v268, %v262
      %v293 = vpack.c.bf16 %v269, %v263
      %v294 = vpack.c.bf16 %v270, %v264
      %v295 = vpack.c.bf16 %v271, %v265
      %v296 = vpack.c.bf16 %v272, %v266
      %v297 = vpack.c.bf16 %v273, %v267
      %v298 = vld [vmem:[%s1] sm:$0xff]
      %v299 = vld [vmem:[%s1 + $0x8] sm:$0xff]
      %v300 = vld [vmem:[%s1 + $0x10] sm:$0xff]
      %v301 = vld [vmem:[%s1 + $0x18] sm:$0xff]
      %v302 = vld [vmem:[%s1 + $0x20] sm:$0xff]
      %v303 = vld [vmem:[%s1 + $0x28] sm:$0xff]
      %v304 = vld [vmem:[%s1 + $0x30] sm:$0xff]
      %v305 = vld [vmem:[%s1 + $0x38] sm:$0xff]
      %v306 = vld [vmem:[%s1 + $0x40] sm:$0xff]
      %v307 = vld [vmem:[%s1 + $0x48] sm:$0xff]
      %v308 = vld [vmem:[%s1 + $0x50] sm:$0xff]
      %v309 = vld [vmem:[%s1 + $0x58] sm:$0xff]
      %v310 = vld [vmem:[%s1 + $0x60] sm:$0xff]
      %v311 = vld [vmem:[%s1 + $0x68] sm:$0xff]
      %v312 = vld [vmem:[%s1 + $0x70] sm:$0xff]
      %v313 = vld [vmem:[%s1 + $0x78] sm:$0xff]
      %v314 = vld [vmem:[%s1 + $0x80] sm:$0xff]
      %v315 = vld [vmem:[%s1 + $0x88] sm:$0xff]
      %v316 = vld [vmem:[%s1 + $0x90] sm:$0xff]
      %v317 = vld [vmem:[%s1 + $0x98] sm:$0xff]
      %v318 = vld [vmem:[%s1 + $0xa0] sm:$0xff]
      %v319 = vld [vmem:[%s1 + $0xa8] sm:$0xff]
      %v320 = vld [vmem:[%s1 + $0xb0] sm:$0xff]
      %v321 = vld [vmem:[%s1 + $0xb8] sm:$0xff]
      %v322 = vld [vmem:[%s1 + $0xc0] sm:$0xff]
      %v323 = vld [vmem:[%s1 + $0xc8] sm:$0xff]
      %v324 = vld [vmem:[%s1 + $0xd0] sm:$0xff]
      %v325 = vld [vmem:[%s1 + $0xd8] sm:$0xff]
      %v326 = vld [vmem:[%s1 + $0xe0] sm:$0xff]
      %v327 = vld [vmem:[%s1 + $0xe8] sm:$0xff]
      %v328 = vld [vmem:[%s1 + $0xf0] sm:$0xff]
      %v329 = vld [vmem:[%s1 + $0xf8] sm:$0xff]
      %v330 = vld [vmem:[%s1 + $0x100] sm:$0xff]
      %v331 = vld [vmem:[%s1 + $0x108] sm:$0xff]
      %v332 = vld [vmem:[%s1 + $0x110] sm:$0xff]
      %v333 = vld [vmem:[%s1 + $0x118] sm:$0xff]
      %v334 = vld [vmem:[%s1 + $0x120] sm:$0xff]
      %v335 = vld [vmem:[%s1 + $0x128] sm:$0xff]
      %v336 = vld [vmem:[%s1 + $0x130] sm:$0xff]
      %v337 = vld [vmem:[%s1 + $0x138] sm:$0xff]
      %v338 = vld [vmem:[%s1 + $0x140] sm:$0xff]
      %v339 = vld [vmem:[%s1 + $0x148] sm:$0xff]
      %v340 = vld [vmem:[%s1 + $0x150] sm:$0xff]
      %v341 = vld [vmem:[%s1 + $0x158] sm:$0xff]
      %v342 = vld [vmem:[%s1 + $0x160] sm:$0xff]
      %v343 = vld [vmem:[%s1 + $0x168] sm:$0xff]
      %v344 = vld [vmem:[%s1 + $0x170] sm:$0xff]
      %v345 = vld [vmem:[%s1 + $0x178] sm:$0xff]
      %v346 = vld [vmem:[%s1 + $0x180] sm:$0xff]
      %v347 = vld [vmem:[%s1 + $0x188] sm:$0xff]
      %v348 = vld [vmem:[%s1 + $0x190] sm:$0xff]
      %v349 = vld [vmem:[%s1 + $0x198] sm:$0xff]
      %v350 = vld [vmem:[%s1 + $0x1a0] sm:$0xff]
      %v351 = vld [vmem:[%s1 + $0x1a8] sm:$0xff]
      %v352 = vld [vmem:[%s1 + $0x1b0] sm:$0xff]
      %v353 = vld [vmem:[%s1 + $0x1b8] sm:$0xff]
      %v354 = vld [vmem:[%s1 + $0x1c0] sm:$0xff]
      %v355 = vld [vmem:[%s1 + $0x1c8] sm:$0xff]
      %v356 = vld [vmem:[%s1 + $0x1d0] sm:$0xff]
      %v357 = vld [vmem:[%s1 + $0x1d8] sm:$0xff]
      %v358 = vld [vmem:[%s1 + $0x1e0] sm:$0xff]
      %v359 = vld [vmem:[%s1 + $0x1e8] sm:$0xff]
      %v360 = vld [vmem:[%s1 + $0x1f0] sm:$0xff]
      %v361 = vld [vmem:[%s1 + $0x1f8] sm:$0xff]
      %v362 = vld [vmem:[%s1 + $0x200] sm:$0xff]
      %v363 = vld [vmem:[%s1 + $0x208] sm:$0xff]
      %v364 = vld [vmem:[%s1 + $0x210] sm:$0xff]
      %v365 = vld [vmem:[%s1 + $0x218] sm:$0xff]
      %v366 = vld [vmem:[%s1 + $0x220] sm:$0xff]
      %v367 = vld [vmem:[%s1 + $0x228] sm:$0xff]
      %v368 = vld [vmem:[%s1 + $0x230] sm:$0xff]
      %v369 = vld [vmem:[%s1 + $0x238] sm:$0xff]
      %v370 = vld [vmem:[%s1 + $0x240] sm:$0xff]
      %v371 = vld [vmem:[%s1 + $0x248] sm:$0xff]
      %v372 = vld [vmem:[%s1 + $0x250] sm:$0xff]
      %v373 = vld [vmem:[%s1 + $0x258] sm:$0xff]
      %v374 = vld [vmem:[%s1 + $0x260] sm:$0xff]
      %v375 = vld [vmem:[%s1 + $0x268] sm:$0xff]
      %v376 = vld [vmem:[%s1 + $0x270] sm:$0xff]
      %v377 = vld [vmem:[%s1 + $0x278] sm:$0xff]
      %v378 = vld [vmem:[%s1 + $0x280] sm:$0xff]
      %v379 = vld [vmem:[%s1 + $0x288] sm:$0xff]
      %v380 = vld [vmem:[%s1 + $0x290] sm:$0xff]
      %v381 = vld [vmem:[%s1 + $0x298] sm:$0xff]
      %v382 = vld [vmem:[%s1 + $0x2a0] sm:$0xff]
      %v383 = vld [vmem:[%s1 + $0x2a8] sm:$0xff]
      %v384 = vld [vmem:[%s1 + $0x2b0] sm:$0xff]
      %v385 = vld [vmem:[%s1 + $0x2b8] sm:$0xff]
      %v386 = vld [vmem:[%s1 + $0x2c0] sm:$0xff]
      %v387 = vld [vmem:[%s1 + $0x2c8] sm:$0xff]
      %v388 = vld [vmem:[%s1 + $0x2d0] sm:$0xff]
      %v389 = vld [vmem:[%s1 + $0x2d8] sm:$0xff]
      %v390 = vld [vmem:[%s1 + $0x2e0] sm:$0xff]
      %v391 = vld [vmem:[%s1 + $0x2e8] sm:$0xff]
      %v392 = vld [vmem:[%s1 + $0x2f0] sm:$0xff]
      %v393 = vld [vmem:[%s1 + $0x2f8] sm:$0xff]
      %v394 = vld [vmem:[%s219 + $0x180] sm:$0xff]
      %v395 = vld [vmem:[%s219 + $0x188] sm:$0xff]
      %v396 = vld [vmem:[%s219 + $0x190] sm:$0xff]
      %v397 = vld [vmem:[%s219 + $0x198] sm:$0xff]
      %v398 = vld [vmem:[%s219 + $0x1a0] sm:$0xff]
      %v399 = vld [vmem:[%s219 + $0x1a8] sm:$0xff]
      %v400 = vpack.c.bf16 %v238, %v232
      %v401 = vpack.c.bf16 %v239, %v233
      %v402 = vpack.c.bf16 %v240, %v234
      %v403 = vpack.c.bf16 %v241, %v235
      %v404 = vpack.c.bf16 %v242, %v236
      %v405 = vpack.c.bf16 %v243, %v237
      %v406 = vpack.c.bf16 %v250, %v244
      %v407 = vpack.c.bf16 %v251, %v245
      %v408 = vpack.c.bf16 %v252, %v246
      %v409 = vpack.c.bf16 %v253, %v247
      %v410 = vpack.c.bf16 %v254, %v248
      %v411 = vpack.c.bf16 %v255, %v249
      %v412 = vpack.c.bf16 %v262, %v256
      %v413 = vpack.c.bf16 %v263, %v257
      %v414 = vpack.c.bf16 %v264, %v258
      %v415 = vpack.c.bf16 %v265, %v259
      %v416 = vpack.c.bf16 %v266, %v260
      %v417 = vpack.c.bf16 %v267, %v261
      %v418 = vpack.c.bf16 %v394, %v268
      %v419 = vpack.c.bf16 %v395, %v269
      %v420 = vpack.c.bf16 %v396, %v270
      %v421 = vpack.c.bf16 %v397, %v271
      %v422 = vpack.c.bf16 %v398, %v272
      %v423 = vpack.c.bf16 %v399, %v273
      %s424 = scalar_lea.vmem %s1, 768
      %v425 = vld [vmem:[%s424] sm:$0xff]
      %v426 = vld [vmem:[%s424 + $0x8] sm:$0xff]
      %v427 = vld [vmem:[%s424 + $0x10] sm:$0xff]
      %v428 = vld [vmem:[%s424 + $0x18] sm:$0xff]
      %v429 = vld [vmem:[%s424 + $0x20] sm:$0xff]
      %v430 = vld [vmem:[%s424 + $0x28] sm:$0xff]
      %v431 = vld [vmem:[%s424 + $0x30] sm:$0xff]
      %v432 = vld [vmem:[%s424 + $0x38] sm:$0xff]
      %v433 = vld [vmem:[%s424 + $0x40] sm:$0xff]
      %v434 = vld [vmem:[%s424 + $0x48] sm:$0xff]
      %v435 = vld [vmem:[%s424 + $0x50] sm:$0xff]
      %v436 = vld [vmem:[%s424 + $0x58] sm:$0xff]
      %v437 = vld [vmem:[%s424 + $0x60] sm:$0xff]
      %v438 = vld [vmem:[%s424 + $0x68] sm:$0xff]
      %v439 = vld [vmem:[%s424 + $0x70] sm:$0xff]
      %v440 = vld [vmem:[%s424 + $0x78] sm:$0xff]
      %v441 = vld [vmem:[%s424 + $0x80] sm:$0xff]
      %v442 = vld [vmem:[%s424 + $0x88] sm:$0xff]
      %v443 = vld [vmem:[%s424 + $0x90] sm:$0xff]
      %v444 = vld [vmem:[%s424 + $0x98] sm:$0xff]
      %v445 = vld [vmem:[%s424 + $0xa0] sm:$0xff]
      %v446 = vld [vmem:[%s424 + $0xa8] sm:$0xff]
      %v447 = vld [vmem:[%s424 + $0xb0] sm:$0xff]
      %v448 = vld [vmem:[%s424 + $0xb8] sm:$0xff]
      %v449 = vld [vmem:[%s424 + $0xc0] sm:$0xff]
      %v450 = vld [vmem:[%s424 + $0xc8] sm:$0xff]
      %v451 = vld [vmem:[%s424 + $0xd0] sm:$0xff]
      %v452 = vld [vmem:[%s424 + $0xd8] sm:$0xff]
      %v453 = vld [vmem:[%s424 + $0xe0] sm:$0xff]
      %v454 = vld [vmem:[%s424 + $0xe8] sm:$0xff]
      %v455 = vld [vmem:[%s424 + $0xf0] sm:$0xff]
      %v456 = vld [vmem:[%s424 + $0xf8] sm:$0xff]
      %v457 = vld [vmem:[%s424 + $0x100] sm:$0xff]
      %v458 = vld [vmem:[%s424 + $0x108] sm:$0xff]
      %v459 = vld [vmem:[%s424 + $0x110] sm:$0xff]
      %v460 = vld [vmem:[%s424 + $0x118] sm:$0xff]
      %v461 = vld [vmem:[%s424 + $0x120] sm:$0xff]
      %v462 = vld [vmem:[%s424 + $0x128] sm:$0xff]
      %v463 = vld [vmem:[%s424 + $0x130] sm:$0xff]
      %v464 = vld [vmem:[%s424 + $0x138] sm:$0xff]
      %v465 = vld [vmem:[%s424 + $0x140] sm:$0xff]
      %v466 = vld [vmem:[%s424 + $0x148] sm:$0xff]
      %v467 = vld [vmem:[%s424 + $0x150] sm:$0xff]
      %v468 = vld [vmem:[%s424 + $0x158] sm:$0xff]
      %v469 = vld [vmem:[%s424 + $0x160] sm:$0xff]
      %v470 = vld [vmem:[%s424 + $0x168] sm:$0xff]
      %v471 = vld [vmem:[%s424 + $0x170] sm:$0xff]
      %v472 = vld [vmem:[%s424 + $0x178] sm:$0xff]
      %v473 = vld [vmem:[%s424 + $0x180] sm:$0xff]
      %v474 = vld [vmem:[%s424 + $0x188] sm:$0xff]
      %v475 = vld [vmem:[%s424 + $0x190] sm:$0xff]
      %v476 = vld [vmem:[%s424 + $0x198] sm:$0xff]
      %v477 = vld [vmem:[%s424 + $0x1a0] sm:$0xff]
      %v478 = vld [vmem:[%s424 + $0x1a8] sm:$0xff]
      %v479 = vld [vmem:[%s424 + $0x1b0] sm:$0xff]
      %v480 = vld [vmem:[%s424 + $0x1b8] sm:$0xff]
      %v481 = vld [vmem:[%s424 + $0x1c0] sm:$0xff]
      %v482 = vld [vmem:[%s424 + $0x1c8] sm:$0xff]
      %v483 = vld [vmem:[%s424 + $0x1d0] sm:$0xff]
      %v484 = vld [vmem:[%s424 + $0x1d8] sm:$0xff]
      %v485 = vld [vmem:[%s424 + $0x1e0] sm:$0xff]
      %v486 = vld [vmem:[%s424 + $0x1e8] sm:$0xff]
      %v487 = vld [vmem:[%s424 + $0x1f0] sm:$0xff]
      %v488 = vld [vmem:[%s424 + $0x1f8] sm:$0xff]
      %v489 = vld [vmem:[%s424 + $0x200] sm:$0xff]
      %v490 = vld [vmem:[%s424 + $0x208] sm:$0xff]
      %v491 = vld [vmem:[%s424 + $0x210] sm:$0xff]
      %v492 = vld [vmem:[%s424 + $0x218] sm:$0xff]
      %v493 = vld [vmem:[%s424 + $0x220] sm:$0xff]
      %v494 = vld [vmem:[%s424 + $0x228] sm:$0xff]
      %v495 = vld [vmem:[%s424 + $0x230] sm:$0xff]
      %v496 = vld [vmem:[%s424 + $0x238] sm:$0xff]
      %v497 = vld [vmem:[%s424 + $0x240] sm:$0xff]
      %v498 = vld [vmem:[%s424 + $0x248] sm:$0xff]
      %v499 = vld [vmem:[%s424 + $0x250] sm:$0xff]
      %v500 = vld [vmem:[%s424 + $0x258] sm:$0xff]
      %v501 = vld [vmem:[%s424 + $0x260] sm:$0xff]
      %v502 = vld [vmem:[%s424 + $0x268] sm:$0xff]
      %v503 = vld [vmem:[%s424 + $0x270] sm:$0xff]
      %v504 = vld [vmem:[%s424 + $0x278] sm:$0xff]
      %v505 = vld [vmem:[%s424 + $0x280] sm:$0xff]
      %v506 = vld [vmem:[%s424 + $0x288] sm:$0xff]
      %v507 = vld [vmem:[%s424 + $0x290] sm:$0xff]
      %v508 = vld [vmem:[%s424 + $0x298] sm:$0xff]
      %v509 = vld [vmem:[%s424 + $0x2a0] sm:$0xff]
      %v510 = vld [vmem:[%s424 + $0x2a8] sm:$0xff]
      %v511 = vld [vmem:[%s424 + $0x2b0] sm:$0xff]
      %v512 = vld [vmem:[%s424 + $0x2b8] sm:$0xff]
      %v513 = vld [vmem:[%s424 + $0x2c0] sm:$0xff]
      %v514 = vld [vmem:[%s424 + $0x2c8] sm:$0xff]
      %v515 = vld [vmem:[%s424 + $0x2d0] sm:$0xff]
      %v516 = vld [vmem:[%s424 + $0x2d8] sm:$0xff]
      %v517 = vld [vmem:[%s424 + $0x2e0] sm:$0xff]
      %v518 = vld [vmem:[%s424 + $0x2e8] sm:$0xff]
      %v519 = vld [vmem:[%s424 + $0x2f0] sm:$0xff]
      %v520 = vld [vmem:[%s424 + $0x2f8] sm:$0xff]
      %v617 = vunpack.c.l.b16 %v425
      %v618 = vunpack.c.h.b16 %v425
      %v619 = vunpack.c.l.b16 %v426
      %v620 = vunpack.c.h.b16 %v426
      %v621 = vunpack.c.l.b16 %v427
      %v622 = vunpack.c.h.b16 %v427
      %v623 = vunpack.c.l.b16 %v428
      %v624 = vunpack.c.h.b16 %v428
      %v625 = vunpack.c.l.b16 %v429
      %v626 = vunpack.c.h.b16 %v429
      %v627 = vunpack.c.l.b16 %v430
      %v628 = vunpack.c.h.b16 %v430
      %v629 = vunpack.c.l.b16 %v431
      %v630 = vunpack.c.h.b16 %v431
      %v631 = vunpack.c.l.b16 %v432
      %v632 = vunpack.c.h.b16 %v432
      %v633 = vunpack.c.l.b16 %v433
      %v634 = vunpack.c.h.b16 %v433
      %v635 = vunpack.c.l.b16 %v434
      %v636 = vunpack.c.h.b16 %v434
      %v637 = vunpack.c.l.b16 %v435
      %v638 = vunpack.c.h.b16 %v435
      %v639 = vunpack.c.l.b16 %v436
      %v640 = vunpack.c.h.b16 %v436
      %v641 = vunpack.c.l.b16 %v437
      %v642 = vunpack.c.h.b16 %v437
      %v643 = vunpack.c.l.b16 %v438
      %v644 = vunpack.c.h.b16 %v438
      %v645 = vunpack.c.l.b16 %v439
      %v646 = vunpack.c.h.b16 %v439
      %v647 = vunpack.c.l.b16 %v440
      %v648 = vunpack.c.h.b16 %v440
      %v649 = vunpack.c.l.b16 %v441
      %v650 = vunpack.c.h.b16 %v441
      %v651 = vunpack.c.l.b16 %v442
      %v652 = vunpack.c.h.b16 %v442
      %v653 = vunpack.c.l.b16 %v443
      %v654 = vunpack.c.h.b16 %v443
      %v655 = vunpack.c.l.b16 %v444
      %v656 = vunpack.c.h.b16 %v444
      %v657 = vunpack.c.l.b16 %v445
      %v658 = vunpack.c.h.b16 %v445
      %v659 = vunpack.c.l.b16 %v446
      %v660 = vunpack.c.h.b16 %v446
      %v661 = vunpack.c.l.b16 %v447
      %v662 = vunpack.c.h.b16 %v447
      %v663 = vunpack.c.l.b16 %v448
      %v664 = vunpack.c.h.b16 %v448
      %v665 = vunpack.c.l.b16 %v449
      %v666 = vunpack.c.h.b16 %v449
      %v667 = vunpack.c.l.b16 %v450
      %v668 = vunpack.c.h.b16 %v450
      %v669 = vunpack.c.l.b16 %v451
      %v670 = vunpack.c.h.b16 %v451
      %v671 = vunpack.c.l.b16 %v452
      %v672 = vunpack.c.h.b16 %v452
      %v673 = vunpack.c.l.b16 %v453
      %v674 = vunpack.c.h.b16 %v453
      %v675 = vunpack.c.l.b16 %v454
      %v676 = vunpack.c.h.b16 %v454
      %v677 = vunpack.c.l.b16 %v455
      %v678 = vunpack.c.h.b16 %v455
      %v679 = vunpack.c.l.b16 %v456
      %v680 = vunpack.c.h.b16 %v456
      %v681 = vunpack.c.l.b16 %v457
      %v682 = vunpack.c.h.b16 %v457
      %v683 = vunpack.c.l.b16 %v458
      %v684 = vunpack.c.h.b16 %v458
      %v685 = vunpack.c.l.b16 %v459
      %v686 = vunpack.c.h.b16 %v459
      %v687 = vunpack.c.l.b16 %v460
      %v688 = vunpack.c.h.b16 %v460
      %v689 = vunpack.c.l.b16 %v461
      %v690 = vunpack.c.h.b16 %v461
      %v691 = vunpack.c.l.b16 %v462
      %v692 = vunpack.c.h.b16 %v462
      %v693 = vunpack.c.l.b16 %v463
      %v694 = vunpack.c.h.b16 %v463
      %v695 = vunpack.c.l.b16 %v464
      %v696 = vunpack.c.h.b16 %v464
      %v697 = vunpack.c.l.b16 %v465
      %v698 = vunpack.c.h.b16 %v465
      %v699 = vunpack.c.l.b16 %v466
      %v700 = vunpack.c.h.b16 %v466
      %v701 = vunpack.c.l.b16 %v467
      %v702 = vunpack.c.h.b16 %v467
      %v703 = vunpack.c.l.b16 %v468
      %v704 = vunpack.c.h.b16 %v468
      %v705 = vunpack.c.l.b16 %v469
      %v706 = vunpack.c.h.b16 %v469
      %v707 = vunpack.c.l.b16 %v470
      %v708 = vunpack.c.h.b16 %v470
      %v709 = vunpack.c.l.b16 %v471
      %v710 = vunpack.c.h.b16 %v471
      %v711 = vunpack.c.l.b16 %v472
      %v712 = vunpack.c.h.b16 %v472
      %v713 = vunpack.c.l.b16 %v473
      %v714 = vunpack.c.h.b16 %v473
      %v715 = vunpack.c.l.b16 %v474
      %v716 = vunpack.c.h.b16 %v474
      %v717 = vunpack.c.l.b16 %v475
      %v718 = vunpack.c.h.b16 %v475
      %v719 = vunpack.c.l.b16 %v476
      %v720 = vunpack.c.h.b16 %v476
      %v721 = vunpack.c.l.b16 %v477
      %v722 = vunpack.c.h.b16 %v477
      %v723 = vunpack.c.l.b16 %v478
      %v724 = vunpack.c.h.b16 %v478
      %v725 = vunpack.c.l.b16 %v479
      %v726 = vunpack.c.h.b16 %v479
      %v727 = vunpack.c.l.b16 %v480
      %v728 = vunpack.c.h.b16 %v480
      %v729 = vunpack.c.l.b16 %v481
      %v730 = vunpack.c.h.b16 %v481
      %v731 = vunpack.c.l.b16 %v482
      %v732 = vunpack.c.h.b16 %v482
      %v733 = vunpack.c.l.b16 %v483
      %v734 = vunpack.c.h.b16 %v483
      %v735 = vunpack.c.l.b16 %v484
      %v736 = vunpack.c.h.b16 %v484
      %v737 = vunpack.c.l.b16 %v485
      %v738 = vunpack.c.h.b16 %v485
      %v739 = vunpack.c.l.b16 %v486
      %v740 = vunpack.c.h.b16 %v486
      %v741 = vunpack.c.l.b16 %v487
      %v742 = vunpack.c.h.b16 %v487
      %v743 = vunpack.c.l.b16 %v488
      %v744 = vunpack.c.h.b16 %v488
      %v745 = vunpack.c.l.b16 %v489
      %v746 = vunpack.c.h.b16 %v489
      %v747 = vunpack.c.l.b16 %v490
      %v748 = vunpack.c.h.b16 %v490
      %v749 = vunpack.c.l.b16 %v491
      %v750 = vunpack.c.h.b16 %v491
      %v751 = vunpack.c.l.b16 %v492
      %v752 = vunpack.c.h.b16 %v492
      %v753 = vunpack.c.l.b16 %v493
      %v754 = vunpack.c.h.b16 %v493
      %v755 = vunpack.c.l.b16 %v494
      %v756 = vunpack.c.h.b16 %v494
      %v757 = vunpack.c.l.b16 %v495
      %v758 = vunpack.c.h.b16 %v495
      %v759 = vunpack.c.l.b16 %v496
      %v760 = vunpack.c.h.b16 %v496
      %v761 = vunpack.c.l.b16 %v497
      %v762 = vunpack.c.h.b16 %v497
      %v763 = vunpack.c.l.b16 %v498
      %v764 = vunpack.c.h.b16 %v498
      %v765 = vunpack.c.l.b16 %v499
      %v766 = vunpack.c.h.b16 %v499
      %v767 = vunpack.c.l.b16 %v500
      %v768 = vunpack.c.h.b16 %v500
      %v769 = vunpack.c.l.b16 %v501
      %v770 = vunpack.c.h.b16 %v501
      %v771 = vunpack.c.l.b16 %v502
      %v772 = vunpack.c.h.b16 %v502
      %v773 = vunpack.c.l.b16 %v503
      %v774 = vunpack.c.h.b16 %v503
      %v775 = vunpack.c.l.b16 %v504
      %v776 = vunpack.c.h.b16 %v504
      %v777 = vunpack.c.l.b16 %v505
      %v778 = vunpack.c.h.b16 %v505
      %v779 = vunpack.c.l.b16 %v506
      %v780 = vunpack.c.h.b16 %v506
      %v781 = vunpack.c.l.b16 %v507
      %v782 = vunpack.c.h.b16 %v507
      %v783 = vunpack.c.l.b16 %v508
      %v784 = vunpack.c.h.b16 %v508
      %v785 = vunpack.c.l.b16 %v509
      %v786 = vunpack.c.h.b16 %v509
      %v787 = vunpack.c.l.b16 %v510
      %v788 = vunpack.c.h.b16 %v510
      %v789 = vunpack.c.l.b16 %v511
      %v790 = vunpack.c.h.b16 %v511
      %v791 = vunpack.c.l.b16 %v512
      %v792 = vunpack.c.h.b16 %v512
      %v793 = vunpack.c.l.b16 %v513
      %v794 = vunpack.c.h.b16 %v513
      %v795 = vunpack.c.l.b16 %v514
      %v796 = vunpack.c.h.b16 %v514
      %v797 = vunpack.c.l.b16 %v515
      %v798 = vunpack.c.h.b16 %v515
      %v799 = vunpack.c.l.b16 %v516
      %v800 = vunpack.c.h.b16 %v516
      %v801 = vunpack.c.l.b16 %v517
      %v802 = vunpack.c.h.b16 %v517
      %v803 = vunpack.c.l.b16 %v518
      %v804 = vunpack.c.h.b16 %v518
      %v805 = vunpack.c.l.b16 %v519
      %v806 = vunpack.c.h.b16 %v519
      %v807 = vunpack.c.l.b16 %v520
      %v808 = vunpack.c.h.b16 %v520
      %v809 = vpack.c.b16 %v619, %v617
      %v810 = vpack.c.b16 %v620, %v618
      %v811 = vpack.c.b16 %v623, %v621
      %v812 = vpack.c.b16 %v624, %v622
      %v813 = vpack.c.b16 %v627, %v625
      %v814 = vpack.c.b16 %v628, %v626
      %v815 = vpack.c.b16 %v631, %v629
      %v816 = vpack.c.b16 %v632, %v630
      %v817 = vpack.c.b16 %v635, %v633
      %v818 = vpack.c.b16 %v636, %v634
      %v819 = vpack.c.b16 %v639, %v637
      %v820 = vpack.c.b16 %v640, %v638
      %v821 = vpack.c.b16 %v643, %v641
      %v822 = vpack.c.b16 %v644, %v642
      %v823 = vpack.c.b16 %v647, %v645
      %v824 = vpack.c.b16 %v648, %v646
      %v825 = vpack.c.b16 %v651, %v649
      %v826 = vpack.c.b16 %v652, %v650
      %v827 = vpack.c.b16 %v655, %v653
      %v828 = vpack.c.b16 %v656, %v654
      %v829 = vpack.c.b16 %v659, %v657
      %v830 = vpack.c.b16 %v660, %v658
      %v831 = vpack.c.b16 %v663, %v661
      %v832 = vpack.c.b16 %v664, %v662
      %v833 = vpack.c.b16 %v667, %v665
      %v834 = vpack.c.b16 %v668, %v666
      %v835 = vpack.c.b16 %v671, %v669
      %v836 = vpack.c.b16 %v672, %v670
      %v837 = vpack.c.b16 %v675, %v673
      %v838 = vpack.c.b16 %v676, %v674
      %v839 = vpack.c.b16 %v679, %v677
      %v840 = vpack.c.b16 %v680, %v678
      %v841 = vpack.c.b16 %v683, %v681
      %v842 = vpack.c.b16 %v684, %v682
      %v843 = vpack.c.b16 %v687, %v685
      %v844 = vpack.c.b16 %v688, %v686
      %v845 = vpack.c.b16 %v691, %v689
      %v846 = vpack.c.b16 %v692, %v690
      %v847 = vpack.c.b16 %v695, %v693
      %v848 = vpack.c.b16 %v696, %v694
      %v849 = vpack.c.b16 %v699, %v697
      %v850 = vpack.c.b16 %v700, %v698
      %v851 = vpack.c.b16 %v703, %v701
      %v852 = vpack.c.b16 %v704, %v702
      %v853 = vpack.c.b16 %v707, %v705
      %v854 = vpack.c.b16 %v708, %v706
      %v855 = vpack.c.b16 %v711, %v709
      %v856 = vpack.c.b16 %v712, %v710
      %v857 = vpack.c.b16 %v715, %v713
      %v858 = vpack.c.b16 %v716, %v714
      %v859 = vpack.c.b16 %v719, %v717
      %v860 = vpack.c.b16 %v720, %v718
      %v861 = vpack.c.b16 %v723, %v721
      %v862 = vpack.c.b16 %v724, %v722
      %v863 = vpack.c.b16 %v727, %v725
      %v864 = vpack.c.b16 %v728, %v726
      %v865 = vpack.c.b16 %v731, %v729
      %v866 = vpack.c.b16 %v732, %v730
      %v867 = vpack.c.b16 %v735, %v733
      %v868 = vpack.c.b16 %v736, %v734
      %v869 = vpack.c.b16 %v739, %v737
      %v870 = vpack.c.b16 %v740, %v738
      %v871 = vpack.c.b16 %v743, %v741
      %v872 = vpack.c.b16 %v744, %v742
      %v873 = vpack.c.b16 %v747, %v745
      %v874 = vpack.c.b16 %v748, %v746
      %v875 = vpack.c.b16 %v751, %v749
      %v876 = vpack.c.b16 %v752, %v750
      %v877 = vpack.c.b16 %v755, %v753
      %v878 = vpack.c.b16 %v756, %v754
      %v879 = vpack.c.b16 %v759, %v757
      %v880 = vpack.c.b16 %v760, %v758
      %v881 = vpack.c.b16 %v763, %v761
      %v882 = vpack.c.b16 %v764, %v762
      %v883 = vpack.c.b16 %v767, %v765
      %v884 = vpack.c.b16 %v768, %v766
      %v885 = vpack.c.b16 %v771, %v769
      %v886 = vpack.c.b16 %v772, %v770
      %v887 = vpack.c.b16 %v775, %v773
      %v888 = vpack.c.b16 %v776, %v774
      %v889 = vpack.c.b16 %v779, %v777
      %v890 = vpack.c.b16 %v780, %v778
      %v891 = vpack.c.b16 %v783, %v781
      %v892 = vpack.c.b16 %v784, %v782
      %v893 = vpack.c.b16 %v787, %v785
      %v894 = vpack.c.b16 %v788, %v786
      %v895 = vpack.c.b16 %v791, %v789
      %v896 = vpack.c.b16 %v792, %v790
      %v897 = vpack.c.b16 %v795, %v793
      %v898 = vpack.c.b16 %v796, %v794
      %v899 = vpack.c.b16 %v799, %v797
      %v900 = vpack.c.b16 %v800, %v798
      %v901 = vpack.c.b16 %v803, %v801
      %v902 = vpack.c.b16 %v804, %v802
      %v903 = vpack.c.b16 %v807, %v805
      %v904 = vpack.c.b16 %v808, %v806
      %1001 = vmatprep.subr.bf16.mxu0 %v824
      %1002 = vmatpush1.bf16.msra.mxu0 %v823
      %1003 = vmatprep.subr.bf16.mxu0 %v822
      %1004 = vmatpush1.bf16.msra.mxu0 %v821
      %1005 = vmatprep.subr.bf16.mxu0 %v820
      %1006 = vmatpush1.bf16.msra.mxu0 %v819
      %1007 = vmatprep.subr.bf16.mxu0 %v818
      %1008 = vmatpush1.bf16.msra.mxu0 %v817
      %1009 = vmatprep.subr.bf16.mxu0 %v816
      %1010 = vmatpush1.bf16.msra.mxu0 %v815
      %1011 = vmatprep.subr.bf16.mxu0 %v814
      %1012 = vmatpush1.bf16.msra.mxu0 %v813
      %1013 = vmatprep.subr.bf16.mxu0 %v812
      %1014 = vmatpush1.bf16.msra.mxu0 %v811
      %1015 = vmatprep.subr.bf16.mxu0 %v810
      %1016 = vmatpush1.bf16.msra.mxu0 %v809
      %1017 = vmatprep.subr.bf16.mxu0 %v840
      %1018 = vmatpush2.bf16.msra.mxu0 %v839
      %1019 = vmatprep.subr.bf16.mxu0 %v838
      %1020 = vmatpush2.bf16.msra.mxu0 %v837
      %1021 = vmatprep.subr.bf16.mxu0 %v836
      %1022 = vmatpush2.bf16.msra.mxu0 %v835
      %1023 = vmatprep.subr.bf16.mxu0 %v834
      %1024 = vmatpush2.bf16.msra.mxu0 %v833
      %1025 = vmatprep.subr.bf16.mxu0 %v832
      %1026 = vmatpush2.bf16.msra.mxu0 %v831
      %1027 = vmatprep.subr.bf16.mxu0 %v830
      %1028 = vmatpush2.bf16.msra.mxu0 %v829
      %1029 = vmatprep.subr.bf16.mxu0 %v828
      %1030 = vmatpush2.bf16.msra.mxu0 %v827
      %1031 = vmatprep.subr.bf16.mxu0 %v826
      %1032 = vmatpush2.bf16.msra.mxu0 %v825
      %1033 = vmatprep.mubr.bf16.mxu0 %v401
      %1034 = vmatmul.mubr.bf16.gmra.mxu0 %v400
      %v1035 = vpop.f32.mrf.mxu0
      %v1036 = vadd.f32 0.0, %v1035
      %v1037 = vpop.f32.mrf.mxu0
      %v1038 = vadd.f32 0.0, %v1037
      %v1039 = vpop.f32.mrf.mxu0
      %v1040 = vadd.f32 0.0, %v1039
      %v1041 = vpop.f32.mrf.mxu0
      %v1042 = vadd.f32 0.0, %v1041
      %1043 = vmatprep.mubr.bf16.mxu0 %v407
      %1044 = vmatmul.mubr.bf16.gmra.mxu0 %v406
      %v1045 = vpop.f32.mrf.mxu0
      %v1046 = vadd.f32 0.0, %v1045
      %v1047 = vpop.f32.mrf.mxu0
      %v1048 = vadd.f32 0.0, %v1047
      %v1049 = vpop.f32.mrf.mxu0
      %v1050 = vadd.f32 0.0, %v1049
      %v1051 = vpop.f32.mrf.mxu0
      %v1052 = vadd.f32 0.0, %v1051
      %1053 = vmatprep.mubr.bf16.mxu0 %v413
      %1054 = vmatmul.mubr.bf16.gmra.mxu0 %v412
      %v1055 = vpop.f32.mrf.mxu0
      %v1056 = vadd.f32 0.0, %v1055
      %v1057 = vpop.f32.mrf.mxu0
      %v1058 = vadd.f32 0.0, %v1057
      %v1059 = vpop.f32.mrf.mxu0
      %v1060 = vadd.f32 0.0, %v1059
      %v1061 = vpop.f32.mrf.mxu0
      %v1062 = vadd.f32 0.0, %v1061
      %1063 = vmatprep.mubr.bf16.mxu0 %v419
      %1064 = vmatmul.mubr.bf16.gmra.mxu0 %v418
      %v1065 = vpop.f32.mrf.mxu0
      %v1066 = vadd.f32 0.0, %v1065
      %v1067 = vpop.f32.mrf.mxu0
      %v1068 = vadd.f32 0.0, %v1067
      %v1069 = vpop.f32.mrf.mxu0
      %v1070 = vadd.f32 0.0, %v1069
      %v1071 = vpop.f32.mrf.mxu0
      %v1072 = vadd.f32 0.0, %v1071
      %1073 = vdwg.mxu0
      %1074 = vmatprep.subr.bf16.mxu0 %v856
      %1075 = vmatpush1.bf16.msra.mxu0 %v855
      %1076 = vmatprep.subr.bf16.mxu0 %v854
      %1077 = vmatpush1.bf16.msra.mxu0 %v853
      %1078 = vmatprep.subr.bf16.mxu0 %v852
      %1079 = vmatpush1.bf16.msra.mxu0 %v851
      %1080 = vmatprep.subr.bf16.mxu0 %v850
      %1081 = vmatpush1.bf16.msra.mxu0 %v849
      %1082 = vmatprep.subr.bf16.mxu0 %v848
      %1083 = vmatpush1.bf16.msra.mxu0 %v847
      %1084 = vmatprep.subr.bf16.mxu0 %v846
      %1085 = vmatpush1.bf16.msra.mxu0 %v845
      %1086 = vmatprep.subr.bf16.mxu0 %v844
      %1087 = vmatpush1.bf16.msra.mxu0 %v843
      %1088 = vmatprep.subr.bf16.mxu0 %v842
      %1089 = vmatpush1.bf16.msra.mxu0 %v841
      %1090 = vmatprep.subr.bf16.mxu0 %v872
      %1091 = vmatpush2.bf16.msra.mxu0 %v871
      %1092 = vmatprep.subr.bf16.mxu0 %v870
      %1093 = vmatpush2.bf16.msra.mxu0 %v869
      %1094 = vmatprep.subr.bf16.mxu0 %v868
      %1095 = vmatpush2.bf16.msra.mxu0 %v867
      %1096 = vmatprep.subr.bf16.mxu0 %v866
      %1097 = vmatpush2.bf16.msra.mxu0 %v865
      %1098 = vmatprep.subr.bf16.mxu0 %v864
      %1099 = vmatpush2.bf16.msra.mxu0 %v863
      %1100 = vmatprep.subr.bf16.mxu0 %v862
      %1101 = vmatpush2.bf16.msra.mxu0 %v861
      %1102 = vmatprep.subr.bf16.mxu0 %v860
      %1103 = vmatpush2.bf16.msra.mxu0 %v859
      %1104 = vmatprep.subr.bf16.mxu0 %v858
      %1105 = vmatpush2.bf16.msra.mxu0 %v857
      %1106 = vmatprep.mubr.bf16.mxu0 %v403
      %1107 = vmatmul.mubr.bf16.gmra.mxu0 %v402
      %v1108 = vpop.f32.mrf.mxu0
      %v1109 = vadd.f32 %v1036, %v1108
      %v1110 = vpop.f32.mrf.mxu0
      %v1111 = vadd.f32 %v1038, %v1110
      %v1112 = vpop.f32.mrf.mxu0
      %v1113 = vadd.f32 %v1040, %v1112
      %v1114 = vpop.f32.mrf.mxu0
      %v1115 = vadd.f32 %v1042, %v1114
      %1116 = vmatprep.mubr.bf16.mxu0 %v409
      %1117 = vmatmul.mubr.bf16.gmra.mxu0 %v408
      %v1118 = vpop.f32.mrf.mxu0
      %v1119 = vadd.f32 %v1046, %v1118
      %v1120 = vpop.f32.mrf.mxu0
      %v1121 = vadd.f32 %v1048, %v1120
      %v1122 = vpop.f32.mrf.mxu0
      %v1123 = vadd.f32 %v1050, %v1122
      %v1124 = vpop.f32.mrf.mxu0
      %v1125 = vadd.f32 %v1052, %v1124
      %1126 = vmatprep.mubr.bf16.mxu0 %v415
      %1127 = vmatmul.mubr.bf16.gmra.mxu0 %v414
      %v1128 = vpop.f32.mrf.mxu0
      %v1129 = vadd.f32 %v1056, %v1128
      %v1130 = vpop.f32.mrf.mxu0
      %v1131 = vadd.f32 %v1058, %v1130
      %v1132 = vpop.f32.mrf.mxu0
      %v1133 = vadd.f32 %v1060, %v1132
      %v1134 = vpop.f32.mrf.mxu0
      %v1135 = vadd.f32 %v1062, %v1134
      %1136 = vmatprep.mubr.bf16.mxu0 %v421
      %1137 = vmatmul.mubr.bf16.gmra.mxu0 %v420
      %v1138 = vpop.f32.mrf.mxu0
      %v1139 = vadd.f32 %v1066, %v1138
      %v1140 = vpop.f32.mrf.mxu0
      %v1141 = vadd.f32 %v1068, %v1140
      %v1142 = vpop.f32.mrf.mxu0
      %v1143 = vadd.f32 %v1070, %v1142
      %v1144 = vpop.f32.mrf.mxu0
      %v1145 = vadd.f32 %v1072, %v1144
      %1146 = vdwg.mxu0
      %1147 = vmatprep.subr.bf16.mxu0 %v888
      %1148 = vmatpush1.bf16.msra.mxu0 %v887
      %1149 = vmatprep.subr.bf16.mxu0 %v886
      %1150 = vmatpush1.bf16.msra.mxu0 %v885
      %1151 = vmatprep.subr.bf16.mxu0 %v884
      %1152 = vmatpush1.bf16.msra.mxu0 %v883
      %1153 = vmatprep.subr.bf16.mxu0 %v882
      %1154 = vmatpush1.bf16.msra.mxu0 %v881
      %1155 = vmatprep.subr.bf16.mxu0 %v880
      %1156 = vmatpush1.bf16.msra.mxu0 %v879
      %1157 = vmatprep.subr.bf16.mxu0 %v878
      %1158 = vmatpush1.bf16.msra.mxu0 %v877
      %1159 = vmatprep.subr.bf16.mxu0 %v876
      %1160 = vmatpush1.bf16.msra.mxu0 %v875
      %1161 = vmatprep.subr.bf16.mxu0 %v874
      %1162 = vmatpush1.bf16.msra.mxu0 %v873
      %1163 = vmatprep.subr.bf16.mxu0 %v904
      %1164 = vmatpush2.bf16.msra.mxu0 %v903
      %1165 = vmatprep.subr.bf16.mxu0 %v902
      %1166 = vmatpush2.bf16.msra.mxu0 %v901
      %1167 = vmatprep.subr.bf16.mxu0 %v900
      %1168 = vmatpush2.bf16.msra.mxu0 %v899
      %1169 = vmatprep.subr.bf16.mxu0 %v898
      %1170 = vmatpush2.bf16.msra.mxu0 %v897
      %1171 = vmatprep.subr.bf16.mxu0 %v896
      %1172 = vmatpush2.bf16.msra.mxu0 %v895
      %1173 = vmatprep.subr.bf16.mxu0 %v894
      %1174 = vmatpush2.bf16.msra.mxu0 %v893
      %1175 = vmatprep.subr.bf16.mxu0 %v892
      %1176 = vmatpush2.bf16.msra.mxu0 %v891
      %1177 = vmatprep.subr.bf16.mxu0 %v890
      %1178 = vmatpush2.bf16.msra.mxu0 %v889
      %1179 = vmatprep.mubr.bf16.mxu0 %v405
      %1180 = vmatmul.mubr.bf16.gmra.mxu0 %v404
      %v1181 = vpop.f32.mrf.mxu0
      %v1182 = vadd.f32 %v1109, %v1181
      %v1183 = vpop.f32.mrf.mxu0
      %v1184 = vadd.f32 %v1111, %v1183
      %v1185 = vpop.f32.mrf.mxu0
      %v1186 = vadd.f32 %v1113, %v1185
      %v1187 = vpop.f32.mrf.mxu0
      %v1188 = vadd.f32 %v1115, %v1187
      %1189 = vmatprep.mubr.bf16.mxu0 %v411
      %1190 = vmatmul.mubr.bf16.gmra.mxu0 %v410
      %v1191 = vpop.f32.mrf.mxu0
      %v1192 = vadd.f32 %v1119, %v1191
      %v1193 = vpop.f32.mrf.mxu0
      %v1194 = vadd.f32 %v1121, %v1193
      %v1195 = vpop.f32.mrf.mxu0
      %v1196 = vadd.f32 %v1123, %v1195
      %v1197 = vpop.f32.mrf.mxu0
      %v1198 = vadd.f32 %v1125, %v1197
      %1199 = vmatprep.mubr.bf16.mxu0 %v417
      %1200 = vmatmul.mubr.bf16.gmra.mxu0 %v416
      %v1201 = vpop.f32.mrf.mxu0
      %v1202 = vadd.f32 %v1129, %v1201
      %v1203 = vpop.f32.mrf.mxu0
      %v1204 = vadd.f32 %v1131, %v1203
      %v1205 = vpop.f32.mrf.mxu0
      %v1206 = vadd.f32 %v1133, %v1205
      %v1207 = vpop.f32.mrf.mxu0
      %v1208 = vadd.f32 %v1135, %v1207
      %1209 = vmatprep.mubr.bf16.mxu0 %v423
      %1210 = vmatmul.mubr.bf16.gmra.mxu0 %v422
      %v1211 = vpop.f32.mrf.mxu0
      %v1212 = vadd.f32 %v1139, %v1211
      %v1213 = vpop.f32.mrf.mxu0
      %v1214 = vadd.f32 %v1141, %v1213
      %v1215 = vpop.f32.mrf.mxu0
      %v1216 = vadd.f32 %v1143, %v1215
      %v1217 = vpop.f32.mrf.mxu0
      %v1218 = vadd.f32 %v1145, %v1217
      %1219 = vdwg.mxu0
      %v1316 = vunpack.c.l.b16 %v298
      %v1317 = vunpack.c.h.b16 %v298
      %v1318 = vunpack.c.l.b16 %v299
      %v1319 = vunpack.c.h.b16 %v299
      %v1320 = vunpack.c.l.b16 %v300
      %v1321 = vunpack.c.h.b16 %v300
      %v1322 = vunpack.c.l.b16 %v301
      %v1323 = vunpack.c.h.b16 %v301
      %v1324 = vunpack.c.l.b16 %v302
      %v1325 = vunpack.c.h.b16 %v302
      %v1326 = vunpack.c.l.b16 %v303
      %v1327 = vunpack.c.h.b16 %v303
      %v1328 = vunpack.c.l.b16 %v304
      %v1329 = vunpack.c.h.b16 %v304
      %v1330 = vunpack.c.l.b16 %v305
      %v1331 = vunpack.c.h.b16 %v305
      %v1332 = vunpack.c.l.b16 %v306
      %v1333 = vunpack.c.h.b16 %v306
      %v1334 = vunpack.c.l.b16 %v307
      %v1335 = vunpack.c.h.b16 %v307
      %v1336 = vunpack.c.l.b16 %v308
      %v1337 = vunpack.c.h.b16 %v308
      %v1338 = vunpack.c.l.b16 %v309
      %v1339 = vunpack.c.h.b16 %v309
      %v1340 = vunpack.c.l.b16 %v310
      %v1341 = vunpack.c.h.b16 %v310
      %v1342 = vunpack.c.l.b16 %v311
      %v1343 = vunpack.c.h.b16 %v311
      %v1344 = vunpack.c.l.b16 %v312
      %v1345 = vunpack.c.h.b16 %v312
      %v1346 = vunpack.c.l.b16 %v313
      %v1347 = vunpack.c.h.b16 %v313
      %v1348 = vunpack.c.l.b16 %v314
      %v1349 = vunpack.c.h.b16 %v314
      %v1350 = vunpack.c.l.b16 %v315
      %v1351 = vunpack.c.h.b16 %v315
      %v1352 = vunpack.c.l.b16 %v316
      %v1353 = vunpack.c.h.b16 %v316
      %v1354 = vunpack.c.l.b16 %v317
      %v1355 = vunpack.c.h.b16 %v317
      %v1356 = vunpack.c.l.b16 %v318
      %v1357 = vunpack.c.h.b16 %v318
      %v1358 = vunpack.c.l.b16 %v319
      %v1359 = vunpack.c.h.b16 %v319
      %v1360 = vunpack.c.l.b16 %v320
      %v1361 = vunpack.c.h.b16 %v320
      %v1362 = vunpack.c.l.b16 %v321
      %v1363 = vunpack.c.h.b16 %v321
      %v1364 = vunpack.c.l.b16 %v322
      %v1365 = vunpack.c.h.b16 %v322
      %v1366 = vunpack.c.l.b16 %v323
      %v1367 = vunpack.c.h.b16 %v323
      %v1368 = vunpack.c.l.b16 %v324
      %v1369 = vunpack.c.h.b16 %v324
      %v1370 = vunpack.c.l.b16 %v325
      %v1371 = vunpack.c.h.b16 %v325
      %v1372 = vunpack.c.l.b16 %v326
      %v1373 = vunpack.c.h.b16 %v326
      %v1374 = vunpack.c.l.b16 %v327
      %v1375 = vunpack.c.h.b16 %v327
      %v1376 = vunpack.c.l.b16 %v328
      %v1377 = vunpack.c.h.b16 %v328
      %v1378 = vunpack.c.l.b16 %v329
      %v1379 = vunpack.c.h.b16 %v329
      %v1380 = vunpack.c.l.b16 %v330
      %v1381 = vunpack.c.h.b16 %v330
      %v1382 = vunpack.c.l.b16 %v331
      %v1383 = vunpack.c.h.b16 %v331
      %v1384 = vunpack.c.l.b16 %v332
      %v1385 = vunpack.c.h.b16 %v332
      %v1386 = vunpack.c.l.b16 %v333
      %v1387 = vunpack.c.h.b16 %v333
      %v1388 = vunpack.c.l.b16 %v334
      %v1389 = vunpack.c.h.b16 %v334
      %v1390 = vunpack.c.l.b16 %v335
      %v1391 = vunpack.c.h.b16 %v335
      %v1392 = vunpack.c.l.b16 %v336
      %v1393 = vunpack.c.h.b16 %v336
      %v1394 = vunpack.c.l.b16 %v337
      %v1395 = vunpack.c.h.b16 %v337
      %v1396 = vunpack.c.l.b16 %v338
      %v1397 = vunpack.c.h.b16 %v338
      %v1398 = vunpack.c.l.b16 %v339
      %v1399 = vunpack.c.h.b16 %v339
      %v1400 = vunpack.c.l.b16 %v340
      %v1401 = vunpack.c.h.b16 %v340
      %v1402 = vunpack.c.l.b16 %v341
      %v1403 = vunpack.c.h.b16 %v341
      %v1404 = vunpack.c.l.b16 %v342
      %v1405 = vunpack.c.h.b16 %v342
      %v1406 = vunpack.c.l.b16 %v343
      %v1407 = vunpack.c.h.b16 %v343
      %v1408 = vunpack.c.l.b16 %v344
      %v1409 = vunpack.c.h.b16 %v344
      %v1410 = vunpack.c.l.b16 %v345
      %v1411 = vunpack.c.h.b16 %v345
      %v1412 = vunpack.c.l.b16 %v346
      %v1413 = vunpack.c.h.b16 %v346
      %v1414 = vunpack.c.l.b16 %v347
      %v1415 = vunpack.c.h.b16 %v347
      %v1416 = vunpack.c.l.b16 %v348
      %v1417 = vunpack.c.h.b16 %v348
      %v1418 = vunpack.c.l.b16 %v349
      %v1419 = vunpack.c.h.b16 %v349
      %v1420 = vunpack.c.l.b16 %v350
      %v1421 = vunpack.c.h.b16 %v350
      %v1422 = vunpack.c.l.b16 %v351
      %v1423 = vunpack.c.h.b16 %v351
      %v1424 = vunpack.c.l.b16 %v352
      %v1425 = vunpack.c.h.b16 %v352
      %v1426 = vunpack.c.l.b16 %v353
      %v1427 = vunpack.c.h.b16 %v353
      %v1428 = vunpack.c.l.b16 %v354
      %v1429 = vunpack.c.h.b16 %v354
      %v1430 = vunpack.c.l.b16 %v355
      %v1431 = vunpack.c.h.b16 %v355
      %v1432 = vunpack.c.l.b16 %v356
      %v1433 = vunpack.c.h.b16 %v356
      %v1434 = vunpack.c.l.b16 %v357
      %v1435 = vunpack.c.h.b16 %v357
      %v1436 = vunpack.c.l.b16 %v358
      %v1437 = vunpack.c.h.b16 %v358
      %v1438 = vunpack.c.l.b16 %v359
      %v1439 = vunpack.c.h.b16 %v359
      %v1440 = vunpack.c.l.b16 %v360
      %v1441 = vunpack.c.h.b16 %v360
      %v1442 = vunpack.c.l.b16 %v361
      %v1443 = vunpack.c.h.b16 %v361
      %v1444 = vunpack.c.l.b16 %v362
      %v1445 = vunpack.c.h.b16 %v362
      %v1446 = vunpack.c.l.b16 %v363
      %v1447 = vunpack.c.h.b16 %v363
      %v1448 = vunpack.c.l.b16 %v364
      %v1449 = vunpack.c.h.b16 %v364
      %v1450 = vunpack.c.l.b16 %v365
      %v1451 = vunpack.c.h.b16 %v365
      %v1452 = vunpack.c.l.b16 %v366
      %v1453 = vunpack.c.h.b16 %v366
      %v1454 = vunpack.c.l.b16 %v367
      %v1455 = vunpack.c.h.b16 %v367
      %v1456 = vunpack.c.l.b16 %v368
      %v1457 = vunpack.c.h.b16 %v368
      %v1458 = vunpack.c.l.b16 %v369
      %v1459 = vunpack.c.h.b16 %v369
      %v1460 = vunpack.c.l.b16 %v370
      %v1461 = vunpack.c.h.b16 %v370
      %v1462 = vunpack.c.l.b16 %v371
      %v1463 = vunpack.c.h.b16 %v371
      %v1464 = vunpack.c.l.b16 %v372
      %v1465 = vunpack.c.h.b16 %v372
      %v1466 = vunpack.c.l.b16 %v373
      %v1467 = vunpack.c.h.b16 %v373
      %v1468 = vunpack.c.l.b16 %v374
      %v1469 = vunpack.c.h.b16 %v374
      %v1470 = vunpack.c.l.b16 %v375
      %v1471 = vunpack.c.h.b16 %v375
      %v1472 = vunpack.c.l.b16 %v376
      %v1473 = vunpack.c.h.b16 %v376
      %v1474 = vunpack.c.l.b16 %v377
      %v1475 = vunpack.c.h.b16 %v377
      %v1476 = vunpack.c.l.b16 %v378
      %v1477 = vunpack.c.h.b16 %v378
      %v1478 = vunpack.c.l.b16 %v379
      %v1479 = vunpack.c.h.b16 %v379
      %v1480 = vunpack.c.l.b16 %v380
      %v1481 = vunpack.c.h.b16 %v380
      %v1482 = vunpack.c.l.b16 %v381
      %v1483 = vunpack.c.h.b16 %v381
      %v1484 = vunpack.c.l.b16 %v382
      %v1485 = vunpack.c.h.b16 %v382
      %v1486 = vunpack.c.l.b16 %v383
      %v1487 = vunpack.c.h.b16 %v383
      %v1488 = vunpack.c.l.b16 %v384
      %v1489 = vunpack.c.h.b16 %v384
      %v1490 = vunpack.c.l.b16 %v385
      %v1491 = vunpack.c.h.b16 %v385
      %v1492 = vunpack.c.l.b16 %v386
      %v1493 = vunpack.c.h.b16 %v386
      %v1494 = vunpack.c.l.b16 %v387
      %v1495 = vunpack.c.h.b16 %v387
      %v1496 = vunpack.c.l.b16 %v388
      %v1497 = vunpack.c.h.b16 %v388
      %v1498 = vunpack.c.l.b16 %v389
      %v1499 = vunpack.c.h.b16 %v389
      %v1500 = vunpack.c.l.b16 %v390
      %v1501 = vunpack.c.h.b16 %v390
      %v1502 = vunpack.c.l.b16 %v391
      %v1503 = vunpack.c.h.b16 %v391
      %v1504 = vunpack.c.l.b16 %v392
      %v1505 = vunpack.c.h.b16 %v392
      %v1506 = vunpack.c.l.b16 %v393
      %v1507 = vunpack.c.h.b16 %v393
      %v1508 = vpack.c.b16 %v1318, %v1316
      %v1509 = vpack.c.b16 %v1319, %v1317
      %v1510 = vpack.c.b16 %v1322, %v1320
      %v1511 = vpack.c.b16 %v1323, %v1321
      %v1512 = vpack.c.b16 %v1326, %v1324
      %v1513 = vpack.c.b16 %v1327, %v1325
      %v1514 = vpack.c.b16 %v1330, %v1328
      %v1515 = vpack.c.b16 %v1331, %v1329
      %v1516 = vpack.c.b16 %v1334, %v1332
      %v1517 = vpack.c.b16 %v1335, %v1333
      %v1518 = vpack.c.b16 %v1338, %v1336
      %v1519 = vpack.c.b16 %v1339, %v1337
      %v1520 = vpack.c.b16 %v1342, %v1340
      %v1521 = vpack.c.b16 %v1343, %v1341
      %v1522 = vpack.c.b16 %v1346, %v1344
      %v1523 = vpack.c.b16 %v1347, %v1345
      %v1524 = vpack.c.b16 %v1350, %v1348
      %v1525 = vpack.c.b16 %v1351, %v1349
      %v1526 = vpack.c.b16 %v1354, %v1352
      %v1527 = vpack.c.b16 %v1355, %v1353
      %v1528 = vpack.c.b16 %v1358, %v1356
      %v1529 = vpack.c.b16 %v1359, %v1357
      %v1530 = vpack.c.b16 %v1362, %v1360
      %v1531 = vpack.c.b16 %v1363, %v1361
      %v1532 = vpack.c.b16 %v1366, %v1364
      %v1533 = vpack.c.b16 %v1367, %v1365
      %v1534 = vpack.c.b16 %v1370, %v1368
      %v1535 = vpack.c.b16 %v1371, %v1369
      %v1536 = vpack.c.b16 %v1374, %v1372
      %v1537 = vpack.c.b16 %v1375, %v1373
      %v1538 = vpack.c.b16 %v1378, %v1376
      %v1539 = vpack.c.b16 %v1379, %v1377
      %v1540 = vpack.c.b16 %v1382, %v1380
      %v1541 = vpack.c.b16 %v1383, %v1381
      %v1542 = vpack.c.b16 %v1386, %v1384
      %v1543 = vpack.c.b16 %v1387, %v1385
      %v1544 = vpack.c.b16 %v1390, %v1388
      %v1545 = vpack.c.b16 %v1391, %v1389
      %v1546 = vpack.c.b16 %v1394, %v1392
      %v1547 = vpack.c.b16 %v1395, %v1393
      %v1548 = vpack.c.b16 %v1398, %v1396
      %v1549 = vpack.c.b16 %v1399, %v1397
      %v1550 = vpack.c.b16 %v1402, %v1400
      %v1551 = vpack.c.b16 %v1403, %v1401
      %v1552 = vpack.c.b16 %v1406, %v1404
      %v1553 = vpack.c.b16 %v1407, %v1405
      %v1554 = vpack.c.b16 %v1410, %v1408
      %v1555 = vpack.c.b16 %v1411, %v1409
      %v1556 = vpack.c.b16 %v1414, %v1412
      %v1557 = vpack.c.b16 %v1415, %v1413
      %v1558 = vpack.c.b16 %v1418, %v1416
      %v1559 = vpack.c.b16 %v1419, %v1417
      %v1560 = vpack.c.b16 %v1422, %v1420
      %v1561 = vpack.c.b16 %v1423, %v1421
      %v1562 = vpack.c.b16 %v1426, %v1424
      %v1563 = vpack.c.b16 %v1427, %v1425
      %v1564 = vpack.c.b16 %v1430, %v1428
      %v1565 = vpack.c.b16 %v1431, %v1429
      %v1566 = vpack.c.b16 %v1434, %v1432
      %v1567 = vpack.c.b16 %v1435, %v1433
      %v1568 = vpack.c.b16 %v1438, %v1436
      %v1569 = vpack.c.b16 %v1439, %v1437
      %v1570 = vpack.c.b16 %v1442, %v1440
      %v1571 = vpack.c.b16 %v1443, %v1441
      %v1572 = vpack.c.b16 %v1446, %v1444
      %v1573 = vpack.c.b16 %v1447, %v1445
      %v1574 = vpack.c.b16 %v1450, %v1448
      %v1575 = vpack.c.b16 %v1451, %v1449
      %v1576 = vpack.c.b16 %v1454, %v1452
      %v1577 = vpack.c.b16 %v1455, %v1453
      %v1578 = vpack.c.b16 %v1458, %v1456
      %v1579 = vpack.c.b16 %v1459, %v1457
      %v1580 = vpack.c.b16 %v1462, %v1460
      %v1581 = vpack.c.b16 %v1463, %v1461
      %v1582 = vpack.c.b16 %v1466, %v1464
      %v1583 = vpack.c.b16 %v1467, %v1465
      %v1584 = vpack.c.b16 %v1470, %v1468
      %v1585 = vpack.c.b16 %v1471, %v1469
      %v1586 = vpack.c.b16 %v1474, %v1472
      %v1587 = vpack.c.b16 %v1475, %v1473
      %v1588 = vpack.c.b16 %v1478, %v1476
      %v1589 = vpack.c.b16 %v1479, %v1477
      %v1590 = vpack.c.b16 %v1482, %v1480
      %v1591 = vpack.c.b16 %v1483, %v1481
      %v1592 = vpack.c.b16 %v1486, %v1484
      %v1593 = vpack.c.b16 %v1487, %v1485
      %v1594 = vpack.c.b16 %v1490, %v1488
      %v1595 = vpack.c.b16 %v1491, %v1489
      %v1596 = vpack.c.b16 %v1494, %v1492
      %v1597 = vpack.c.b16 %v1495, %v1493
      %v1598 = vpack.c.b16 %v1498, %v1496
      %v1599 = vpack.c.b16 %v1499, %v1497
      %v1600 = vpack.c.b16 %v1502, %v1500
      %v1601 = vpack.c.b16 %v1503, %v1501
      %v1602 = vpack.c.b16 %v1506, %v1504
      %v1603 = vpack.c.b16 %v1507, %v1505
      %1700 = vmatprep.subr.bf16.mxu0 %v1523
      %1701 = vmatpush1.bf16.msra.mxu0 %v1522
      %1702 = vmatprep.subr.bf16.mxu0 %v1521
      %1703 = vmatpush1.bf16.msra.mxu0 %v1520
      %1704 = vmatprep.subr.bf16.mxu0 %v1519
      %1705 = vmatpush1.bf16.msra.mxu0 %v1518
      %1706 = vmatprep.subr.bf16.mxu0 %v1517
      %1707 = vmatpush1.bf16.msra.mxu0 %v1516
      %1708 = vmatprep.subr.bf16.mxu0 %v1515
      %1709 = vmatpush1.bf16.msra.mxu0 %v1514
      %1710 = vmatprep.subr.bf16.mxu0 %v1513
      %1711 = vmatpush1.bf16.msra.mxu0 %v1512
      %1712 = vmatprep.subr.bf16.mxu0 %v1511
      %1713 = vmatpush1.bf16.msra.mxu0 %v1510
      %1714 = vmatprep.subr.bf16.mxu0 %v1509
      %1715 = vmatpush1.bf16.msra.mxu0 %v1508
      %1716 = vmatprep.subr.bf16.mxu0 %v1539
      %1717 = vmatpush2.bf16.msra.mxu0 %v1538
      %1718 = vmatprep.subr.bf16.mxu0 %v1537
      %1719 = vmatpush2.bf16.msra.mxu0 %v1536
      %1720 = vmatprep.subr.bf16.mxu0 %v1535
      %1721 = vmatpush2.bf16.msra.mxu0 %v1534
      %1722 = vmatprep.subr.bf16.mxu0 %v1533
      %1723 = vmatpush2.bf16.msra.mxu0 %v1532
      %1724 = vmatprep.subr.bf16.mxu0 %v1531
      %1725 = vmatpush2.bf16.msra.mxu0 %v1530
      %1726 = vmatprep.subr.bf16.mxu0 %v1529
      %1727 = vmatpush2.bf16.msra.mxu0 %v1528
      %1728 = vmatprep.subr.bf16.mxu0 %v1527
      %1729 = vmatpush2.bf16.msra.mxu0 %v1526
      %1730 = vmatprep.subr.bf16.mxu0 %v1525
      %1731 = vmatpush2.bf16.msra.mxu0 %v1524
      %1732 = vmatprep.mubr.bf16.mxu0 %v275
      %1733 = vmatmul.mubr.bf16.gmra.mxu0 %v274
      %v1734 = vpop.f32.mrf.mxu0
      %v1735 = vadd.f32 %v1182, %v1734
      %v1736 = vpop.f32.mrf.mxu0
      %v1737 = vadd.f32 %v1184, %v1736
      %v1738 = vpop.f32.mrf.mxu0
      %v1739 = vadd.f32 %v1186, %v1738
      %v1740 = vpop.f32.mrf.mxu0
      %v1741 = vadd.f32 %v1188, %v1740
      %1742 = vmatprep.mubr.bf16.mxu0 %v281
      %1743 = vmatmul.mubr.bf16.gmra.mxu0 %v280
      %v1744 = vpop.f32.mrf.mxu0
      %v1745 = vadd.f32 %v1192, %v1744
      %v1746 = vpop.f32.mrf.mxu0
      %v1747 = vadd.f32 %v1194, %v1746
      %v1748 = vpop.f32.mrf.mxu0
      %v1749 = vadd.f32 %v1196, %v1748
      %v1750 = vpop.f32.mrf.mxu0
      %v1751 = vadd.f32 %v1198, %v1750
      %1752 = vmatprep.mubr.bf16.mxu0 %v287
      %1753 = vmatmul.mubr.bf16.gmra.mxu0 %v286
      %v1754 = vpop.f32.mrf.mxu0
      %v1755 = vadd.f32 %v1202, %v1754
      %v1756 = vpop.f32.mrf.mxu0
      %v1757 = vadd.f32 %v1204, %v1756
      %v1758 = vpop.f32.mrf.mxu0
      %v1759 = vadd.f32 %v1206, %v1758
      %v1760 = vpop.f32.mrf.mxu0
      %v1761 = vadd.f32 %v1208, %v1760
      %1762 = vmatprep.mubr.bf16.mxu0 %v293
      %1763 = vmatmul.mubr.bf16.gmra.mxu0 %v292
      %v1764 = vpop.f32.mrf.mxu0
      %v1765 = vadd.f32 %v1212, %v1764
      %v1766 = vpop.f32.mrf.mxu0
      %v1767 = vadd.f32 %v1214, %v1766
      %v1768 = vpop.f32.mrf.mxu0
      %v1769 = vadd.f32 %v1216, %v1768
      %v1770 = vpop.f32.mrf.mxu0
      %v1771 = vadd.f32 %v1218, %v1770
      %1772 = vdwg.mxu0
      %1773 = vmatprep.subr.bf16.mxu0 %v1555
      %1774 = vmatpush1.bf16.msra.mxu0 %v1554
      %1775 = vmatprep.subr.bf16.mxu0 %v1553
      %1776 = vmatpush1.bf16.msra.mxu0 %v1552
      %1777 = vmatprep.subr.bf16.mxu0 %v1551
      %1778 = vmatpush1.bf16.msra.mxu0 %v1550
      %1779 = vmatprep.subr.bf16.mxu0 %v1549
      %1780 = vmatpush1.bf16.msra.mxu0 %v1548
      %1781 = vmatprep.subr.bf16.mxu0 %v1547
      %1782 = vmatpush1.bf16.msra.mxu0 %v1546
      %1783 = vmatprep.subr.bf16.mxu0 %v1545
      %1784 = vmatpush1.bf16.msra.mxu0 %v1544
      %1785 = vmatprep.subr.bf16.mxu0 %v1543
      %1786 = vmatpush1.bf16.msra.mxu0 %v1542
      %1787 = vmatprep.subr.bf16.mxu0 %v1541
      %1788 = vmatpush1.bf16.msra.mxu0 %v1540
      %1789 = vmatprep.subr.bf16.mxu0 %v1571
      %1790 = vmatpush2.bf16.msra.mxu0 %v1570
      %1791 = vmatprep.subr.bf16.mxu0 %v1569
      %1792 = vmatpush2.bf16.msra.mxu0 %v1568
      %1793 = vmatprep.subr.bf16.mxu0 %v1567
      %1794 = vmatpush2.bf16.msra.mxu0 %v1566
      %1795 = vmatprep.subr.bf16.mxu0 %v1565
      %1796 = vmatpush2.bf16.msra.mxu0 %v1564
      %1797 = vmatprep.subr.bf16.mxu0 %v1563
      %1798 = vmatpush2.bf16.msra.mxu0 %v1562
      %1799 = vmatprep.subr.bf16.mxu0 %v1561
      %1800 = vmatpush2.bf16.msra.mxu0 %v1560
      %1801 = vmatprep.subr.bf16.mxu0 %v1559
      %1802 = vmatpush2.bf16.msra.mxu0 %v1558
      %1803 = vmatprep.subr.bf16.mxu0 %v1557
      %1804 = vmatpush2.bf16.msra.mxu0 %v1556
      %1805 = vmatprep.mubr.bf16.mxu0 %v277
      %1806 = vmatmul.mubr.bf16.gmra.mxu0 %v276
      %v1807 = vpop.f32.mrf.mxu0
      %v1808 = vadd.f32 %v1735, %v1807
      %v1809 = vpop.f32.mrf.mxu0
      %v1810 = vadd.f32 %v1737, %v1809
      %v1811 = vpop.f32.mrf.mxu0
      %v1812 = vadd.f32 %v1739, %v1811
      %v1813 = vpop.f32.mrf.mxu0
      %v1814 = vadd.f32 %v1741, %v1813
      %1815 = vmatprep.mubr.bf16.mxu0 %v283
      %1816 = vmatmul.mubr.bf16.gmra.mxu0 %v282
      %v1817 = vpop.f32.mrf.mxu0
      %v1818 = vadd.f32 %v1745, %v1817
      %v1819 = vpop.f32.mrf.mxu0
      %v1820 = vadd.f32 %v1747, %v1819
      %v1821 = vpop.f32.mrf.mxu0
      %v1822 = vadd.f32 %v1749, %v1821
      %v1823 = vpop.f32.mrf.mxu0
      %v1824 = vadd.f32 %v1751, %v1823
      %1825 = vmatprep.mubr.bf16.mxu0 %v289
      %1826 = vmatmul.mubr.bf16.gmra.mxu0 %v288
      %v1827 = vpop.f32.mrf.mxu0
      %v1828 = vadd.f32 %v1755, %v1827
      %v1829 = vpop.f32.mrf.mxu0
      %v1830 = vadd.f32 %v1757, %v1829
      %v1831 = vpop.f32.mrf.mxu0
      %v1832 = vadd.f32 %v1759, %v1831
      %v1833 = vpop.f32.mrf.mxu0
      %v1834 = vadd.f32 %v1761, %v1833
      %1835 = vmatprep.mubr.bf16.mxu0 %v295
      %1836 = vmatmul.mubr.bf16.gmra.mxu0 %v294
      %v1837 = vpop.f32.mrf.mxu0
      %v1838 = vadd.f32 %v1765, %v1837
      %v1839 = vpop.f32.mrf.mxu0
      %v1840 = vadd.f32 %v1767, %v1839
      %v1841 = vpop.f32.mrf.mxu0
      %v1842 = vadd.f32 %v1769, %v1841
      %v1843 = vpop.f32.mrf.mxu0
      %v1844 = vadd.f32 %v1771, %v1843
      %1845 = vdwg.mxu0
      %1846 = vmatprep.subr.bf16.mxu0 %v1587
      %1847 = vmatpush1.bf16.msra.mxu0 %v1586
      %1848 = vmatprep.subr.bf16.mxu0 %v1585
      %1849 = vmatpush1.bf16.msra.mxu0 %v1584
      %1850 = vmatprep.subr.bf16.mxu0 %v1583
      %1851 = vmatpush1.bf16.msra.mxu0 %v1582
      %1852 = vmatprep.subr.bf16.mxu0 %v1581
      %1853 = vmatpush1.bf16.msra.mxu0 %v1580
      %1854 = vmatprep.subr.bf16.mxu0 %v1579
      %1855 = vmatpush1.bf16.msra.mxu0 %v1578
      %1856 = vmatprep.subr.bf16.mxu0 %v1577
      %1857 = vmatpush1.bf16.msra.mxu0 %v1576
      %1858 = vmatprep.subr.bf16.mxu0 %v1575
      %1859 = vmatpush1.bf16.msra.mxu0 %v1574
      %1860 = vmatprep.subr.bf16.mxu0 %v1573
      %1861 = vmatpush1.bf16.msra.mxu0 %v1572
      %1862 = vmatprep.subr.bf16.mxu0 %v1603
      %1863 = vmatpush2.bf16.msra.mxu0 %v1602
      %1864 = vmatprep.subr.bf16.mxu0 %v1601
      %1865 = vmatpush2.bf16.msra.mxu0 %v1600
      %1866 = vmatprep.subr.bf16.mxu0 %v1599
      %1867 = vmatpush2.bf16.msra.mxu0 %v1598
      %1868 = vmatprep.subr.bf16.mxu0 %v1597
      %1869 = vmatpush2.bf16.msra.mxu0 %v1596
      %1870 = vmatprep.subr.bf16.mxu0 %v1595
      %1871 = vmatpush2.bf16.msra.mxu0 %v1594
      %1872 = vmatprep.subr.bf16.mxu0 %v1593
      %1873 = vmatpush2.bf16.msra.mxu0 %v1592
      %1874 = vmatprep.subr.bf16.mxu0 %v1591
      %1875 = vmatpush2.bf16.msra.mxu0 %v1590
      %1876 = vmatprep.subr.bf16.mxu0 %v1589
      %1877 = vmatpush2.bf16.msra.mxu0 %v1588
      %1878 = vmatprep.mubr.bf16.mxu0 %v279
      %1879 = vmatmul.mubr.bf16.gmra.mxu0 %v278
      %v1880 = vpop.f32.mrf.mxu0
      %v1881 = vadd.f32 %v1808, %v1880
      %v1882 = vpop.f32.mrf.mxu0
      %v1883 = vadd.f32 %v1810, %v1882
      %v1884 = vpop.f32.mrf.mxu0
      %v1885 = vadd.f32 %v1812, %v1884
      %v1886 = vpop.f32.mrf.mxu0
      %v1887 = vadd.f32 %v1814, %v1886
      %1888 = vmatprep.mubr.bf16.mxu0 %v285
      %1889 = vmatmul.mubr.bf16.gmra.mxu0 %v284
      %v1890 = vpop.f32.mrf.mxu0
      %v1891 = vadd.f32 %v1818, %v1890
      %v1892 = vpop.f32.mrf.mxu0
      %v1893 = vadd.f32 %v1820, %v1892
      %v1894 = vpop.f32.mrf.mxu0
      %v1895 = vadd.f32 %v1822, %v1894
      %v1896 = vpop.f32.mrf.mxu0
      %v1897 = vadd.f32 %v1824, %v1896
      %1898 = vmatprep.mubr.bf16.mxu0 %v291
      %1899 = vmatmul.mubr.bf16.gmra.mxu0 %v290
      %v1900 = vpop.f32.mrf.mxu0
      %v1901 = vadd.f32 %v1828, %v1900
      %v1902 = vpop.f32.mrf.mxu0
      %v1903 = vadd.f32 %v1830, %v1902
      %v1904 = vpop.f32.mrf.mxu0
      %v1905 = vadd.f32 %v1832, %v1904
      %v1906 = vpop.f32.mrf.mxu0
      %v1907 = vadd.f32 %v1834, %v1906
      %1908 = vmatprep.mubr.bf16.mxu0 %v297
      %1909 = vmatmul.mubr.bf16.gmra.mxu0 %v296
      %v1910 = vpop.f32.mrf.mxu0
      %v1911 = vadd.f32 %v1838, %v1910
      %v1912 = vpop.f32.mrf.mxu0
      %v1913 = vadd.f32 %v1840, %v1912
      %v1914 = vpop.f32.mrf.mxu0
      %v1915 = vadd.f32 %v1842, %v1914
      %v1916 = vpop.f32.mrf.mxu0
      %v1917 = vadd.f32 %v1844, %v1916
      %1918 = vdwg.mxu0
      %v1919 = vld [vmem:[%s219 + $0x60] sm:$0xff]
      %v1920 = vld [vmem:[%s219 + $0x68] sm:$0xff]
      %v1921 = vld [vmem:[%s219 + $0x70] sm:$0xff]
      %v1922 = vld [vmem:[%s219 + $0x78] sm:$0xff]
      %v1923 = vld [vmem:[%s219 + $0x80] sm:$0xff]
      %v1924 = vld [vmem:[%s219 + $0x88] sm:$0xff]
      %v1925 = vld [vmem:[%s219 + $0x90] sm:$0xff]
      %v1926 = vld [vmem:[%s219 + $0x98] sm:$0xff]
      %v1927 = vld [vmem:[%s219 + $0xa0] sm:$0xff]
      %v1928 = vld [vmem:[%s219 + $0xa8] sm:$0xff]
      %v1929 = vld [vmem:[%s219 + $0xb0] sm:$0xff]
      %v1930 = vld [vmem:[%s219 + $0xb8] sm:$0xff]
      %v1931 = vld [vmem:[%s219 + $0xc0] sm:$0xff]
      %v1932 = vld [vmem:[%s219 + $0xc8] sm:$0xff]
      %v1933 = vld [vmem:[%s219 + $0xd0] sm:$0xff]
      %v1934 = vld [vmem:[%s219 + $0xd8] sm:$0xff]
      %v1935 = vld [vmem:[%s219 + $0xe0] sm:$0xff]
      %v1936 = vld [vmem:[%s219 + $0xe8] sm:$0xff]
      %v1937 = vld [vmem:[%s219 + $0xf0] sm:$0xff]
      %v1938 = vld [vmem:[%s219 + $0xf8] sm:$0xff]
      %v1939 = vld [vmem:[%s219 + $0x100] sm:$0xff]
      %v1940 = vld [vmem:[%s219 + $0x108] sm:$0xff]
      %v1941 = vld [vmem:[%s219 + $0x110] sm:$0xff]
      %v1942 = vld [vmem:[%s219 + $0x118] sm:$0xff]
      %v1943 = vld [vmem:[%s219 + $0x120] sm:$0xff]
      %v1944 = vld [vmem:[%s219 + $0x128] sm:$0xff]
      %v1945 = vld [vmem:[%s219 + $0x130] sm:$0xff]
      %v1946 = vld [vmem:[%s219 + $0x138] sm:$0xff]
      %v1947 = vld [vmem:[%s219 + $0x140] sm:$0xff]
      %v1948 = vld [vmem:[%s219 + $0x148] sm:$0xff]
      %v1949 = vld [vmem:[%s219 + $0x150] sm:$0xff]
      %v1950 = vld [vmem:[%s219 + $0x158] sm:$0xff]
      %v1951 = vld [vmem:[%s219 + $0x160] sm:$0xff]
      %v1952 = vld [vmem:[%s219 + $0x168] sm:$0xff]
      %v1953 = vld [vmem:[%s219 + $0x170] sm:$0xff]
      %v1954 = vld [vmem:[%s219 + $0x178] sm:$0xff]
      %v1955 = vld [vmem:[%s219 + $0x180] sm:$0xff]
      %v1956 = vld [vmem:[%s219 + $0x188] sm:$0xff]
      %v1957 = vld [vmem:[%s219 + $0x190] sm:$0xff]
      %v1958 = vld [vmem:[%s219 + $0x198] sm:$0xff]
      %v1959 = vld [vmem:[%s219 + $0x1a0] sm:$0xff]
      %v1960 = vld [vmem:[%s219 + $0x1a8] sm:$0xff]
      %v1961 = vld [vmem:[%s219 + $0x1b0] sm:$0xff]
      %v1962 = vld [vmem:[%s219 + $0x1b8] sm:$0xff]
      %v1963 = vld [vmem:[%s219 + $0x1c0] sm:$0xff]
      %v1964 = vld [vmem:[%s219 + $0x1c8] sm:$0xff]
      %v1965 = vld [vmem:[%s219 + $0x1d0] sm:$0xff]
      %v1966 = vld [vmem:[%s219 + $0x1d8] sm:$0xff]
      %v1967 = vpack.c.bf16 %v1925, %v1919
      %v1968 = vpack.c.bf16 %v1926, %v1920
      %v1969 = vpack.c.bf16 %v1927, %v1921
      %v1970 = vpack.c.bf16 %v1928, %v1922
      %v1971 = vpack.c.bf16 %v1929, %v1923
      %v1972 = vpack.c.bf16 %v1930, %v1924
      %v1973 = vpack.c.bf16 %v1937, %v1931
      %v1974 = vpack.c.bf16 %v1938, %v1932
      %v1975 = vpack.c.bf16 %v1939, %v1933
      %v1976 = vpack.c.bf16 %v1940, %v1934
      %v1977 = vpack.c.bf16 %v1941, %v1935
      %v1978 = vpack.c.bf16 %v1942, %v1936
      %v1979 = vpack.c.bf16 %v1949, %v1943
      %v1980 = vpack.c.bf16 %v1950, %v1944
      %v1981 = vpack.c.bf16 %v1951, %v1945
      %v1982 = vpack.c.bf16 %v1952, %v1946
      %v1983 = vpack.c.bf16 %v1953, %v1947
      %v1984 = vpack.c.bf16 %v1954, %v1948
      %v1985 = vpack.c.bf16 %v1961, %v1955
      %v1986 = vpack.c.bf16 %v1962, %v1956
      %v1987 = vpack.c.bf16 %v1963, %v1957
      %v1988 = vpack.c.bf16 %v1964, %v1958
      %v1989 = vpack.c.bf16 %v1965, %v1959
      %v1990 = vpack.c.bf16 %v1966, %v1960
      %s1991 = scalar_lea.vmem %s1, 1536
      %v1992 = vld [vmem:[%s1991] sm:$0xff]
      %v1993 = vld [vmem:[%s1991 + $0x8] sm:$0xff]
      %v1994 = vld [vmem:[%s1991 + $0x10] sm:$0xff]
      %v1995 = vld [vmem:[%s1991 + $0x18] sm:$0xff]
      %v1996 = vld [vmem:[%s1991 + $0x20] sm:$0xff]
      %v1997 = vld [vmem:[%s1991 + $0x28] sm:$0xff]
      %v1998 = vld [vmem:[%s1991 + $0x30] sm:$0xff]
      %v1999 = vld [vmem:[%s1991 + $0x38] sm:$0xff]
      %v2000 = vld [vmem:[%s1991 + $0x40] sm:$0xff]
      %v2001 = vld [vmem:[%s1991 + $0x48] sm:$0xff]
      %v2002 = vld [vmem:[%s1991 + $0x50] sm:$0xff]
      %v2003 = vld [vmem:[%s1991 + $0x58] sm:$0xff]
      %v2004 = vld [vmem:[%s1991 + $0x60] sm:$0xff]
      %v2005 = vld [vmem:[%s1991 + $0x68] sm:$0xff]
      %v2006 = vld [vmem:[%s1991 + $0x70] sm:$0xff]
      %v2007 = vld [vmem:[%s1991 + $0x78] sm:$0xff]
      %v2008 = vld [vmem:[%s1991 + $0x80] sm:$0xff]
      %v2009 = vld [vmem:[%s1991 + $0x88] sm:$0xff]
      %v2010 = vld [vmem:[%s1991 + $0x90] sm:$0xff]
      %v2011 = vld [vmem:[%s1991 + $0x98] sm:$0xff]
      %v2012 = vld [vmem:[%s1991 + $0xa0] sm:$0xff]
      %v2013 = vld [vmem:[%s1991 + $0xa8] sm:$0xff]
      %v2014 = vld [vmem:[%s1991 + $0xb0] sm:$0xff]
      %v2015 = vld [vmem:[%s1991 + $0xb8] sm:$0xff]
      %v2016 = vld [vmem:[%s1991 + $0xc0] sm:$0xff]
      %v2017 = vld [vmem:[%s1991 + $0xc8] sm:$0xff]
      %v2018 = vld [vmem:[%s1991 + $0xd0] sm:$0xff]
      %v2019 = vld [vmem:[%s1991 + $0xd8] sm:$0xff]
      %v2020 = vld [vmem:[%s1991 + $0xe0] sm:$0xff]
      %v2021 = vld [vmem:[%s1991 + $0xe8] sm:$0xff]
      %v2022 = vld [vmem:[%s1991 + $0xf0] sm:$0xff]
      %v2023 = vld [vmem:[%s1991 + $0xf8] sm:$0xff]
      %v2024 = vld [vmem:[%s1991 + $0x100] sm:$0xff]
      %v2025 = vld [vmem:[%s1991 + $0x108] sm:$0xff]
      %v2026 = vld [vmem:[%s1991 + $0x110] sm:$0xff]
      %v2027 = vld [vmem:[%s1991 + $0x118] sm:$0xff]
      %v2028 = vld [vmem:[%s1991 + $0x120] sm:$0xff]
      %v2029 = vld [vmem:[%s1991 + $0x128] sm:$0xff]
      %v2030 = vld [vmem:[%s1991 + $0x130] sm:$0xff]
      %v2031 = vld [vmem:[%s1991 + $0x138] sm:$0xff]
      %v2032 = vld [vmem:[%s1991 + $0x140] sm:$0xff]
      %v2033 = vld [vmem:[%s1991 + $0x148] sm:$0xff]
      %v2034 = vld [vmem:[%s1991 + $0x150] sm:$0xff]
      %v2035 = vld [vmem:[%s1991 + $0x158] sm:$0xff]
      %v2036 = vld [vmem:[%s1991 + $0x160] sm:$0xff]
      %v2037 = vld [vmem:[%s1991 + $0x168] sm:$0xff]
      %v2038 = vld [vmem:[%s1991 + $0x170] sm:$0xff]
      %v2039 = vld [vmem:[%s1991 + $0x178] sm:$0xff]
      %v2040 = vld [vmem:[%s1991 + $0x180] sm:$0xff]
      %v2041 = vld [vmem:[%s1991 + $0x188] sm:$0xff]
      %v2042 = vld [vmem:[%s1991 + $0x190] sm:$0xff]
      %v2043 = vld [vmem:[%s1991 + $0x198] sm:$0xff]
      %v2044 = vld [vmem:[%s1991 + $0x1a0] sm:$0xff]
      %v2045 = vld [vmem:[%s1991 + $0x1a8] sm:$0xff]
      %v2046 = vld [vmem:[%s1991 + $0x1b0] sm:$0xff]
      %v2047 = vld [vmem:[%s1991 + $0x1b8] sm:$0xff]
      %v2048 = vld [vmem:[%s1991 + $0x1c0] sm:$0xff]
      %v2049 = vld [vmem:[%s1991 + $0x1c8] sm:$0xff]
      %v2050 = vld [vmem:[%s1991 + $0x1d0] sm:$0xff]
      %v2051 = vld [vmem:[%s1991 + $0x1d8] sm:$0xff]
      %v2052 = vld [vmem:[%s1991 + $0x1e0] sm:$0xff]
      %v2053 = vld [vmem:[%s1991 + $0x1e8] sm:$0xff]
      %v2054 = vld [vmem:[%s1991 + $0x1f0] sm:$0xff]
      %v2055 = vld [vmem:[%s1991 + $0x1f8] sm:$0xff]
      %v2056 = vld [vmem:[%s1991 + $0x200] sm:$0xff]
      %v2057 = vld [vmem:[%s1991 + $0x208] sm:$0xff]
      %v2058 = vld [vmem:[%s1991 + $0x210] sm:$0xff]
      %v2059 = vld [vmem:[%s1991 + $0x218] sm:$0xff]
      %v2060 = vld [vmem:[%s1991 + $0x220] sm:$0xff]
      %v2061 = vld [vmem:[%s1991 + $0x228] sm:$0xff]
      %v2062 = vld [vmem:[%s1991 + $0x230] sm:$0xff]
      %v2063 = vld [vmem:[%s1991 + $0x238] sm:$0xff]
      %v2064 = vld [vmem:[%s1991 + $0x240] sm:$0xff]
      %v2065 = vld [vmem:[%s1991 + $0x248] sm:$0xff]
      %v2066 = vld [vmem:[%s1991 + $0x250] sm:$0xff]
      %v2067 = vld [vmem:[%s1991 + $0x258] sm:$0xff]
      %v2068 = vld [vmem:[%s1991 + $0x260] sm:$0xff]
      %v2069 = vld [vmem:[%s1991 + $0x268] sm:$0xff]
      %v2070 = vld [vmem:[%s1991 + $0x270] sm:$0xff]
      %v2071 = vld [vmem:[%s1991 + $0x278] sm:$0xff]
      %v2072 = vld [vmem:[%s1991 + $0x280] sm:$0xff]
      %v2073 = vld [vmem:[%s1991 + $0x288] sm:$0xff]
      %v2074 = vld [vmem:[%s1991 + $0x290] sm:$0xff]
      %v2075 = vld [vmem:[%s1991 + $0x298] sm:$0xff]
      %v2076 = vld [vmem:[%s1991 + $0x2a0] sm:$0xff]
      %v2077 = vld [vmem:[%s1991 + $0x2a8] sm:$0xff]
      %v2078 = vld [vmem:[%s1991 + $0x2b0] sm:$0xff]
      %v2079 = vld [vmem:[%s1991 + $0x2b8] sm:$0xff]
      %v2080 = vld [vmem:[%s1991 + $0x2c0] sm:$0xff]
      %v2081 = vld [vmem:[%s1991 + $0x2c8] sm:$0xff]
      %v2082 = vld [vmem:[%s1991 + $0x2d0] sm:$0xff]
      %v2083 = vld [vmem:[%s1991 + $0x2d8] sm:$0xff]
      %v2084 = vld [vmem:[%s1991 + $0x2e0] sm:$0xff]
      %v2085 = vld [vmem:[%s1991 + $0x2e8] sm:$0xff]
      %v2086 = vld [vmem:[%s1991 + $0x2f0] sm:$0xff]
      %v2087 = vld [vmem:[%s1991 + $0x2f8] sm:$0xff]
      %v2184 = vunpack.c.l.b16 %v1992
      %v2185 = vunpack.c.h.b16 %v1992
      %v2186 = vunpack.c.l.b16 %v1993
      %v2187 = vunpack.c.h.b16 %v1993
      %v2188 = vunpack.c.l.b16 %v1994
      %v2189 = vunpack.c.h.b16 %v1994
      %v2190 = vunpack.c.l.b16 %v1995
      %v2191 = vunpack.c.h.b16 %v1995
      %v2192 = vunpack.c.l.b16 %v1996
      %v2193 = vunpack.c.h.b16 %v1996
      %v2194 = vunpack.c.l.b16 %v1997
      %v2195 = vunpack.c.h.b16 %v1997
      %v2196 = vunpack.c.l.b16 %v1998
      %v2197 = vunpack.c.h.b16 %v1998
      %v2198 = vunpack.c.l.b16 %v1999
      %v2199 = vunpack.c.h.b16 %v1999
      %v2200 = vunpack.c.l.b16 %v2000
      %v2201 = vunpack.c.h.b16 %v2000
      %v2202 = vunpack.c.l.b16 %v2001
      %v2203 = vunpack.c.h.b16 %v2001
      %v2204 = vunpack.c.l.b16 %v2002
      %v2205 = vunpack.c.h.b16 %v2002
      %v2206 = vunpack.c.l.b16 %v2003
      %v2207 = vunpack.c.h.b16 %v2003
      %v2208 = vunpack.c.l.b16 %v2004
      %v2209 = vunpack.c.h.b16 %v2004
      %v2210 = vunpack.c.l.b16 %v2005
      %v2211 = vunpack.c.h.b16 %v2005
      %v2212 = vunpack.c.l.b16 %v2006
      %v2213 = vunpack.c.h.b16 %v2006
      %v2214 = vunpack.c.l.b16 %v2007
      %v2215 = vunpack.c.h.b16 %v2007
      %v2216 = vunpack.c.l.b16 %v2008
      %v2217 = vunpack.c.h.b16 %v2008
      %v2218 = vunpack.c.l.b16 %v2009
      %v2219 = vunpack.c.h.b16 %v2009
      %v2220 = vunpack.c.l.b16 %v2010
      %v2221 = vunpack.c.h.b16 %v2010
      %v2222 = vunpack.c.l.b16 %v2011
      %v2223 = vunpack.c.h.b16 %v2011
      %v2224 = vunpack.c.l.b16 %v2012
      %v2225 = vunpack.c.h.b16 %v2012
      %v2226 = vunpack.c.l.b16 %v2013
      %v2227 = vunpack.c.h.b16 %v2013
      %v2228 = vunpack.c.l.b16 %v2014
      %v2229 = vunpack.c.h.b16 %v2014
      %v2230 = vunpack.c.l.b16 %v2015
      %v2231 = vunpack.c.h.b16 %v2015
      %v2232 = vunpack.c.l.b16 %v2016
      %v2233 = vunpack.c.h.b16 %v2016
      %v2234 = vunpack.c.l.b16 %v2017
      %v2235 = vunpack.c.h.b16 %v2017
      %v2236 = vunpack.c.l.b16 %v2018
      %v2237 = vunpack.c.h.b16 %v2018
      %v2238 = vunpack.c.l.b16 %v2019
      %v2239 = vunpack.c.h.b16 %v2019
      %v2240 = vunpack.c.l.b16 %v2020
      %v2241 = vunpack.c.h.b16 %v2020
      %v2242 = vunpack.c.l.b16 %v2021
      %v2243 = vunpack.c.h.b16 %v2021
      %v2244 = vunpack.c.l.b16 %v2022
      %v2245 = vunpack.c.h.b16 %v2022
      %v2246 = vunpack.c.l.b16 %v2023
      %v2247 = vunpack.c.h.b16 %v2023
      %v2248 = vunpack.c.l.b16 %v2024
      %v2249 = vunpack.c.h.b16 %v2024
      %v2250 = vunpack.c.l.b16 %v2025
      %v2251 = vunpack.c.h.b16 %v2025
      %v2252 = vunpack.c.l.b16 %v2026
      %v2253 = vunpack.c.h.b16 %v2026
      %v2254 = vunpack.c.l.b16 %v2027
      %v2255 = vunpack.c.h.b16 %v2027
      %v2256 = vunpack.c.l.b16 %v2028
      %v2257 = vunpack.c.h.b16 %v2028
      %v2258 = vunpack.c.l.b16 %v2029
      %v2259 = vunpack.c.h.b16 %v2029
      %v2260 = vunpack.c.l.b16 %v2030
      %v2261 = vunpack.c.h.b16 %v2030
      %v2262 = vunpack.c.l.b16 %v2031
      %v2263 = vunpack.c.h.b16 %v2031
      %v2264 = vunpack.c.l.b16 %v2032
      %v2265 = vunpack.c.h.b16 %v2032
      %v2266 = vunpack.c.l.b16 %v2033
      %v2267 = vunpack.c.h.b16 %v2033
      %v2268 = vunpack.c.l.b16 %v2034
      %v2269 = vunpack.c.h.b16 %v2034
      %v2270 = vunpack.c.l.b16 %v2035
      %v2271 = vunpack.c.h.b16 %v2035
      %v2272 = vunpack.c.l.b16 %v2036
      %v2273 = vunpack.c.h.b16 %v2036
      %v2274 = vunpack.c.l.b16 %v2037
      %v2275 = vunpack.c.h.b16 %v2037
      %v2276 = vunpack.c.l.b16 %v2038
      %v2277 = vunpack.c.h.b16 %v2038
      %v2278 = vunpack.c.l.b16 %v2039
      %v2279 = vunpack.c.h.b16 %v2039
      %v2280 = vunpack.c.l.b16 %v2040
      %v2281 = vunpack.c.h.b16 %v2040
      %v2282 = vunpack.c.l.b16 %v2041
      %v2283 = vunpack.c.h.b16 %v2041
      %v2284 = vunpack.c.l.b16 %v2042
      %v2285 = vunpack.c.h.b16 %v2042
      %v2286 = vunpack.c.l.b16 %v2043
      %v2287 = vunpack.c.h.b16 %v2043
      %v2288 = vunpack.c.l.b16 %v2044
      %v2289 = vunpack.c.h.b16 %v2044
      %v2290 = vunpack.c.l.b16 %v2045
      %v2291 = vunpack.c.h.b16 %v2045
      %v2292 = vunpack.c.l.b16 %v2046
      %v2293 = vunpack.c.h.b16 %v2046
      %v2294 = vunpack.c.l.b16 %v2047
      %v2295 = vunpack.c.h.b16 %v2047
      %v2296 = vunpack.c.l.b16 %v2048
      %v2297 = vunpack.c.h.b16 %v2048
      %v2298 = vunpack.c.l.b16 %v2049
      %v2299 = vunpack.c.h.b16 %v2049
      %v2300 = vunpack.c.l.b16 %v2050
      %v2301 = vunpack.c.h.b16 %v2050
      %v2302 = vunpack.c.l.b16 %v2051
      %v2303 = vunpack.c.h.b16 %v2051
      %v2304 = vunpack.c.l.b16 %v2052
      %v2305 = vunpack.c.h.b16 %v2052
      %v2306 = vunpack.c.l.b16 %v2053
      %v2307 = vunpack.c.h.b16 %v2053
      %v2308 = vunpack.c.l.b16 %v2054
      %v2309 = vunpack.c.h.b16 %v2054
      %v2310 = vunpack.c.l.b16 %v2055
      %v2311 = vunpack.c.h.b16 %v2055
      %v2312 = vunpack.c.l.b16 %v2056
      %v2313 = vunpack.c.h.b16 %v2056
      %v2314 = vunpack.c.l.b16 %v2057
      %v2315 = vunpack.c.h.b16 %v2057
      %v2316 = vunpack.c.l.b16 %v2058
      %v2317 = vunpack.c.h.b16 %v2058
      %v2318 = vunpack.c.l.b16 %v2059
      %v2319 = vunpack.c.h.b16 %v2059
      %v2320 = vunpack.c.l.b16 %v2060
      %v2321 = vunpack.c.h.b16 %v2060
      %v2322 = vunpack.c.l.b16 %v2061
      %v2323 = vunpack.c.h.b16 %v2061
      %v2324 = vunpack.c.l.b16 %v2062
      %v2325 = vunpack.c.h.b16 %v2062
      %v2326 = vunpack.c.l.b16 %v2063
      %v2327 = vunpack.c.h.b16 %v2063
      %v2328 = vunpack.c.l.b16 %v2064
      %v2329 = vunpack.c.h.b16 %v2064
      %v2330 = vunpack.c.l.b16 %v2065
      %v2331 = vunpack.c.h.b16 %v2065
      %v2332 = vunpack.c.l.b16 %v2066
      %v2333 = vunpack.c.h.b16 %v2066
      %v2334 = vunpack.c.l.b16 %v2067
      %v2335 = vunpack.c.h.b16 %v2067
      %v2336 = vunpack.c.l.b16 %v2068
      %v2337 = vunpack.c.h.b16 %v2068
      %v2338 = vunpack.c.l.b16 %v2069
      %v2339 = vunpack.c.h.b16 %v2069
      %v2340 = vunpack.c.l.b16 %v2070
      %v2341 = vunpack.c.h.b16 %v2070
      %v2342 = vunpack.c.l.b16 %v2071
      %v2343 = vunpack.c.h.b16 %v2071
      %v2344 = vunpack.c.l.b16 %v2072
      %v2345 = vunpack.c.h.b16 %v2072
      %v2346 = vunpack.c.l.b16 %v2073
      %v2347 = vunpack.c.h.b16 %v2073
      %v2348 = vunpack.c.l.b16 %v2074
      %v2349 = vunpack.c.h.b16 %v2074
      %v2350 = vunpack.c.l.b16 %v2075
      %v2351 = vunpack.c.h.b16 %v2075
      %v2352 = vunpack.c.l.b16 %v2076
      %v2353 = vunpack.c.h.b16 %v2076
      %v2354 = vunpack.c.l.b16 %v2077
      %v2355 = vunpack.c.h.b16 %v2077
      %v2356 = vunpack.c.l.b16 %v2078
      %v2357 = vunpack.c.h.b16 %v2078
      %v2358 = vunpack.c.l.b16 %v2079
      %v2359 = vunpack.c.h.b16 %v2079
      %v2360 = vunpack.c.l.b16 %v2080
      %v2361 = vunpack.c.h.b16 %v2080
      %v2362 = vunpack.c.l.b16 %v2081
      %v2363 = vunpack.c.h.b16 %v2081
      %v2364 = vunpack.c.l.b16 %v2082
      %v2365 = vunpack.c.h.b16 %v2082
      %v2366 = vunpack.c.l.b16 %v2083
      %v2367 = vunpack.c.h.b16 %v2083
      %v2368 = vunpack.c.l.b16 %v2084
      %v2369 = vunpack.c.h.b16 %v2084
      %v2370 = vunpack.c.l.b16 %v2085
      %v2371 = vunpack.c.h.b16 %v2085
      %v2372 = vunpack.c.l.b16 %v2086
      %v2373 = vunpack.c.h.b16 %v2086
      %v2374 = vunpack.c.l.b16 %v2087
      %v2375 = vunpack.c.h.b16 %v2087
      %v2376 = vpack.c.b16 %v2186, %v2184
      %v2377 = vpack.c.b16 %v2187, %v2185
      %v2378 = vpack.c.b16 %v2190, %v2188
      %v2379 = vpack.c.b16 %v2191, %v2189
      %v2380 = vpack.c.b16 %v2194, %v2192
      %v2381 = vpack.c.b16 %v2195, %v2193
      %v2382 = vpack.c.b16 %v2198, %v2196
      %v2383 = vpack.c.b16 %v2199, %v2197
      %v2384 = vpack.c.b16 %v2202, %v2200
      %v2385 = vpack.c.b16 %v2203, %v2201
      %v2386 = vpack.c.b16 %v2206, %v2204
      %v2387 = vpack.c.b16 %v2207, %v2205
      %v2388 = vpack.c.b16 %v2210, %v2208
      %v2389 = vpack.c.b16 %v2211, %v2209
      %v2390 = vpack.c.b16 %v2214, %v2212
      %v2391 = vpack.c.b16 %v2215, %v2213
      %v2392 = vpack.c.b16 %v2218, %v2216
      %v2393 = vpack.c.b16 %v2219, %v2217
      %v2394 = vpack.c.b16 %v2222, %v2220
      %v2395 = vpack.c.b16 %v2223, %v2221
      %v2396 = vpack.c.b16 %v2226, %v2224
      %v2397 = vpack.c.b16 %v2227, %v2225
      %v2398 = vpack.c.b16 %v2230, %v2228
      %v2399 = vpack.c.b16 %v2231, %v2229
      %v2400 = vpack.c.b16 %v2234, %v2232
      %v2401 = vpack.c.b16 %v2235, %v2233
      %v2402 = vpack.c.b16 %v2238, %v2236
      %v2403 = vpack.c.b16 %v2239, %v2237
      %v2404 = vpack.c.b16 %v2242, %v2240
      %v2405 = vpack.c.b16 %v2243, %v2241
      %v2406 = vpack.c.b16 %v2246, %v2244
      %v2407 = vpack.c.b16 %v2247, %v2245
      %v2408 = vpack.c.b16 %v2250, %v2248
      %v2409 = vpack.c.b16 %v2251, %v2249
      %v2410 = vpack.c.b16 %v2254, %v2252
      %v2411 = vpack.c.b16 %v2255, %v2253
      %v2412 = vpack.c.b16 %v2258, %v2256
      %v2413 = vpack.c.b16 %v2259, %v2257
      %v2414 = vpack.c.b16 %v2262, %v2260
      %v2415 = vpack.c.b16 %v2263, %v2261
      %v2416 = vpack.c.b16 %v2266, %v2264
      %v2417 = vpack.c.b16 %v2267, %v2265
      %v2418 = vpack.c.b16 %v2270, %v2268
      %v2419 = vpack.c.b16 %v2271, %v2269
      %v2420 = vpack.c.b16 %v2274, %v2272
      %v2421 = vpack.c.b16 %v2275, %v2273
      %v2422 = vpack.c.b16 %v2278, %v2276
      %v2423 = vpack.c.b16 %v2279, %v2277
      %v2424 = vpack.c.b16 %v2282, %v2280
      %v2425 = vpack.c.b16 %v2283, %v2281
      %v2426 = vpack.c.b16 %v2286, %v2284
      %v2427 = vpack.c.b16 %v2287, %v2285
      %v2428 = vpack.c.b16 %v2290, %v2288
      %v2429 = vpack.c.b16 %v2291, %v2289
      %v2430 = vpack.c.b16 %v2294, %v2292
      %v2431 = vpack.c.b16 %v2295, %v2293
      %v2432 = vpack.c.b16 %v2298, %v2296
      %v2433 = vpack.c.b16 %v2299, %v2297
      %v2434 = vpack.c.b16 %v2302, %v2300
      %v2435 = vpack.c.b16 %v2303, %v2301
      %v2436 = vpack.c.b16 %v2306, %v2304
      %v2437 = vpack.c.b16 %v2307, %v2305
      %v2438 = vpack.c.b16 %v2310, %v2308
      %v2439 = vpack.c.b16 %v2311, %v2309
      %v2440 = vpack.c.b16 %v2314, %v2312
      %v2441 = vpack.c.b16 %v2315, %v2313
      %v2442 = vpack.c.b16 %v2318, %v2316
      %v2443 = vpack.c.b16 %v2319, %v2317
      %v2444 = vpack.c.b16 %v2322, %v2320
      %v2445 = vpack.c.b16 %v2323, %v2321
      %v2446 = vpack.c.b16 %v2326, %v2324
      %v2447 = vpack.c.b16 %v2327, %v2325
      %v2448 = vpack.c.b16 %v2330, %v2328
      %v2449 = vpack.c.b16 %v2331, %v2329
      %v2450 = vpack.c.b16 %v2334, %v2332
      %v2451 = vpack.c.b16 %v2335, %v2333
      %v2452 = vpack.c.b16 %v2338, %v2336
      %v2453 = vpack.c.b16 %v2339, %v2337
      %v2454 = vpack.c.b16 %v2342, %v2340
      %v2455 = vpack.c.b16 %v2343, %v2341
      %v2456 = vpack.c.b16 %v2346, %v2344
      %v2457 = vpack.c.b16 %v2347, %v2345
      %v2458 = vpack.c.b16 %v2350, %v2348
      %v2459 = vpack.c.b16 %v2351, %v2349
      %v2460 = vpack.c.b16 %v2354, %v2352
      %v2461 = vpack.c.b16 %v2355, %v2353
      %v2462 = vpack.c.b16 %v2358, %v2356
      %v2463 = vpack.c.b16 %v2359, %v2357
      %v2464 = vpack.c.b16 %v2362, %v2360
      %v2465 = vpack.c.b16 %v2363, %v2361
      %v2466 = vpack.c.b16 %v2366, %v2364
      %v2467 = vpack.c.b16 %v2367, %v2365
      %v2468 = vpack.c.b16 %v2370, %v2368
      %v2469 = vpack.c.b16 %v2371, %v2369
      %v2470 = vpack.c.b16 %v2374, %v2372
      %v2471 = vpack.c.b16 %v2375, %v2373
      %2568 = vmatprep.subr.bf16.mxu0 %v2391
      %2569 = vmatpush1.bf16.msra.mxu0 %v2390
      %2570 = vmatprep.subr.bf16.mxu0 %v2389
      %2571 = vmatpush1.bf16.msra.mxu0 %v2388
      %2572 = vmatprep.subr.bf16.mxu0 %v2387
      %2573 = vmatpush1.bf16.msra.mxu0 %v2386
      %2574 = vmatprep.subr.bf16.mxu0 %v2385
      %2575 = vmatpush1.bf16.msra.mxu0 %v2384
      %2576 = vmatprep.subr.bf16.mxu0 %v2383
      %2577 = vmatpush1.bf16.msra.mxu0 %v2382
      %2578 = vmatprep.subr.bf16.mxu0 %v2381
      %2579 = vmatpush1.bf16.msra.mxu0 %v2380
      %2580 = vmatprep.subr.bf16.mxu0 %v2379
      %2581 = vmatpush1.bf16.msra.mxu0 %v2378
      %2582 = vmatprep.subr.bf16.mxu0 %v2377
      %2583 = vmatpush1.bf16.msra.mxu0 %v2376
      %2584 = vmatprep.subr.bf16.mxu0 %v2407
      %2585 = vmatpush2.bf16.msra.mxu0 %v2406
      %2586 = vmatprep.subr.bf16.mxu0 %v2405
      %2587 = vmatpush2.bf16.msra.mxu0 %v2404
      %2588 = vmatprep.subr.bf16.mxu0 %v2403
      %2589 = vmatpush2.bf16.msra.mxu0 %v2402
      %2590 = vmatprep.subr.bf16.mxu0 %v2401
      %2591 = vmatpush2.bf16.msra.mxu0 %v2400
      %2592 = vmatprep.subr.bf16.mxu0 %v2399
      %2593 = vmatpush2.bf16.msra.mxu0 %v2398
      %2594 = vmatprep.subr.bf16.mxu0 %v2397
      %2595 = vmatpush2.bf16.msra.mxu0 %v2396
      %2596 = vmatprep.subr.bf16.mxu0 %v2395
      %2597 = vmatpush2.bf16.msra.mxu0 %v2394
      %2598 = vmatprep.subr.bf16.mxu0 %v2393
      %2599 = vmatpush2.bf16.msra.mxu0 %v2392
      %2600 = vmatprep.mubr.bf16.mxu0 %v1968
      %2601 = vmatmul.mubr.bf16.gmra.mxu0 %v1967
      %v2602 = vpop.f32.mrf.mxu0
      %v2603 = vadd.f32 0.0, %v2602
      %v2604 = vpop.f32.mrf.mxu0
      %v2605 = vadd.f32 0.0, %v2604
      %v2606 = vpop.f32.mrf.mxu0
      %v2607 = vadd.f32 0.0, %v2606
      %v2608 = vpop.f32.mrf.mxu0
      %v2609 = vadd.f32 0.0, %v2608
      %2610 = vmatprep.mubr.bf16.mxu0 %v1974
      %2611 = vmatmul.mubr.bf16.gmra.mxu0 %v1973
      %v2612 = vpop.f32.mrf.mxu0
      %v2613 = vadd.f32 0.0, %v2612
      %v2614 = vpop.f32.mrf.mxu0
      %v2615 = vadd.f32 0.0, %v2614
      %v2616 = vpop.f32.mrf.mxu0
      %v2617 = vadd.f32 0.0, %v2616
      %v2618 = vpop.f32.mrf.mxu0
      %v2619 = vadd.f32 0.0, %v2618
      %2620 = vmatprep.mubr.bf16.mxu0 %v1980
      %2621 = vmatmul.mubr.bf16.gmra.mxu0 %v1979
      %v2622 = vpop.f32.mrf.mxu0
      %v2623 = vadd.f32 0.0, %v2622
      %v2624 = vpop.f32.mrf.mxu0
      %v2625 = vadd.f32 0.0, %v2624
      %v2626 = vpop.f32.mrf.mxu0
      %v2627 = vadd.f32 0.0, %v2626
      %v2628 = vpop.f32.mrf.mxu0
      %v2629 = vadd.f32 0.0, %v2628
      %2630 = vmatprep.mubr.bf16.mxu0 %v1986
      %2631 = vmatmul.mubr.bf16.gmra.mxu0 %v1985
      %v2632 = vpop.f32.mrf.mxu0
      %v2633 = vadd.f32 0.0, %v2632
      %v2634 = vpop.f32.mrf.mxu0
      %v2635 = vadd.f32 0.0, %v2634
      %v2636 = vpop.f32.mrf.mxu0
      %v2637 = vadd.f32 0.0, %v2636
      %v2638 = vpop.f32.mrf.mxu0
      %v2639 = vadd.f32 0.0, %v2638
      %2640 = vdwg.mxu0
      %2641 = vmatprep.subr.bf16.mxu0 %v2423
      %2642 = vmatpush1.bf16.msra.mxu0 %v2422
      %2643 = vmatprep.subr.bf16.mxu0 %v2421
      %2644 = vmatpush1.bf16.msra.mxu0 %v2420
      %2645 = vmatprep.subr.bf16.mxu0 %v2419
      %2646 = vmatpush1.bf16.msra.mxu0 %v2418
      %2647 = vmatprep.subr.bf16.mxu0 %v2417
      %2648 = vmatpush1.bf16.msra.mxu0 %v2416
      %2649 = vmatprep.subr.bf16.mxu0 %v2415
      %2650 = vmatpush1.bf16.msra.mxu0 %v2414
      %2651 = vmatprep.subr.bf16.mxu0 %v2413
      %2652 = vmatpush1.bf16.msra.mxu0 %v2412
      %2653 = vmatprep.subr.bf16.mxu0 %v2411
      %2654 = vmatpush1.bf16.msra.mxu0 %v2410
      %2655 = vmatprep.subr.bf16.mxu0 %v2409
      %2656 = vmatpush1.bf16.msra.mxu0 %v2408
      %2657 = vmatprep.subr.bf16.mxu0 %v2439
      %2658 = vmatpush2.bf16.msra.mxu0 %v2438
      %2659 = vmatprep.subr.bf16.mxu0 %v2437
      %2660 = vmatpush2.bf16.msra.mxu0 %v2436
      %2661 = vmatprep.subr.bf16.mxu0 %v2435
      %2662 = vmatpush2.bf16.msra.mxu0 %v2434
      %2663 = vmatprep.subr.bf16.mxu0 %v2433
      %2664 = vmatpush2.bf16.msra.mxu0 %v2432
      %2665 = vmatprep.subr.bf16.mxu0 %v2431
      %2666 = vmatpush2.bf16.msra.mxu0 %v2430
      %2667 = vmatprep.subr.bf16.mxu0 %v2429
      %2668 = vmatpush2.bf16.msra.mxu0 %v2428
      %2669 = vmatprep.subr.bf16.mxu0 %v2427
      %2670 = vmatpush2.bf16.msra.mxu0 %v2426
      %2671 = vmatprep.subr.bf16.mxu0 %v2425
      %2672 = vmatpush2.bf16.msra.mxu0 %v2424
      %2673 = vmatprep.mubr.bf16.mxu0 %v1970
      %2674 = vmatmul.mubr.bf16.gmra.mxu0 %v1969
      %v2675 = vpop.f32.mrf.mxu0
      %v2676 = vadd.f32 %v2603, %v2675
      %v2677 = vpop.f32.mrf.mxu0
      %v2678 = vadd.f32 %v2605, %v2677
      %v2679 = vpop.f32.mrf.mxu0
      %v2680 = vadd.f32 %v2607, %v2679
      %v2681 = vpop.f32.mrf.mxu0
      %v2682 = vadd.f32 %v2609, %v2681
      %2683 = vmatprep.mubr.bf16.mxu0 %v1976
      %2684 = vmatmul.mubr.bf16.gmra.mxu0 %v1975
      %v2685 = vpop.f32.mrf.mxu0
      %v2686 = vadd.f32 %v2613, %v2685
      %v2687 = vpop.f32.mrf.mxu0
      %v2688 = vadd.f32 %v2615, %v2687
      %v2689 = vpop.f32.mrf.mxu0
      %v2690 = vadd.f32 %v2617, %v2689
      %v2691 = vpop.f32.mrf.mxu0
      %v2692 = vadd.f32 %v2619, %v2691
      %2693 = vmatprep.mubr.bf16.mxu0 %v1982
      %2694 = vmatmul.mubr.bf16.gmra.mxu0 %v1981
      %v2695 = vpop.f32.mrf.mxu0
      %v2696 = vadd.f32 %v2623, %v2695
      %v2697 = vpop.f32.mrf.mxu0
      %v2698 = vadd.f32 %v2625, %v2697
      %v2699 = vpop.f32.mrf.mxu0
      %v2700 = vadd.f32 %v2627, %v2699
      %v2701 = vpop.f32.mrf.mxu0
      %v2702 = vadd.f32 %v2629, %v2701
      %2703 = vmatprep.mubr.bf16.mxu0 %v1988
      %2704 = vmatmul.mubr.bf16.gmra.mxu0 %v1987
      %v2705 = vpop.f32.mrf.mxu0
      %v2706 = vadd.f32 %v2633, %v2705
      %v2707 = vpop.f32.mrf.mxu0
      %v2708 = vadd.f32 %v2635, %v2707
      %v2709 = vpop.f32.mrf.mxu0
      %v2710 = vadd.f32 %v2637, %v2709
      %v2711 = vpop.f32.mrf.mxu0
      %v2712 = vadd.f32 %v2639, %v2711
      %2713 = vdwg.mxu0
      %2714 = vmatprep.subr.bf16.mxu0 %v2455
      %2715 = vmatpush1.bf16.msra.mxu0 %v2454
      %2716 = vmatprep.subr.bf16.mxu0 %v2453
      %2717 = vmatpush1.bf16.msra.mxu0 %v2452
      %2718 = vmatprep.subr.bf16.mxu0 %v2451
      %2719 = vmatpush1.bf16.msra.mxu0 %v2450
      %2720 = vmatprep.subr.bf16.mxu0 %v2449
      %2721 = vmatpush1.bf16.msra.mxu0 %v2448
      %2722 = vmatprep.subr.bf16.mxu0 %v2447
      %2723 = vmatpush1.bf16.msra.mxu0 %v2446
      %2724 = vmatprep.subr.bf16.mxu0 %v2445
      %2725 = vmatpush1.bf16.msra.mxu0 %v2444
      %2726 = vmatprep.subr.bf16.mxu0 %v2443
      %2727 = vmatpush1.bf16.msra.mxu0 %v2442
      %2728 = vmatprep.subr.bf16.mxu0 %v2441
      %2729 = vmatpush1.bf16.msra.mxu0 %v2440
      %2730 = vmatprep.subr.bf16.mxu0 %v2471
      %2731 = vmatpush2.bf16.msra.mxu0 %v2470
      %2732 = vmatprep.subr.bf16.mxu0 %v2469
      %2733 = vmatpush2.bf16.msra.mxu0 %v2468
      %2734 = vmatprep.subr.bf16.mxu0 %v2467
      %2735 = vmatpush2.bf16.msra.mxu0 %v2466
      %2736 = vmatprep.subr.bf16.mxu0 %v2465
      %2737 = vmatpush2.bf16.msra.mxu0 %v2464
      %2738 = vmatprep.subr.bf16.mxu0 %v2463
      %2739 = vmatpush2.bf16.msra.mxu0 %v2462
      %2740 = vmatprep.subr.bf16.mxu0 %v2461
      %2741 = vmatpush2.bf16.msra.mxu0 %v2460
      %2742 = vmatprep.subr.bf16.mxu0 %v2459
      %2743 = vmatpush2.bf16.msra.mxu0 %v2458
      %2744 = vmatprep.subr.bf16.mxu0 %v2457
      %2745 = vmatpush2.bf16.msra.mxu0 %v2456
      %2746 = vmatprep.mubr.bf16.mxu0 %v1972
      %2747 = vmatmul.mubr.bf16.gmra.mxu0 %v1971
      %v2748 = vpop.f32.mrf.mxu0
      %v2749 = vadd.f32 %v2676, %v2748
      %v2750 = vpop.f32.mrf.mxu0
      %v2751 = vadd.f32 %v2678, %v2750
      %v2752 = vpop.f32.mrf.mxu0
      %v2753 = vadd.f32 %v2680, %v2752
      %v2754 = vpop.f32.mrf.mxu0
      %v2755 = vadd.f32 %v2682, %v2754
      %2756 = vmatprep.mubr.bf16.mxu0 %v1978
      %2757 = vmatmul.mubr.bf16.gmra.mxu0 %v1977
      %v2758 = vpop.f32.mrf.mxu0
      %v2759 = vadd.f32 %v2686, %v2758
      %v2760 = vpop.f32.mrf.mxu0
      %v2761 = vadd.f32 %v2688, %v2760
      %v2762 = vpop.f32.mrf.mxu0
      %v2763 = vadd.f32 %v2690, %v2762
      %v2764 = vpop.f32.mrf.mxu0
      %v2765 = vadd.f32 %v2692, %v2764
      %2766 = vmatprep.mubr.bf16.mxu0 %v1984
      %2767 = vmatmul.mubr.bf16.gmra.mxu0 %v1983
      %v2768 = vpop.f32.mrf.mxu0
      %v2769 = vadd.f32 %v2696, %v2768
      %v2770 = vpop.f32.mrf.mxu0
      %v2771 = vadd.f32 %v2698, %v2770
      %v2772 = vpop.f32.mrf.mxu0
      %v2773 = vadd.f32 %v2700, %v2772
      %v2774 = vpop.f32.mrf.mxu0
      %v2775 = vadd.f32 %v2702, %v2774
      %2776 = vmatprep.mubr.bf16.mxu0 %v1990
      %2777 = vmatmul.mubr.bf16.gmra.mxu0 %v1989
      %v2778 = vpop.f32.mrf.mxu0
      %v2779 = vadd.f32 %v2706, %v2778
      %v2780 = vpop.f32.mrf.mxu0
      %v2781 = vadd.f32 %v2708, %v2780
      %v2782 = vpop.f32.mrf.mxu0
      %v2783 = vadd.f32 %v2710, %v2782
      %v2784 = vpop.f32.mrf.mxu0
      %v2785 = vadd.f32 %v2712, %v2784
      %2786 = vdwg.mxu0
      %v2787 = vadd.f32 %v1881, %v2749
      %v2788 = vadd.f32 %v1883, %v2751
      %v2789 = vadd.f32 %v1885, %v2753
      %v2790 = vadd.f32 %v1887, %v2755
      %v2791 = vadd.f32 %v1891, %v2759
      %v2792 = vadd.f32 %v1893, %v2761
      %v2793 = vadd.f32 %v1895, %v2763
      %v2794 = vadd.f32 %v1897, %v2765
      %v2795 = vadd.f32 %v1901, %v2769
      %v2796 = vadd.f32 %v1903, %v2771
      %v2797 = vadd.f32 %v1905, %v2773
      %v2798 = vadd.f32 %v1907, %v2775
      %v2799 = vadd.f32 %v1911, %v2779
      %v2800 = vadd.f32 %v1913, %v2781
      %v2801 = vadd.f32 %v1915, %v2783
      %v2802 = vadd.f32 %v1917, %v2785
      %v2803 = vld [vmem:[%s2] ss:$2 sm:$0x3]
      %v2805 = vlaneseq
      %v2806 = vshrl.u32 %v2805, 7
      %v2807 = vsub.s32 0, %v2806
      %v2808 = vrot.slane %v2803, %v2807
      %v2809 = vlaneseq
      %v2810 = vshrl.u32 %v2809, 7
      %v2811 = vsub.s32 1, %v2810
      %v2812 = vrot.slane %v2803, %v2811
      %v2815 = vmul.f32 %v2787, %v2808
      %v2816 = vmul.f32 %v2788, %v2812
      %v2817 = vmul.f32 %v2789, %v2808
      %v2818 = vmul.f32 %v2790, %v2812
      %v2819 = vmul.f32 %v2791, %v2808
      %v2820 = vmul.f32 %v2792, %v2812
      %v2821 = vmul.f32 %v2793, %v2808
      %v2822 = vmul.f32 %v2794, %v2812
      %v2823 = vmul.f32 %v2795, %v2808
      %v2824 = vmul.f32 %v2796, %v2812
      %v2825 = vmul.f32 %v2797, %v2808
      %v2826 = vmul.f32 %v2798, %v2812
      %v2827 = vmul.f32 %v2799, %v2808
      %v2828 = vmul.f32 %v2800, %v2812
      %v2829 = vmul.f32 %v2801, %v2808
      %v2830 = vmul.f32 %v2802, %v2812
      %s2831 = scalar_lea.vmem %s2, 1
      %v2832 = vld [vmem:[%s2831] ss:$2 sm:$0x3]
      %v2834 = vlaneseq
      %v2835 = vshrl.u32 %v2834, 7
      %v2836 = vsub.s32 0, %v2835
      %v2837 = vrot.slane %v2832, %v2836
      %v2838 = vlaneseq
      %v2839 = vshrl.u32 %v2838, 7
      %v2840 = vsub.s32 1, %v2839
      %v2841 = vrot.slane %v2832, %v2840
      %v2844 = vadd.f32 %v2815, %v2837
      %v2845 = vadd.f32 %v2816, %v2841
      %v2846 = vadd.f32 %v2817, %v2837
      %v2847 = vadd.f32 %v2818, %v2841
      %v2848 = vadd.f32 %v2819, %v2837
      %v2849 = vadd.f32 %v2820, %v2841
      %v2850 = vadd.f32 %v2821, %v2837
      %v2851 = vadd.f32 %v2822, %v2841
      %v2852 = vadd.f32 %v2823, %v2837
      %v2853 = vadd.f32 %v2824, %v2841
      %v2854 = vadd.f32 %v2825, %v2837
      %v2855 = vadd.f32 %v2826, %v2841
      %v2856 = vadd.f32 %v2827, %v2837
      %v2857 = vadd.f32 %v2828, %v2841
      %v2858 = vadd.f32 %v2829, %v2837
      %v2859 = vadd.f32 %v2830, %v2841
      %v2860 = vmax.f32 %v2844, 0.0
      %v2861 = vmax.f32 %v2845, 0.0
      %v2862 = vmax.f32 %v2846, 0.0
      %v2863 = vmax.f32 %v2847, 0.0
      %v2864 = vmax.f32 %v2848, 0.0
      %v2865 = vmax.f32 %v2849, 0.0
      %v2866 = vmax.f32 %v2850, 0.0
      %v2867 = vmax.f32 %v2851, 0.0
      %v2868 = vmax.f32 %v2852, 0.0
      %v2869 = vmax.f32 %v2853, 0.0
      %v2870 = vmax.f32 %v2854, 0.0
      %v2871 = vmax.f32 %v2855, 0.0
      %v2872 = vmax.f32 %v2856, 0.0
      %v2873 = vmax.f32 %v2857, 0.0
      %v2874 = vmax.f32 %v2858, 0.0
      %v2875 = vmax.f32 %v2859, 0.0
      %v2876 = vpack.c.bf16 %v2862, %v2860
      %v2877 = vpack.c.bf16 %v2863, %v2861
      %v2878 = vpack.c.bf16 %v2866, %v2864
      %v2879 = vpack.c.bf16 %v2867, %v2865
      %v2880 = vpack.c.bf16 %v2870, %v2868
      %v2881 = vpack.c.bf16 %v2871, %v2869
      %v2882 = vpack.c.bf16 %v2874, %v2872
      %v2883 = vpack.c.bf16 %v2875, %v2873
      %v2884 = vld [vmem:[%s3] sm:$0xf]
      %v2885 = vld [vmem:[%s3 + $0x4] sm:$0xf]
      %v2886 = vld [vmem:[%s3 + $0x8] sm:$0xf]
      %v2887 = vld [vmem:[%s3 + $0xc] sm:$0xf]
      %v2888 = vld [vmem:[%s3 + $0x10] sm:$0xf]
      %v2889 = vld [vmem:[%s3 + $0x14] sm:$0xf]
      %v2890 = vld [vmem:[%s3 + $0x18] sm:$0xf]
      %v2891 = vld [vmem:[%s3 + $0x1c] sm:$0xf]
      %v2892 = vld [vmem:[%s3 + $0x20] sm:$0xf]
      %v2893 = vld [vmem:[%s3 + $0x24] sm:$0xf]
      %v2894 = vld [vmem:[%s3 + $0x28] sm:$0xf]
      %v2895 = vld [vmem:[%s3 + $0x2c] sm:$0xf]
      %v2896 = vld [vmem:[%s3 + $0x30] sm:$0xf]
      %v2897 = vld [vmem:[%s3 + $0x34] sm:$0xf]
      %v2898 = vld [vmem:[%s3 + $0x38] sm:$0xf]
      %v2899 = vld [vmem:[%s3 + $0x3c] sm:$0xf]
      %v2900 = vld [vmem:[%s3 + $0x40] sm:$0xf]
      %v2901 = vld [vmem:[%s3 + $0x44] sm:$0xf]
      %v2902 = vld [vmem:[%s3 + $0x48] sm:$0xf]
      %v2903 = vld [vmem:[%s3 + $0x4c] sm:$0xf]
      %v2904 = vld [vmem:[%s3 + $0x50] sm:$0xf]
      %v2905 = vld [vmem:[%s3 + $0x54] sm:$0xf]
      %v2906 = vld [vmem:[%s3 + $0x58] sm:$0xf]
      %v2907 = vld [vmem:[%s3 + $0x5c] sm:$0xf]
      %v2908 = vld [vmem:[%s3 + $0x60] sm:$0xf]
      %v2909 = vld [vmem:[%s3 + $0x64] sm:$0xf]
      %v2910 = vld [vmem:[%s3 + $0x68] sm:$0xf]
      %v2911 = vld [vmem:[%s3 + $0x6c] sm:$0xf]
      %v2912 = vld [vmem:[%s3 + $0x70] sm:$0xf]
      %v2913 = vld [vmem:[%s3 + $0x74] sm:$0xf]
      %v2914 = vld [vmem:[%s3 + $0x78] sm:$0xf]
      %v2915 = vld [vmem:[%s3 + $0x7c] sm:$0xf]
      %v2916 = vld [vmem:[%s4] sm:$0x1]
      %v2918 = vlaneseq
      %v2919 = vshrl.u32 %v2918, 7
      %v2920 = vsub.s32 0, %v2919
      %v2921 = vrot.slane %v2916, %v2920
      %v2955 = vunpack.c.l.b16 %v2884
      %v2956 = vunpack.c.l.b16 %v2885
      %v2957 = vunpack.c.l.b16 %v2886
      %v2958 = vunpack.c.l.b16 %v2887
      %v2959 = vunpack.c.l.b16 %v2888
      %v2960 = vunpack.c.l.b16 %v2889
      %v2961 = vunpack.c.l.b16 %v2890
      %v2962 = vunpack.c.l.b16 %v2891
      %v2963 = vunpack.c.l.b16 %v2892
      %v2964 = vunpack.c.l.b16 %v2893
      %v2965 = vunpack.c.l.b16 %v2894
      %v2966 = vunpack.c.l.b16 %v2895
      %v2967 = vunpack.c.l.b16 %v2896
      %v2968 = vunpack.c.l.b16 %v2897
      %v2969 = vunpack.c.l.b16 %v2898
      %v2970 = vunpack.c.l.b16 %v2899
      %v2971 = vunpack.c.l.b16 %v2900
      %v2972 = vunpack.c.l.b16 %v2901
      %v2973 = vunpack.c.l.b16 %v2902
      %v2974 = vunpack.c.l.b16 %v2903
      %v2975 = vunpack.c.l.b16 %v2904
      %v2976 = vunpack.c.l.b16 %v2905
      %v2977 = vunpack.c.l.b16 %v2906
      %v2978 = vunpack.c.l.b16 %v2907
      %v2979 = vunpack.c.l.b16 %v2908
      %v2980 = vunpack.c.l.b16 %v2909
      %v2981 = vunpack.c.l.b16 %v2910
      %v2982 = vunpack.c.l.b16 %v2911
      %v2983 = vunpack.c.l.b16 %v2912
      %v2984 = vunpack.c.l.b16 %v2913
      %v2985 = vunpack.c.l.b16 %v2914
      %v2986 = vunpack.c.l.b16 %v2915
      %v2987 = vpack.c.b16 %v2956, %v2955
      %v2988 = vpack.c.b16 %v2958, %v2957
      %v2989 = vpack.c.b16 %v2960, %v2959
      %v2990 = vpack.c.b16 %v2962, %v2961
      %v2991 = vpack.c.b16 %v2964, %v2963
      %v2992 = vpack.c.b16 %v2966, %v2965
      %v2993 = vpack.c.b16 %v2968, %v2967
      %v2994 = vpack.c.b16 %v2970, %v2969
      %v2995 = vpack.c.b16 %v2972, %v2971
      %v2996 = vpack.c.b16 %v2974, %v2973
      %v2997 = vpack.c.b16 %v2976, %v2975
      %v2998 = vpack.c.b16 %v2978, %v2977
      %v2999 = vpack.c.b16 %v2980, %v2979
      %v3000 = vpack.c.b16 %v2982, %v2981
      %v3001 = vpack.c.b16 %v2984, %v2983
      %v3002 = vpack.c.b16 %v2986, %v2985
      %3019 = vmatprep.subr.bf16.mxu0 0
      %3020 = vmatpush1.bf16.msra.mxu0 %v2994
      %3021 = vmatprep.subr.bf16.mxu0 0
      %3022 = vmatpush1.bf16.msra.mxu0 %v2993
      %3023 = vmatprep.subr.bf16.mxu0 0
      %3024 = vmatpush1.bf16.msra.mxu0 %v2992
      %3025 = vmatprep.subr.bf16.mxu0 0
      %3026 = vmatpush1.bf16.msra.mxu0 %v2991
      %3027 = vmatprep.subr.bf16.mxu0 0
      %3028 = vmatpush1.bf16.msra.mxu0 %v2990
      %3029 = vmatprep.subr.bf16.mxu0 0
      %3030 = vmatpush1.bf16.msra.mxu0 %v2989
      %3031 = vmatprep.subr.bf16.mxu0 0
      %3032 = vmatpush1.bf16.msra.mxu0 %v2988
      %3033 = vmatprep.subr.bf16.mxu0 0
      %3034 = vmatpush1.bf16.msra.mxu0 %v2987
      %3035 = vmatprep.subr.bf16.mxu0 0
      %3036 = vmatpush2.bf16.msra.mxu0 %v3002
      %3037 = vmatprep.subr.bf16.mxu0 0
      %3038 = vmatpush2.bf16.msra.mxu0 %v3001
      %3039 = vmatprep.subr.bf16.mxu0 0
      %3040 = vmatpush2.bf16.msra.mxu0 %v3000
      %3041 = vmatprep.subr.bf16.mxu0 0
      %3042 = vmatpush2.bf16.msra.mxu0 %v2999
      %3043 = vmatprep.subr.bf16.mxu0 0
      %3044 = vmatpush2.bf16.msra.mxu0 %v2998
      %3045 = vmatprep.subr.bf16.mxu0 0
      %3046 = vmatpush2.bf16.msra.mxu0 %v2997
      %3047 = vmatprep.subr.bf16.mxu0 0
      %3048 = vmatpush2.bf16.msra.mxu0 %v2996
      %3049 = vmatprep.subr.bf16.mxu0 0
      %3050 = vmatpush2.bf16.msra.mxu0 %v2995
      %3051 = vmatprep.mubr.bf16.mxu0 %v2877
      %3052 = vmatmul.mubr.bf16.gmra.mxu0 %v2876
      %v3053 = vpop.f32.mrf.mxu0
      %v3054 = vadd.f32 %v2921, %v3053
      %v3055 = vpop.f32.mrf.mxu0
      %v3056 = vpop.f32.mrf.mxu0
      %v3057 = vadd.f32 %v2921, %v3056
      %v3058 = vpop.f32.mrf.mxu0
      %3059 = vmatprep.mubr.bf16.mxu0 %v2879
      %3060 = vmatmul.mubr.bf16.gmra.mxu0 %v2878
      %v3061 = vpop.f32.mrf.mxu0
      %v3062 = vadd.f32 %v2921, %v3061
      %v3063 = vpop.f32.mrf.mxu0
      %v3064 = vpop.f32.mrf.mxu0
      %v3065 = vadd.f32 %v2921, %v3064
      %v3066 = vpop.f32.mrf.mxu0
      %3067 = vmatprep.mubr.bf16.mxu0 %v2881
      %3068 = vmatmul.mubr.bf16.gmra.mxu0 %v2880
      %v3069 = vpop.f32.mrf.mxu0
      %v3070 = vadd.f32 %v2921, %v3069
      %v3071 = vpop.f32.mrf.mxu0
      %v3072 = vpop.f32.mrf.mxu0
      %v3073 = vadd.f32 %v2921, %v3072
      %v3074 = vpop.f32.mrf.mxu0
      %3075 = vmatprep.mubr.bf16.mxu0 %v2883
      %3076 = vmatmul.mubr.bf16.gmra.mxu0 %v2882
      %v3077 = vpop.f32.mrf.mxu0
      %v3078 = vadd.f32 %v2921, %v3077
      %v3079 = vpop.f32.mrf.mxu0
      %v3080 = vpop.f32.mrf.mxu0
      %v3081 = vadd.f32 %v2921, %v3080
      %v3082 = vpop.f32.mrf.mxu0
      %3083 = vdwg.mxu0
      %3084 = vst [vmem:[%s224] sm:$0xff] %v3054
      %3085 = vst [vmem:[%s224 + $0x8] sm:$0xff] %v3057
      %3086 = vst [vmem:[%s224 + $0x10] sm:$0xff] %v3062
      %3087 = vst [vmem:[%s224 + $0x18] sm:$0xff] %v3065
      %3088 = vst [vmem:[%s224 + $0x20] sm:$0xff] %v3070
      %3089 = vst [vmem:[%s224 + $0x28] sm:$0xff] %v3073
      %3090 = vst [vmem:[%s224 + $0x30] sm:$0xff] %v3078
      %3091 = vst [vmem:[%s224 + $0x38] sm:$0xff] %v3081
      %p3092 = scmp.lt.s32.totalorder %s16, 1
      %s3093 = scalar_select %p3092, %s16, 1
      %s3094 = smul.addr %s3093, 8
      %s3095 = smul.addr %s3094, 8
      %s3096 = scalar_lea.vmem %s5, %s3095
      // Predicated region
      $region41: #{decoder_forward.5} parent=39 // pred_check
        %p3097 = pneg %p144
      $region42: #{decoder_forward.5} parent=39 // pred_check_branch
        %3099 = sbr.rel (%p3097) target = $region44
      $region43: #{decoder_forward.5} parent=39 // pred_region
        _
      $region44: #{decoder_forward.5} parent=39 // pred_fallthru
        _
    $region40: #{decoder_forward.5} parent=5 // pred_fallthru
      _
    %p3100 = scmp.le.s32.totalorder 2, %s11
    // Predicated region
    $region45: #{decoder_forward.5} parent=5 // pred_check
      %p3101 = pneg %p3100
    $region46: #{decoder_forward.5} parent=5 // pred_check_branch
      %3103 = sbr.rel (%p3101) target = $region48
    $region47: #{decoder_forward.5} parent=5 // pred_region
      %s3104 = ssub.s32 %s11, 2
      // Predicated region
      $region49: #{decoder_forward.5} parent=47 // pred_check
        %p3105 = pneg %p150
      $region50: #{decoder_forward.5} parent=47 // pred_check_branch
        %3107 = sbr.rel (%p3105) target = $region52
      $region51: #{decoder_forward.5} parent=47 // pred_region
        %p3108 = scmp.lt.s32.totalorder %s17, 1
        %s3109 = scalar_select %p3108, %s17, 1
        %s3110 = smul.addr %s3109, 8
        %s3111 = smul.addr %s3110, 8
        %s3112 = scalar_lea.vmem %s5, %s3111
      $region52: #{decoder_forward.5} parent=47 // pred_fallthru
        _
    $region48: #{decoder_forward.5} parent=5 // pred_fallthru
      _
  $region6: #{decoder_forward.5} parent=0 // loop_footer
    %s15 = sadd.s32 1, %s11
  $region7: #{decoder_forward.5} parent=0 // loop_footer_branch
    %10 = sbr.rel target = $region3
  $region8: #{decoder_forward.5} parent=0 // loop_exit
    _

// kernel: decoder_forward.4
$region0: #{decoder_forward.4}
  #allocation0 [shape = 'u32[]', space=smem, size = 0x4, offset = 0x4, fixed_abs, tag = 'smem constant byte address 0x4 - core index']
  #allocation1 [shape = 'u32[144,128]{1,0:T(1,128)}', space=vmem, size = 0x12000, scoped, tag = 'internal scratch']
  %s0 = inlined_call_operand.vmem [shape: f32[2,80,912], index: 0, kind: input, shape index: {}]
  %s1 = inlined_call_operand.vmem [shape: bf16[3,912,256], index: 1, kind: input, shape index: {}]
  %s2 = inlined_call_operand.vmem [shape: f32[2,256], index: 2, kind: input, shape index: {}]
  %s3 = inlined_call_operand.vmem [shape: f32[2,64,256], index: 3, kind: output, shape index: {}]
  %s4 = sld [smem:[#allocation0]]
  $region45: #{decoder_forward.4} parent=0
    _
  %s6 = ssub.s32 1, %s4
  %s7 = scalar_select 0, %s6, %s4
  loop: start=0, step=1, limit=4
  $region2: #{decoder_forward.4} parent=0 // loop_pre_header
    _
  $region3: #{decoder_forward.4} parent=0 // loop_header
    %s9 = sphi 0, %s13
    %p10 = scmp.ge.s32.totalorder %s9, 4
    %s19 = sphi 0, %s21
    %s22 = sphi 0, %s19
    %s23 = sphi 0, %s22
    %s39 = sphi 0, %s23
    %s43 = sphi 0, %s43
    %s45 = sphi 0, %s43
    %s46 = sphi 0, %s45
    %s60 = sphi 0, %s46
    %s64 = sphi 0, %s64
    %s66 = sphi 0, %s64
    %s67 = sphi 0, %s66
    %s81 = sphi 0, %s67
    %s87 = sphi 0, %s89
    %s90 = sphi 0, %s87
    %s91 = sphi 0, %s90
    %s107 = sphi 0, %s91
  $region4: #{decoder_forward.4} parent=0 // loop_header_branch
    %12 = sbr.rel (%p10) target = $region8
  $region5: #{decoder_forward.4} parent=0 // loop_body
    %s14 = ssub.s32 %s9, 1
    %s15 = ssub.s32 %s9, 2
    %s16 = sadd.s32 %s9, 1
    %s17 = ssub.s32 %s9, %s16
    %p18 = scmp.eq.s32.totalorder %s17, 0
    %s20 = sadd.s32 %s19, 1
    %s21 = scalar_select %p18, %s19, %s20
    %p24 = pneg %p18
    %p25 = scmp.eq.s32.totalorder %s9, 1
    %p26 = por %p24, %p25
    %p27 = scmp.ne.s32.totalorder %s19, %s22
    %p28 = scmp.eq.s32.totalorder %s9, 0
    %p29 = por %p27, %p28
    %p30 = scmp.ne.s32.totalorder %s19, %s22
    %p31 = scmp.eq.s32.totalorder %s14, 1
    %p32 = por %p30, %p31
    %p33 = scmp.ne.s32.totalorder %s22, %s23
    %p34 = scmp.eq.s32.totalorder %s14, 0
    %p35 = por %p33, %p34
    %p36 = scmp.ne.s32.totalorder %s22, %s23
    %p37 = scmp.eq.s32.totalorder %s15, 1
    %p38 = por %p36, %p37
    %p40 = scmp.ne.s32.totalorder %s23, %s39
    %p41 = scmp.eq.s32.totalorder %s15, 0
    %p42 = por %p40, %p41
    %s44 = sadd.s32 %s43, 1
    %p47 = scmp.eq.s32.totalorder %s9, 1
    %p48 = scmp.ne.s32.totalorder %s43, %s45
    %p49 = scmp.eq.s32.totalorder %s9, 0
    %p50 = por %p48, %p49
    %p51 = scmp.ne.s32.totalorder %s43, %s45
    %p52 = scmp.eq.s32.totalorder %s14, 1
    %p53 = por %p51, %p52
    %p54 = scmp.ne.s32.totalorder %s45, %s46
    %p55 = scmp.eq.s32.totalorder %s14, 0
    %p56 = por %p54, %p55
    %p57 = scmp.ne.s32.totalorder %s45, %s46
    %p58 = scmp.eq.s32.totalorder %s15, 1
    %p59 = por %p57, %p58
    %p61 = scmp.ne.s32.totalorder %s46, %s60
    %p62 = scmp.eq.s32.totalorder %s15, 0
    %p63 = por %p61, %p62
    %s65 = sadd.s32 %s64, 1
    %p68 = scmp.eq.s32.totalorder %s9, 1
    %p69 = scmp.ne.s32.totalorder %s64, %s66
    %p70 = scmp.eq.s32.totalorder %s9, 0
    %p71 = por %p69, %p70
    %p72 = scmp.ne.s32.totalorder %s64, %s66
    %p73 = scmp.eq.s32.totalorder %s14, 1
    %p74 = por %p72, %p73
    %p75 = scmp.ne.s32.totalorder %s66, %s67
    %p76 = scmp.eq.s32.totalorder %s14, 0
    %p77 = por %p75, %p76
    %p78 = scmp.ne.s32.totalorder %s66, %s67
    %p79 = scmp.eq.s32.totalorder %s15, 1
    %p80 = por %p78, %p79
    %p82 = scmp.ne.s32.totalorder %s67, %s81
    %p83 = scmp.eq.s32.totalorder %s15, 0
    %p84 = por %p82, %p83
    %s85 = ssub.s32 %s9, %s16
    %p86 = scmp.eq.s32.totalorder %s85, 0
    %s88 = sadd.s32 %s87, 1
    %s89 = scalar_select %p86, %s87, %s88
    %p92 = pneg %p86
    %p93 = scmp.eq.s32.totalorder %s9, 1
    %p94 = por %p92, %p93
    %p95 = scmp.ne.s32.totalorder %s87, %s90
    %p96 = scmp.eq.s32.totalorder %s9, 0
    %p97 = por %p95, %p96
    %p98 = scmp.ne.s32.totalorder %s87, %s90
    %p99 = scmp.eq.s32.totalorder %s14, 1
    %p100 = por %p98, %p99
    %p101 = scmp.ne.s32.totalorder %s90, %s91
    %p102 = scmp.eq.s32.totalorder %s14, 0
    %p103 = por %p101, %p102
    %p104 = scmp.ne.s32.totalorder %s90, %s91
    %p105 = scmp.eq.s32.totalorder %s15, 1
    %p106 = por %p104, %p105
    %p108 = scmp.ne.s32.totalorder %s91, %s107
    %p109 = scmp.eq.s32.totalorder %s15, 0
    %p110 = por %p108, %p109
    %p111 = scmp.le.s32.totalorder 1, %s9
    %p112 = scmp.lt.s32.totalorder %s9, 3
    %p113 = pnand %p111, %p112
    %p114 = pneg %p113
    // Predicated region
    $region9: #{decoder_forward.4} parent=5 // pred_check
      _
    $region10: #{decoder_forward.4} parent=5 // pred_check_branch
      %116 = sbr.rel (%p113) target = $region12
    $region11: #{decoder_forward.4} parent=5 // pred_region
      %s117 = ssub.s32 %s9, 1
      // Predicated region
      $region13: #{decoder_forward.4} parent=11 // pred_check
        %p118 = pneg %p56
      $region14: #{decoder_forward.4} parent=11 // pred_check_branch
        %120 = sbr.rel (%p118) target = $region16
      $region15: #{decoder_forward.4} parent=11 // pred_region
        _
      $region16: #{decoder_forward.4} parent=11 // pred_fallthru
        _
      // Predicated region
      $region17: #{decoder_forward.4} parent=11 // pred_check
        %p121 = pneg %p77
      $region18: #{decoder_forward.4} parent=11 // pred_check_branch
        %123 = sbr.rel (%p121) target = $region20
      $region19: #{decoder_forward.4} parent=11 // pred_region
        _
      $region20: #{decoder_forward.4} parent=11 // pred_fallthru
        _
    $region12: #{decoder_forward.4} parent=5 // pred_fallthru
      _
    %p124 = scmp.lt.s32.totalorder %s9, 2
    // Predicated region
    $region21: #{decoder_forward.4} parent=5 // pred_check
      %p125 = pneg %p124
    $region22: #{decoder_forward.4} parent=5 // pred_check_branch
      %127 = sbr.rel (%p125) target = $region24
    $region23: #{decoder_forward.4} parent=5 // pred_region
      // Predicated region
      $region25: #{decoder_forward.4} parent=23 // pred_check
        %p128 = pneg %p29
      $region26: #{decoder_forward.4} parent=23 // pred_check_branch
        %130 = sbr.rel (%p128) target = $region28
      $region27: #{decoder_forward.4} parent=23 // pred_region
        %p131 = scmp.lt.s32.totalorder %s9, 1
        %s132 = scalar_select %p131, %s9, 1
        %s133 = smul.addr %s132, 80
        %s134 = smul.addr %s133, 8
        %s135 = scalar_lea.vmem %s0, %s134
      $region28: #{decoder_forward.4} parent=23 // pred_fallthru
        _
    $region24: #{decoder_forward.4} parent=5 // pred_fallthru
      _
    %p136 = scmp.le.s32.totalorder 1, %s9
    %p137 = scmp.lt.s32.totalorder %s9, 3
    %p138 = pnand %p136, %p137
    %p139 = pneg %p138
    // Predicated region
    $region29: #{decoder_forward.4} parent=5 // pred_check
      _
    $region30: #{decoder_forward.4} parent=5 // pred_check_branch
      %141 = sbr.rel (%p138) target = $region32
    $region31: #{decoder_forward.4} parent=5 // pred_region
      %s142 = ssub.s32 %s9, 1
      %p143 = scmp.lt.s32.totalorder %s14, 1
      %s144 = scalar_select %p143, %s14, 1
      %s145 = smul.addr %s144, 80
      %s146 = smul.addr %s145, 8
      %s147 = scalar_lea.vmem %s0, %s146
      %p148 = pneg %p35
      %p149 = pneg %p32
      %p150 = pneg %p56
      %p151 = pneg %p53
      %p152 = pneg %p77
      %p153 = pneg %p74
      %p154 = pneg %p103
      %p155 = pneg %p100
      %p156 = scmp.lt.s32.totalorder %s14, 1
      %s157 = scalar_select %p156, %s14, 1
      %s158 = smul.addr %s157, 16
      %s159 = smul.addr %s158, 8
      %s160 = scalar_lea.vmem %s3, %s159
      %p161 = scmp.lt.s32.totalorder %s14, 1
      %s162 = scalar_select %p161, %s14, 1
      %s163 = smul.addr %s162, 80
      %s164 = smul.addr %s163, 8
      %s165 = scalar_lea.vmem %s0, %s164
      %p166 = scmp.lt.s32.totalorder %s14, 1
      %s167 = scalar_select %p166, %s14, 1
      %s168 = smul.addr %s167, 16
      %s169 = smul.addr %s168, 8
      %s170 = scalar_lea.vmem %s3, %s169
      %v172 = vld [vmem:[%s165] sm:$0xff]
      %v173 = vld [vmem:[%s165 + $0x8] sm:$0xff]
      %v174 = vld [vmem:[%s165 + $0x10] sm:$0xff]
      %v175 = vld [vmem:[%s165 + $0x18] sm:$0xff]
      %v176 = vld [vmem:[%s165 + $0x20] sm:$0xff]
      %v177 = vld [vmem:[%s165 + $0x28] sm:$0xff]
      %v178 = vld [vmem:[%s165 + $0x30] sm:$0xff]
      %v179 = vld [vmem:[%s165 + $0x38] sm:$0xff]
      %v180 = vld [vmem:[%s165 + $0x40] sm:$0xff]
      %v181 = vld [vmem:[%s165 + $0x48] sm:$0xff]
      %v182 = vld [vmem:[%s165 + $0x50] sm:$0xff]
      %v183 = vld [vmem:[%s165 + $0x58] sm:$0xff]
      %v184 = vld [vmem:[%s165 + $0x60] sm:$0xff]
      %v185 = vld [vmem:[%s165 + $0x68] sm:$0xff]
      %v186 = vld [vmem:[%s165 + $0x70] sm:$0xff]
      %v187 = vld [vmem:[%s165 + $0x78] sm:$0xff]
      %v188 = vld [vmem:[%s165 + $0x80] sm:$0xff]
      %v189 = vld [vmem:[%s165 + $0x88] sm:$0xff]
      %v190 = vld [vmem:[%s165 + $0x90] sm:$0xff]
      %v191 = vld [vmem:[%s165 + $0x98] sm:$0xff]
      %v192 = vld [vmem:[%s165 + $0xa0] sm:$0xff]
      %v193 = vld [vmem:[%s165 + $0xa8] sm:$0xff]
      %v194 = vld [vmem:[%s165 + $0xb0] sm:$0xff]
      %v195 = vld [vmem:[%s165 + $0xb8] sm:$0xff]
      %v196 = vld [vmem:[%s165 + $0xc0] sm:$0xff]
      %v197 = vld [vmem:[%s165 + $0xc8] sm:$0xff]
      %v198 = vld [vmem:[%s165 + $0xd0] sm:$0xff]
      %v199 = vld [vmem:[%s165 + $0xd8] sm:$0xff]
      %v200 = vld [vmem:[%s165 + $0xe0] sm:$0xff]
      %v201 = vld [vmem:[%s165 + $0xe8] sm:$0xff]
      %v202 = vld [vmem:[%s165 + $0xf0] sm:$0xff]
      %v203 = vld [vmem:[%s165 + $0xf8] sm:$0xff]
      %v204 = vld [vmem:[%s165 + $0x100] sm:$0xff]
      %v205 = vld [vmem:[%s165 + $0x108] sm:$0xff]
      %v206 = vld [vmem:[%s165 + $0x110] sm:$0xff]
      %v207 = vld [vmem:[%s165 + $0x118] sm:$0xff]
      %v208 = vld [vmem:[%s165 + $0x120] sm:$0xff]
      %v209 = vld [vmem:[%s165 + $0x128] sm:$0xff]
      %v210 = vld [vmem:[%s165 + $0x130] sm:$0xff]
      %v211 = vld [vmem:[%s165 + $0x138] sm:$0xff]
      %v212 = vld [vmem:[%s165 + $0x140] sm:$0xff]
      %v213 = vld [vmem:[%s165 + $0x148] sm:$0xff]
      %v214 = vld [vmem:[%s165 + $0x150] sm:$0xff]
      %v215 = vld [vmem:[%s165 + $0x158] sm:$0xff]
      %v216 = vld [vmem:[%s165 + $0x160] sm:$0xff]
      %v217 = vld [vmem:[%s165 + $0x168] sm:$0xff]
      %v218 = vld [vmem:[%s165 + $0x170] sm:$0xff]
      %v219 = vld [vmem:[%s165 + $0x178] sm:$0xff]
      %v220 = vld [vmem:[%s165 + $0x180] sm:$0xff]
      %v221 = vld [vmem:[%s165 + $0x188] sm:$0xff]
      %v222 = vld [vmem:[%s165 + $0x190] sm:$0xff]
      %v223 = vld [vmem:[%s165 + $0x198] sm:$0xff]
      %v224 = vld [vmem:[%s165 + $0x1a0] sm:$0xff]
      %v225 = vld [vmem:[%s165 + $0x1a8] sm:$0xff]
      %v226 = vld [vmem:[%s165 + $0x1b0] sm:$0xff]
      %v227 = vld [vmem:[%s165 + $0x1b8] sm:$0xff]
      %v228 = vld [vmem:[%s165 + $0x1c0] sm:$0xff]
      %v229 = vld [vmem:[%s165 + $0x1c8] sm:$0xff]
      %v230 = vld [vmem:[%s165 + $0x1d0] sm:$0xff]
      %v231 = vld [vmem:[%s165 + $0x1d8] sm:$0xff]
      %v232 = vld [vmem:[%s165 + $0x1e0] sm:$0xff]
      %v233 = vld [vmem:[%s165 + $0x1e8] sm:$0xff]
      %v234 = vld [vmem:[%s165 + $0x1f0] sm:$0xff]
      %v235 = vld [vmem:[%s165 + $0x1f8] sm:$0xff]
      %v236 = vpack.c.bf16 %v180, %v172
      %v237 = vpack.c.bf16 %v181, %v173
      %v238 = vpack.c.bf16 %v182, %v174
      %v239 = vpack.c.bf16 %v183, %v175
      %v240 = vpack.c.bf16 %v184, %v176
      %v241 = vpack.c.bf16 %v185, %v177
      %v242 = vpack.c.bf16 %v186, %v178
      %v243 = vpack.c.bf16 %v187, %v179
      %v244 = vpack.c.bf16 %v196, %v188
      %v245 = vpack.c.bf16 %v197, %v189
      %v246 = vpack.c.bf16 %v198, %v190
      %v247 = vpack.c.bf16 %v199, %v191
      %v248 = vpack.c.bf16 %v200, %v192
      %v249 = vpack.c.bf16 %v201, %v193
      %v250 = vpack.c.bf16 %v202, %v194
      %v251 = vpack.c.bf16 %v203, %v195
      %v252 = vpack.c.bf16 %v212, %v204
      %v253 = vpack.c.bf16 %v213, %v205
      %v254 = vpack.c.bf16 %v214, %v206
      %v255 = vpack.c.bf16 %v215, %v207
      %v256 = vpack.c.bf16 %v216, %v208
      %v257 = vpack.c.bf16 %v217, %v209
      %v258 = vpack.c.bf16 %v218, %v210
      %v259 = vpack.c.bf16 %v219, %v211
      %v260 = vpack.c.bf16 %v228, %v220
      %v261 = vpack.c.bf16 %v229, %v221
      %v262 = vpack.c.bf16 %v230, %v222
      %v263 = vpack.c.bf16 %v231, %v223
      %v264 = vpack.c.bf16 %v232, %v224
      %v265 = vpack.c.bf16 %v233, %v225
      %v266 = vpack.c.bf16 %v234, %v226
      %v267 = vpack.c.bf16 %v235, %v227
      %v268 = vld [vmem:[%s1] sm:$0xff]
      %v269 = vld [vmem:[%s1 + $0x8] sm:$0xff]
      %v270 = vld [vmem:[%s1 + $0x10] sm:$0xff]
      %v271 = vld [vmem:[%s1 + $0x18] sm:$0xff]
      %v272 = vld [vmem:[%s1 + $0x20] sm:$0xff]
      %v273 = vld [vmem:[%s1 + $0x28] sm:$0xff]
      %v274 = vld [vmem:[%s1 + $0x30] sm:$0xff]
      %v275 = vld [vmem:[%s1 + $0x38] sm:$0xff]
      %v276 = vld [vmem:[%s1 + $0x40] sm:$0xff]
      %v277 = vld [vmem:[%s1 + $0x48] sm:$0xff]
      %v278 = vld [vmem:[%s1 + $0x50] sm:$0xff]
      %v279 = vld [vmem:[%s1 + $0x58] sm:$0xff]
      %v280 = vld [vmem:[%s1 + $0x60] sm:$0xff]
      %v281 = vld [vmem:[%s1 + $0x68] sm:$0xff]
      %v282 = vld [vmem:[%s1 + $0x70] sm:$0xff]
      %v283 = vld [vmem:[%s1 + $0x78] sm:$0xff]
      %v284 = vld [vmem:[%s1 + $0x80] sm:$0xff]
      %v285 = vld [vmem:[%s1 + $0x88] sm:$0xff]
      %v286 = vld [vmem:[%s1 + $0x90] sm:$0xff]
      %v287 = vld [vmem:[%s1 + $0x98] sm:$0xff]
      %v288 = vld [vmem:[%s1 + $0xa0] sm:$0xff]
      %v289 = vld [vmem:[%s1 + $0xa8] sm:$0xff]
      %v290 = vld [vmem:[%s1 + $0xb0] sm:$0xff]
      %v291 = vld [vmem:[%s1 + $0xb8] sm:$0xff]
      %v292 = vld [vmem:[%s1 + $0xc0] sm:$0xff]
      %v293 = vld [vmem:[%s1 + $0xc8] sm:$0xff]
      %v294 = vld [vmem:[%s1 + $0xd0] sm:$0xff]
      %v295 = vld [vmem:[%s1 + $0xd8] sm:$0xff]
      %v296 = vld [vmem:[%s1 + $0xe0] sm:$0xff]
      %v297 = vld [vmem:[%s1 + $0xe8] sm:$0xff]
      %v298 = vld [vmem:[%s1 + $0xf0] sm:$0xff]
      %v299 = vld [vmem:[%s1 + $0xf8] sm:$0xff]
      %v300 = vld [vmem:[%s1 + $0x100] sm:$0xff]
      %v301 = vld [vmem:[%s1 + $0x108] sm:$0xff]
      %v302 = vld [vmem:[%s1 + $0x110] sm:$0xff]
      %v303 = vld [vmem:[%s1 + $0x118] sm:$0xff]
      %v304 = vld [vmem:[%s1 + $0x120] sm:$0xff]
      %v305 = vld [vmem:[%s1 + $0x128] sm:$0xff]
      %v306 = vld [vmem:[%s1 + $0x130] sm:$0xff]
      %v307 = vld [vmem:[%s1 + $0x138] sm:$0xff]
      %v308 = vld [vmem:[%s1 + $0x140] sm:$0xff]
      %v309 = vld [vmem:[%s1 + $0x148] sm:$0xff]
      %v310 = vld [vmem:[%s1 + $0x150] sm:$0xff]
      %v311 = vld [vmem:[%s1 + $0x158] sm:$0xff]
      %v312 = vld [vmem:[%s1 + $0x160] sm:$0xff]
      %v313 = vld [vmem:[%s1 + $0x168] sm:$0xff]
      %v314 = vld [vmem:[%s1 + $0x170] sm:$0xff]
      %v315 = vld [vmem:[%s1 + $0x178] sm:$0xff]
      %v316 = vld [vmem:[%s1 + $0x180] sm:$0xff]
      %v317 = vld [vmem:[%s1 + $0x188] sm:$0xff]
      %v318 = vld [vmem:[%s1 + $0x190] sm:$0xff]
      %v319 = vld [vmem:[%s1 + $0x198] sm:$0xff]
      %v320 = vld [vmem:[%s1 + $0x1a0] sm:$0xff]
      %v321 = vld [vmem:[%s1 + $0x1a8] sm:$0xff]
      %v322 = vld [vmem:[%s1 + $0x1b0] sm:$0xff]
      %v323 = vld [vmem:[%s1 + $0x1b8] sm:$0xff]
      %v324 = vld [vmem:[%s1 + $0x1c0] sm:$0xff]
      %v325 = vld [vmem:[%s1 + $0x1c8] sm:$0xff]
      %v326 = vld [vmem:[%s1 + $0x1d0] sm:$0xff]
      %v327 = vld [vmem:[%s1 + $0x1d8] sm:$0xff]
      %v328 = vld [vmem:[%s1 + $0x1e0] sm:$0xff]
      %v329 = vld [vmem:[%s1 + $0x1e8] sm:$0xff]
      %v330 = vld [vmem:[%s1 + $0x1f0] sm:$0xff]
      %v331 = vld [vmem:[%s1 + $0x1f8] sm:$0xff]
      %v332 = vld [vmem:[%s1 + $0x200] sm:$0xff]
      %v333 = vld [vmem:[%s1 + $0x208] sm:$0xff]
      %v334 = vld [vmem:[%s1 + $0x210] sm:$0xff]
      %v335 = vld [vmem:[%s1 + $0x218] sm:$0xff]
      %v336 = vld [vmem:[%s1 + $0x220] sm:$0xff]
      %v337 = vld [vmem:[%s1 + $0x228] sm:$0xff]
      %v338 = vld [vmem:[%s1 + $0x230] sm:$0xff]
      %v339 = vld [vmem:[%s1 + $0x238] sm:$0xff]
      %v340 = vld [vmem:[%s1 + $0x240] sm:$0xff]
      %v341 = vld [vmem:[%s1 + $0x248] sm:$0xff]
      %v342 = vld [vmem:[%s1 + $0x250] sm:$0xff]
      %v343 = vld [vmem:[%s1 + $0x258] sm:$0xff]
      %v344 = vld [vmem:[%s1 + $0x260] sm:$0xff]
      %v345 = vld [vmem:[%s1 + $0x268] sm:$0xff]
      %v346 = vld [vmem:[%s1 + $0x270] sm:$0xff]
      %v347 = vld [vmem:[%s1 + $0x278] sm:$0xff]
      %v348 = vld [vmem:[%s1 + $0x280] sm:$0xff]
      %v349 = vld [vmem:[%s1 + $0x288] sm:$0xff]
      %v350 = vld [vmem:[%s1 + $0x290] sm:$0xff]
      %v351 = vld [vmem:[%s1 + $0x298] sm:$0xff]
      %v352 = vld [vmem:[%s1 + $0x2a0] sm:$0xff]
      %v353 = vld [vmem:[%s1 + $0x2a8] sm:$0xff]
      %v354 = vld [vmem:[%s1 + $0x2b0] sm:$0xff]
      %v355 = vld [vmem:[%s1 + $0x2b8] sm:$0xff]
      %v356 = vld [vmem:[%s1 + $0x2c0] sm:$0xff]
      %v357 = vld [vmem:[%s1 + $0x2c8] sm:$0xff]
      %v358 = vld [vmem:[%s1 + $0x2d0] sm:$0xff]
      %v359 = vld [vmem:[%s1 + $0x2d8] sm:$0xff]
      %v360 = vld [vmem:[%s1 + $0x2e0] sm:$0xff]
      %v361 = vld [vmem:[%s1 + $0x2e8] sm:$0xff]
      %v362 = vld [vmem:[%s1 + $0x2f0] sm:$0xff]
      %v363 = vld [vmem:[%s1 + $0x2f8] sm:$0xff]
      %v364 = vld [vmem:[%s1 + $0x300] sm:$0xff]
      %v365 = vld [vmem:[%s1 + $0x308] sm:$0xff]
      %v366 = vld [vmem:[%s1 + $0x310] sm:$0xff]
      %v367 = vld [vmem:[%s1 + $0x318] sm:$0xff]
      %v368 = vld [vmem:[%s1 + $0x320] sm:$0xff]
      %v369 = vld [vmem:[%s1 + $0x328] sm:$0xff]
      %v370 = vld [vmem:[%s1 + $0x330] sm:$0xff]
      %v371 = vld [vmem:[%s1 + $0x338] sm:$0xff]
      %v372 = vld [vmem:[%s1 + $0x340] sm:$0xff]
      %v373 = vld [vmem:[%s1 + $0x348] sm:$0xff]
      %v374 = vld [vmem:[%s1 + $0x350] sm:$0xff]
      %v375 = vld [vmem:[%s1 + $0x358] sm:$0xff]
      %v376 = vld [vmem:[%s1 + $0x360] sm:$0xff]
      %v377 = vld [vmem:[%s1 + $0x368] sm:$0xff]
      %v378 = vld [vmem:[%s1 + $0x370] sm:$0xff]
      %v379 = vld [vmem:[%s1 + $0x378] sm:$0xff]
      %v380 = vld [vmem:[%s1 + $0x380] sm:$0xff]
      %v381 = vld [vmem:[%s1 + $0x388] sm:$0xff]
      %v382 = vld [vmem:[%s165 + $0x200] sm:$0xff]
      %v383 = vld [vmem:[%s165 + $0x208] sm:$0xff]
      %v384 = vld [vmem:[%s165 + $0x210] sm:$0xff]
      %v385 = vld [vmem:[%s165 + $0x218] sm:$0xff]
      %v386 = vld [vmem:[%s165 + $0x220] sm:$0xff]
      %v387 = vld [vmem:[%s165 + $0x228] sm:$0xff]
      %v388 = vld [vmem:[%s165 + $0x230] sm:$0xff]
      %v389 = vld [vmem:[%s165 + $0x238] sm:$0xff]
      %v390 = vpack.c.bf16 %v188, %v180
      %v391 = vpack.c.bf16 %v189, %v181
      %v392 = vpack.c.bf16 %v190, %v182
      %v393 = vpack.c.bf16 %v191, %v183
      %v394 = vpack.c.bf16 %v192, %v184
      %v395 = vpack.c.bf16 %v193, %v185
      %v396 = vpack.c.bf16 %v194, %v186
      %v397 = vpack.c.bf16 %v195, %v187
      %v398 = vpack.c.bf16 %v204, %v196
      %v399 = vpack.c.bf16 %v205, %v197
      %v400 = vpack.c.bf16 %v206, %v198
      %v401 = vpack.c.bf16 %v207, %v199
      %v402 = vpack.c.bf16 %v208, %v200
      %v403 = vpack.c.bf16 %v209, %v201
      %v404 = vpack.c.bf16 %v210, %v202
      %v405 = vpack.c.bf16 %v211, %v203
      %v406 = vpack.c.bf16 %v220, %v212
      %v407 = vpack.c.bf16 %v221, %v213
      %v408 = vpack.c.bf16 %v222, %v214
      %v409 = vpack.c.bf16 %v223, %v215
      %v410 = vpack.c.bf16 %v224, %v216
      %v411 = vpack.c.bf16 %v225, %v217
      %v412 = vpack.c.bf16 %v226, %v218
      %v413 = vpack.c.bf16 %v227, %v219
      %v414 = vpack.c.bf16 %v382, %v228
      %v415 = vpack.c.bf16 %v383, %v229
      %v416 = vpack.c.bf16 %v384, %v230
      %v417 = vpack.c.bf16 %v385, %v231
      %v418 = vpack.c.bf16 %v386, %v232
      %v419 = vpack.c.bf16 %v387, %v233
      %v420 = vpack.c.bf16 %v388, %v234
      %v421 = vpack.c.bf16 %v389, %v235
      %s422 = scalar_lea.vmem %s1, 912
      %v423 = vld [vmem:[%s422] sm:$0xff]
      %v424 = vld [vmem:[%s422 + $0x8] sm:$0xff]
      %v425 = vld [vmem:[%s422 + $0x10] sm:$0xff]
      %v426 = vld [vmem:[%s422 + $0x18] sm:$0xff]
      %v427 = vld [vmem:[%s422 + $0x20] sm:$0xff]
      %v428 = vld [vmem:[%s422 + $0x28] sm:$0xff]
      %v429 = vld [vmem:[%s422 + $0x30] sm:$0xff]
      %v430 = vld [vmem:[%s422 + $0x38] sm:$0xff]
      %v431 = vld [vmem:[%s422 + $0x40] sm:$0xff]
      %v432 = vld [vmem:[%s422 + $0x48] sm:$0xff]
      %v433 = vld [vmem:[%s422 + $0x50] sm:$0xff]
      %v434 = vld [vmem:[%s422 + $0x58] sm:$0xff]
      %v435 = vld [vmem:[%s422 + $0x60] sm:$0xff]
      %v436 = vld [vmem:[%s422 + $0x68] sm:$0xff]
      %v437 = vld [vmem:[%s422 + $0x70] sm:$0xff]
      %v438 = vld [vmem:[%s422 + $0x78] sm:$0xff]
      %v439 = vld [vmem:[%s422 + $0x80] sm:$0xff]
      %v440 = vld [vmem:[%s422 + $0x88] sm:$0xff]
      %v441 = vld [vmem:[%s422 + $0x90] sm:$0xff]
      %v442 = vld [vmem:[%s422 + $0x98] sm:$0xff]
      %v443 = vld [vmem:[%s422 + $0xa0] sm:$0xff]
      %v444 = vld [vmem:[%s422 + $0xa8] sm:$0xff]
      %v445 = vld [vmem:[%s422 + $0xb0] sm:$0xff]
      %v446 = vld [vmem:[%s422 + $0xb8] sm:$0xff]
      %v447 = vld [vmem:[%s422 + $0xc0] sm:$0xff]
      %v448 = vld [vmem:[%s422 + $0xc8] sm:$0xff]
      %v449 = vld [vmem:[%s422 + $0xd0] sm:$0xff]
      %v450 = vld [vmem:[%s422 + $0xd8] sm:$0xff]
      %v451 = vld [vmem:[%s422 + $0xe0] sm:$0xff]
      %v452 = vld [vmem:[%s422 + $0xe8] sm:$0xff]
      %v453 = vld [vmem:[%s422 + $0xf0] sm:$0xff]
      %v454 = vld [vmem:[%s422 + $0xf8] sm:$0xff]
      %v455 = vld [vmem:[%s422 + $0x100] sm:$0xff]
      %v456 = vld [vmem:[%s422 + $0x108] sm:$0xff]
      %v457 = vld [vmem:[%s422 + $0x110] sm:$0xff]
      %v458 = vld [vmem:[%s422 + $0x118] sm:$0xff]
      %v459 = vld [vmem:[%s422 + $0x120] sm:$0xff]
      %v460 = vld [vmem:[%s422 + $0x128] sm:$0xff]
      %v461 = vld [vmem:[%s422 + $0x130] sm:$0xff]
      %v462 = vld [vmem:[%s422 + $0x138] sm:$0xff]
      %v463 = vld [vmem:[%s422 + $0x140] sm:$0xff]
      %v464 = vld [vmem:[%s422 + $0x148] sm:$0xff]
      %v465 = vld [vmem:[%s422 + $0x150] sm:$0xff]
      %v466 = vld [vmem:[%s422 + $0x158] sm:$0xff]
      %v467 = vld [vmem:[%s422 + $0x160] sm:$0xff]
      %v468 = vld [vmem:[%s422 + $0x168] sm:$0xff]
      %v469 = vld [vmem:[%s422 + $0x170] sm:$0xff]
      %v470 = vld [vmem:[%s422 + $0x178] sm:$0xff]
      %v471 = vld [vmem:[%s422 + $0x180] sm:$0xff]
      %v472 = vld [vmem:[%s422 + $0x188] sm:$0xff]
      %v473 = vld [vmem:[%s422 + $0x190] sm:$0xff]
      %v474 = vld [vmem:[%s422 + $0x198] sm:$0xff]
      %v475 = vld [vmem:[%s422 + $0x1a0] sm:$0xff]
      %v476 = vld [vmem:[%s422 + $0x1a8] sm:$0xff]
      %v477 = vld [vmem:[%s422 + $0x1b0] sm:$0xff]
      %v478 = vld [vmem:[%s422 + $0x1b8] sm:$0xff]
      %v479 = vld [vmem:[%s422 + $0x1c0] sm:$0xff]
      %v480 = vld [vmem:[%s422 + $0x1c8] sm:$0xff]
      %v481 = vld [vmem:[%s422 + $0x1d0] sm:$0xff]
      %v482 = vld [vmem:[%s422 + $0x1d8] sm:$0xff]
      %v483 = vld [vmem:[%s422 + $0x1e0] sm:$0xff]
      %v484 = vld [vmem:[%s422 + $0x1e8] sm:$0xff]
      %v485 = vld [vmem:[%s422 + $0x1f0] sm:$0xff]
      %v486 = vld [vmem:[%s422 + $0x1f8] sm:$0xff]
      %v487 = vld [vmem:[%s422 + $0x200] sm:$0xff]
      %v488 = vld [vmem:[%s422 + $0x208] sm:$0xff]
      %v489 = vld [vmem:[%s422 + $0x210] sm:$0xff]
      %v490 = vld [vmem:[%s422 + $0x218] sm:$0xff]
      %v491 = vld [vmem:[%s422 + $0x220] sm:$0xff]
      %v492 = vld [vmem:[%s422 + $0x228] sm:$0xff]
      %v493 = vld [vmem:[%s422 + $0x230] sm:$0xff]
      %v494 = vld [vmem:[%s422 + $0x238] sm:$0xff]
      %v495 = vld [vmem:[%s422 + $0x240] sm:$0xff]
      %v496 = vld [vmem:[%s422 + $0x248] sm:$0xff]
      %v497 = vld [vmem:[%s422 + $0x250] sm:$0xff]
      %v498 = vld [vmem:[%s422 + $0x258] sm:$0xff]
      %v499 = vld [vmem:[%s422 + $0x260] sm:$0xff]
      %v500 = vld [vmem:[%s422 + $0x268] sm:$0xff]
      %v501 = vld [vmem:[%s422 + $0x270] sm:$0xff]
      %v502 = vld [vmem:[%s422 + $0x278] sm:$0xff]
      %v503 = vld [vmem:[%s422 + $0x280] sm:$0xff]
      %v504 = vld [vmem:[%s422 + $0x288] sm:$0xff]
      %v505 = vld [vmem:[%s422 + $0x290] sm:$0xff]
      %v506 = vld [vmem:[%s422 + $0x298] sm:$0xff]
      %v507 = vld [vmem:[%s422 + $0x2a0] sm:$0xff]
      %v508 = vld [vmem:[%s422 + $0x2a8] sm:$0xff]
      %v509 = vld [vmem:[%s422 + $0x2b0] sm:$0xff]
      %v510 = vld [vmem:[%s422 + $0x2b8] sm:$0xff]
      %v511 = vld [vmem:[%s422 + $0x2c0] sm:$0xff]
      %v512 = vld [vmem:[%s422 + $0x2c8] sm:$0xff]
      %v513 = vld [vmem:[%s422 + $0x2d0] sm:$0xff]
      %v514 = vld [vmem:[%s422 + $0x2d8] sm:$0xff]
      %v515 = vld [vmem:[%s422 + $0x2e0] sm:$0xff]
      %v516 = vld [vmem:[%s422 + $0x2e8] sm:$0xff]
      %v517 = vld [vmem:[%s422 + $0x2f0] sm:$0xff]
      %v518 = vld [vmem:[%s422 + $0x2f8] sm:$0xff]
      %v519 = vld [vmem:[%s422 + $0x300] sm:$0xff]
      %v520 = vld [vmem:[%s422 + $0x308] sm:$0xff]
      %v521 = vld [vmem:[%s422 + $0x310] sm:$0xff]
      %v522 = vld [vmem:[%s422 + $0x318] sm:$0xff]
      %v523 = vld [vmem:[%s422 + $0x320] sm:$0xff]
      %v524 = vld [vmem:[%s422 + $0x328] sm:$0xff]
      %v525 = vld [vmem:[%s422 + $0x330] sm:$0xff]
      %v526 = vld [vmem:[%s422 + $0x338] sm:$0xff]
      %v527 = vld [vmem:[%s422 + $0x340] sm:$0xff]
      %v528 = vld [vmem:[%s422 + $0x348] sm:$0xff]
      %v529 = vld [vmem:[%s422 + $0x350] sm:$0xff]
      %v530 = vld [vmem:[%s422 + $0x358] sm:$0xff]
      %v531 = vld [vmem:[%s422 + $0x360] sm:$0xff]
      %v532 = vld [vmem:[%s422 + $0x368] sm:$0xff]
      %v533 = vld [vmem:[%s422 + $0x370] sm:$0xff]
      %v534 = vld [vmem:[%s422 + $0x378] sm:$0xff]
      %v535 = vld [vmem:[%s422 + $0x380] sm:$0xff]
      %v536 = vld [vmem:[%s422 + $0x388] sm:$0xff]
      %v651 = vunpack.c.l.b16 %v423
      %v652 = vunpack.c.h.b16 %v423
      %v653 = vunpack.c.l.b16 %v424
      %v654 = vunpack.c.h.b16 %v424
      %v655 = vunpack.c.l.b16 %v425
      %v656 = vunpack.c.h.b16 %v425
      %v657 = vunpack.c.l.b16 %v426
      %v658 = vunpack.c.h.b16 %v426
      %v659 = vunpack.c.l.b16 %v427
      %v660 = vunpack.c.h.b16 %v427
      %v661 = vunpack.c.l.b16 %v428
      %v662 = vunpack.c.h.b16 %v428
      %v663 = vunpack.c.l.b16 %v429
      %v664 = vunpack.c.h.b16 %v429
      %v665 = vunpack.c.l.b16 %v430
      %v666 = vunpack.c.h.b16 %v430
      %v667 = vunpack.c.l.b16 %v431
      %v668 = vunpack.c.h.b16 %v431
      %v669 = vunpack.c.l.b16 %v432
      %v670 = vunpack.c.h.b16 %v432
      %v671 = vunpack.c.l.b16 %v433
      %v672 = vunpack.c.h.b16 %v433
      %v673 = vunpack.c.l.b16 %v434
      %v674 = vunpack.c.h.b16 %v434
      %v675 = vunpack.c.l.b16 %v435
      %v676 = vunpack.c.h.b16 %v435
      %v677 = vunpack.c.l.b16 %v436
      %v678 = vunpack.c.h.b16 %v436
      %v679 = vunpack.c.l.b16 %v437
      %v680 = vunpack.c.h.b16 %v437
      %v681 = vunpack.c.l.b16 %v438
      %v682 = vunpack.c.h.b16 %v438
      %v683 = vunpack.c.l.b16 %v439
      %v684 = vunpack.c.h.b16 %v439
      %v685 = vunpack.c.l.b16 %v440
      %v686 = vunpack.c.h.b16 %v440
      %v687 = vunpack.c.l.b16 %v441
      %v688 = vunpack.c.h.b16 %v441
      %v689 = vunpack.c.l.b16 %v442
      %v690 = vunpack.c.h.b16 %v442
      %v691 = vunpack.c.l.b16 %v443
      %v692 = vunpack.c.h.b16 %v443
      %v693 = vunpack.c.l.b16 %v444
      %v694 = vunpack.c.h.b16 %v444
      %v695 = vunpack.c.l.b16 %v445
      %v696 = vunpack.c.h.b16 %v445
      %v697 = vunpack.c.l.b16 %v446
      %v698 = vunpack.c.h.b16 %v446
      %v699 = vunpack.c.l.b16 %v447
      %v700 = vunpack.c.h.b16 %v447
      %v701 = vunpack.c.l.b16 %v448
      %v702 = vunpack.c.h.b16 %v448
      %v703 = vunpack.c.l.b16 %v449
      %v704 = vunpack.c.h.b16 %v449
      %v705 = vunpack.c.l.b16 %v450
      %v706 = vunpack.c.h.b16 %v450
      %v707 = vunpack.c.l.b16 %v451
      %v708 = vunpack.c.h.b16 %v451
      %v709 = vunpack.c.l.b16 %v452
      %v710 = vunpack.c.h.b16 %v452
      %v711 = vunpack.c.l.b16 %v453
      %v712 = vunpack.c.h.b16 %v453
      %v713 = vunpack.c.l.b16 %v454
      %v714 = vunpack.c.h.b16 %v454
      %v715 = vunpack.c.l.b16 %v455
      %v716 = vunpack.c.h.b16 %v455
      %v717 = vunpack.c.l.b16 %v456
      %v718 = vunpack.c.h.b16 %v456
      %v719 = vunpack.c.l.b16 %v457
      %v720 = vunpack.c.h.b16 %v457
      %v721 = vunpack.c.l.b16 %v458
      %v722 = vunpack.c.h.b16 %v458
      %v723 = vunpack.c.l.b16 %v459
      %v724 = vunpack.c.h.b16 %v459
      %v725 = vunpack.c.l.b16 %v460
      %v726 = vunpack.c.h.b16 %v460
      %v727 = vunpack.c.l.b16 %v461
      %v728 = vunpack.c.h.b16 %v461
      %v729 = vunpack.c.l.b16 %v462
      %v730 = vunpack.c.h.b16 %v462
      %v731 = vunpack.c.l.b16 %v463
      %v732 = vunpack.c.h.b16 %v463
      %v733 = vunpack.c.l.b16 %v464
      %v734 = vunpack.c.h.b16 %v464
      %v735 = vunpack.c.l.b16 %v465
      %v736 = vunpack.c.h.b16 %v465
      %v737 = vunpack.c.l.b16 %v466
      %v738 = vunpack.c.h.b16 %v466
      %v739 = vunpack.c.l.b16 %v467
      %v740 = vunpack.c.h.b16 %v467
      %v741 = vunpack.c.l.b16 %v468
      %v742 = vunpack.c.h.b16 %v468
      %v743 = vunpack.c.l.b16 %v469
      %v744 = vunpack.c.h.b16 %v469
      %v745 = vunpack.c.l.b16 %v470
      %v746 = vunpack.c.h.b16 %v470
      %v747 = vunpack.c.l.b16 %v471
      %v748 = vunpack.c.h.b16 %v471
      %v749 = vunpack.c.l.b16 %v472
      %v750 = vunpack.c.h.b16 %v472
      %v751 = vunpack.c.l.b16 %v473
      %v752 = vunpack.c.h.b16 %v473
      %v753 = vunpack.c.l.b16 %v474
      %v754 = vunpack.c.h.b16 %v474
      %v755 = vunpack.c.l.b16 %v475
      %v756 = vunpack.c.h.b16 %v475
      %v757 = vunpack.c.l.b16 %v476
      %v758 = vunpack.c.h.b16 %v476
      %v759 = vunpack.c.l.b16 %v477
      %v760 = vunpack.c.h.b16 %v477
      %v761 = vunpack.c.l.b16 %v478
      %v762 = vunpack.c.h.b16 %v478
      %v763 = vunpack.c.l.b16 %v479
      %v764 = vunpack.c.h.b16 %v479
      %v765 = vunpack.c.l.b16 %v480
      %v766 = vunpack.c.h.b16 %v480
      %v767 = vunpack.c.l.b16 %v481
      %v768 = vunpack.c.h.b16 %v481
      %v769 = vunpack.c.l.b16 %v482
      %v770 = vunpack.c.h.b16 %v482
      %v771 = vunpack.c.l.b16 %v483
      %v772 = vunpack.c.h.b16 %v483
      %v773 = vunpack.c.l.b16 %v484
      %v774 = vunpack.c.h.b16 %v484
      %v775 = vunpack.c.l.b16 %v485
      %v776 = vunpack.c.h.b16 %v485
      %v777 = vunpack.c.l.b16 %v486
      %v778 = vunpack.c.h.b16 %v486
      %v779 = vunpack.c.l.b16 %v487
      %v780 = vunpack.c.h.b16 %v487
      %v781 = vunpack.c.l.b16 %v488
      %v782 = vunpack.c.h.b16 %v488
      %v783 = vunpack.c.l.b16 %v489
      %v784 = vunpack.c.h.b16 %v489
      %v785 = vunpack.c.l.b16 %v490
      %v786 = vunpack.c.h.b16 %v490
      %v787 = vunpack.c.l.b16 %v491
      %v788 = vunpack.c.h.b16 %v491
      %v789 = vunpack.c.l.b16 %v492
      %v790 = vunpack.c.h.b16 %v492
      %v791 = vunpack.c.l.b16 %v493
      %v792 = vunpack.c.h.b16 %v493
      %v793 = vunpack.c.l.b16 %v494
      %v794 = vunpack.c.h.b16 %v494
      %v795 = vunpack.c.l.b16 %v495
      %v796 = vunpack.c.h.b16 %v495
      %v797 = vunpack.c.l.b16 %v496
      %v798 = vunpack.c.h.b16 %v496
      %v799 = vunpack.c.l.b16 %v497
      %v800 = vunpack.c.h.b16 %v497
      %v801 = vunpack.c.l.b16 %v498
      %v802 = vunpack.c.h.b16 %v498
      %v803 = vunpack.c.l.b16 %v499
      %v804 = vunpack.c.h.b16 %v499
      %v805 = vunpack.c.l.b16 %v500
      %v806 = vunpack.c.h.b16 %v500
      %v807 = vunpack.c.l.b16 %v501
      %v808 = vunpack.c.h.b16 %v501
      %v809 = vunpack.c.l.b16 %v502
      %v810 = vunpack.c.h.b16 %v502
      %v811 = vunpack.c.l.b16 %v503
      %v812 = vunpack.c.h.b16 %v503
      %v813 = vunpack.c.l.b16 %v504
      %v814 = vunpack.c.h.b16 %v504
      %v815 = vunpack.c.l.b16 %v505
      %v816 = vunpack.c.h.b16 %v505
      %v817 = vunpack.c.l.b16 %v506
      %v818 = vunpack.c.h.b16 %v506
      %v819 = vunpack.c.l.b16 %v507
      %v820 = vunpack.c.h.b16 %v507
      %v821 = vunpack.c.l.b16 %v508
      %v822 = vunpack.c.h.b16 %v508
      %v823 = vunpack.c.l.b16 %v509
      %v824 = vunpack.c.h.b16 %v509
      %v825 = vunpack.c.l.b16 %v510
      %v826 = vunpack.c.h.b16 %v510
      %v827 = vunpack.c.l.b16 %v511
      %v828 = vunpack.c.h.b16 %v511
      %v829 = vunpack.c.l.b16 %v512
      %v830 = vunpack.c.h.b16 %v512
      %v831 = vunpack.c.l.b16 %v513
      %v832 = vunpack.c.h.b16 %v513
      %v833 = vunpack.c.l.b16 %v514
      %v834 = vunpack.c.h.b16 %v514
      %v835 = vunpack.c.l.b16 %v515
      %v836 = vunpack.c.h.b16 %v515
      %v837 = vunpack.c.l.b16 %v516
      %v838 = vunpack.c.h.b16 %v516
      %v839 = vunpack.c.l.b16 %v517
      %v840 = vunpack.c.h.b16 %v517
      %v841 = vunpack.c.l.b16 %v518
      %v842 = vunpack.c.h.b16 %v518
      %v843 = vunpack.c.l.b16 %v519
      %v844 = vunpack.c.h.b16 %v519
      %v845 = vunpack.c.l.b16 %v520
      %v846 = vunpack.c.h.b16 %v520
      %v847 = vunpack.c.l.b16 %v521
      %v848 = vunpack.c.h.b16 %v521
      %v849 = vunpack.c.l.b16 %v522
      %v850 = vunpack.c.h.b16 %v522
      %v851 = vunpack.c.l.b16 %v523
      %v852 = vunpack.c.h.b16 %v523
      %v853 = vunpack.c.l.b16 %v524
      %v854 = vunpack.c.h.b16 %v524
      %v855 = vunpack.c.l.b16 %v525
      %v856 = vunpack.c.h.b16 %v525
      %v857 = vunpack.c.l.b16 %v526
      %v858 = vunpack.c.h.b16 %v526
      %v859 = vunpack.c.l.b16 %v527
      %v860 = vunpack.c.h.b16 %v527
      %v861 = vunpack.c.l.b16 %v528
      %v862 = vunpack.c.h.b16 %v528
      %v863 = vunpack.c.l.b16 %v529
      %v864 = vunpack.c.h.b16 %v529
      %v865 = vunpack.c.l.b16 %v530
      %v866 = vunpack.c.h.b16 %v530
      %v867 = vunpack.c.l.b16 %v531
      %v868 = vunpack.c.h.b16 %v531
      %v869 = vunpack.c.l.b16 %v532
      %v870 = vunpack.c.h.b16 %v532
      %v871 = vunpack.c.l.b16 %v533
      %v872 = vunpack.c.h.b16 %v533
      %v873 = vunpack.c.l.b16 %v534
      %v874 = vunpack.c.h.b16 %v534
      %v875 = vunpack.c.l.b16 %v535
      %v876 = vunpack.c.h.b16 %v535
      %v877 = vunpack.c.l.b16 %v536
      %v878 = vunpack.c.h.b16 %v536
      %v879 = vpack.c.b16 %v653, %v651
      %v880 = vpack.c.b16 %v654, %v652
      %v881 = vpack.c.b16 %v657, %v655
      %v882 = vpack.c.b16 %v658, %v656
      %v883 = vpack.c.b16 %v661, %v659
      %v884 = vpack.c.b16 %v662, %v660
      %v885 = vpack.c.b16 %v665, %v663
      %v886 = vpack.c.b16 %v666, %v664
      %v887 = vpack.c.b16 %v669, %v667
      %v888 = vpack.c.b16 %v670, %v668
      %v889 = vpack.c.b16 %v673, %v671
      %v890 = vpack.c.b16 %v674, %v672
      %v891 = vpack.c.b16 %v677, %v675
      %v892 = vpack.c.b16 %v678, %v676
      %v893 = vpack.c.b16 %v681, %v679
      %v894 = vpack.c.b16 %v682, %v680
      %v895 = vpack.c.b16 %v685, %v683
      %v896 = vpack.c.b16 %v686, %v684
      %v897 = vpack.c.b16 %v689, %v687
      %v898 = vpack.c.b16 %v690, %v688
      %v899 = vpack.c.b16 %v693, %v691
      %v900 = vpack.c.b16 %v694, %v692
      %v901 = vpack.c.b16 %v697, %v695
      %v902 = vpack.c.b16 %v698, %v696
      %v903 = vpack.c.b16 %v701, %v699
      %v904 = vpack.c.b16 %v702, %v700
      %v905 = vpack.c.b16 %v705, %v703
      %v906 = vpack.c.b16 %v706, %v704
      %v907 = vpack.c.b16 %v709, %v707
      %v908 = vpack.c.b16 %v710, %v708
      %v909 = vpack.c.b16 %v713, %v711
      %v910 = vpack.c.b16 %v714, %v712
      %v911 = vpack.c.b16 %v717, %v715
      %v912 = vpack.c.b16 %v718, %v716
      %v913 = vpack.c.b16 %v721, %v719
      %v914 = vpack.c.b16 %v722, %v720
      %v915 = vpack.c.b16 %v725, %v723
      %v916 = vpack.c.b16 %v726, %v724
      %v917 = vpack.c.b16 %v729, %v727
      %v918 = vpack.c.b16 %v730, %v728
      %v919 = vpack.c.b16 %v733, %v731
      %v920 = vpack.c.b16 %v734, %v732
      %v921 = vpack.c.b16 %v737, %v735
      %v922 = vpack.c.b16 %v738, %v736
      %v923 = vpack.c.b16 %v741, %v739
      %v924 = vpack.c.b16 %v742, %v740
      %v925 = vpack.c.b16 %v745, %v743
      %v926 = vpack.c.b16 %v746, %v744
      %v927 = vpack.c.b16 %v749, %v747
      %v928 = vpack.c.b16 %v750, %v748
      %v929 = vpack.c.b16 %v753, %v751
      %v930 = vpack.c.b16 %v754, %v752
      %v931 = vpack.c.b16 %v757, %v755
      %v932 = vpack.c.b16 %v758, %v756
      %v933 = vpack.c.b16 %v761, %v759
      %v934 = vpack.c.b16 %v762, %v760
      %v935 = vpack.c.b16 %v765, %v763
      %v936 = vpack.c.b16 %v766, %v764
      %v937 = vpack.c.b16 %v769, %v767
      %v938 = vpack.c.b16 %v770, %v768
      %v939 = vpack.c.b16 %v773, %v771
      %v940 = vpack.c.b16 %v774, %v772
      %v941 = vpack.c.b16 %v777, %v775
      %v942 = vpack.c.b16 %v778, %v776
      %v943 = vpack.c.b16 %v781, %v779
      %v944 = vpack.c.b16 %v782, %v780
      %v945 = vpack.c.b16 %v785, %v783
      %v946 = vpack.c.b16 %v786, %v784
      %v947 = vpack.c.b16 %v789, %v787
      %v948 = vpack.c.b16 %v790, %v788
      %v949 = vpack.c.b16 %v793, %v791
      %v950 = vpack.c.b16 %v794, %v792
      %v951 = vpack.c.b16 %v797, %v795
      %v952 = vpack.c.b16 %v798, %v796
      %v953 = vpack.c.b16 %v801, %v799
      %v954 = vpack.c.b16 %v802, %v800
      %v955 = vpack.c.b16 %v805, %v803
      %v956 = vpack.c.b16 %v806, %v804
      %v957 = vpack.c.b16 %v809, %v807
      %v958 = vpack.c.b16 %v810, %v808
      %v959 = vpack.c.b16 %v813, %v811
      %v960 = vpack.c.b16 %v814, %v812
      %v961 = vpack.c.b16 %v817, %v815
      %v962 = vpack.c.b16 %v818, %v816
      %v963 = vpack.c.b16 %v821, %v819
      %v964 = vpack.c.b16 %v822, %v820
      %v965 = vpack.c.b16 %v825, %v823
      %v966 = vpack.c.b16 %v826, %v824
      %v967 = vpack.c.b16 %v829, %v827
      %v968 = vpack.c.b16 %v830, %v828
      %v969 = vpack.c.b16 %v833, %v831
      %v970 = vpack.c.b16 %v834, %v832
      %v971 = vpack.c.b16 %v837, %v835
      %v972 = vpack.c.b16 %v838, %v836
      %v973 = vpack.c.b16 %v841, %v839
      %v974 = vpack.c.b16 %v842, %v840
      %v975 = vpack.c.b16 %v845, %v843
      %v976 = vpack.c.b16 %v846, %v844
      %v977 = vpack.c.b16 %v849, %v847
      %v978 = vpack.c.b16 %v850, %v848
      %v979 = vpack.c.b16 %v853, %v851
      %v980 = vpack.c.b16 %v854, %v852
      %v981 = vpack.c.b16 %v857, %v855
      %v982 = vpack.c.b16 %v858, %v856
      %v983 = vpack.c.b16 %v861, %v859
      %v984 = vpack.c.b16 %v862, %v860
      %v985 = vpack.c.b16 %v865, %v863
      %v986 = vpack.c.b16 %v866, %v864
      %v987 = vpack.c.b16 %v869, %v867
      %v988 = vpack.c.b16 %v870, %v868
      %v989 = vpack.c.b16 %v873, %v871
      %v990 = vpack.c.b16 %v874, %v872
      %v991 = vpack.c.b16 %v877, %v875
      %v992 = vpack.c.b16 %v878, %v876
      %vm1107 = vcmask 130048
      %v1109 = vsel %vm1107, %v397, 0
      %v1112 = vsel %vm1107, %v405, 0
      %v1115 = vsel %vm1107, %v413, 0
      %v1118 = vsel %vm1107, %v421, 0
      %1120 = vmatprep.subr.bf16.mxu0 %v894
      %1121 = vmatpush1.bf16.msra.mxu0 %v893
      %1122 = vmatprep.subr.bf16.mxu0 %v892
      %1123 = vmatpush1.bf16.msra.mxu0 %v891
      %1124 = vmatprep.subr.bf16.mxu0 %v890
      %1125 = vmatpush1.bf16.msra.mxu0 %v889
      %1126 = vmatprep.subr.bf16.mxu0 %v888
      %1127 = vmatpush1.bf16.msra.mxu0 %v887
      %1128 = vmatprep.subr.bf16.mxu0 %v886
      %1129 = vmatpush1.bf16.msra.mxu0 %v885
      %1130 = vmatprep.subr.bf16.mxu0 %v884
      %1131 = vmatpush1.bf16.msra.mxu0 %v883
      %1132 = vmatprep.subr.bf16.mxu0 %v882
      %1133 = vmatpush1.bf16.msra.mxu0 %v881
      %1134 = vmatprep.subr.bf16.mxu0 %v880
      %1135 = vmatpush1.bf16.msra.mxu0 %v879
      %1136 = vmatprep.subr.bf16.mxu0 %v910
      %1137 = vmatpush2.bf16.msra.mxu0 %v909
      %1138 = vmatprep.subr.bf16.mxu0 %v908
      %1139 = vmatpush2.bf16.msra.mxu0 %v907
      %1140 = vmatprep.subr.bf16.mxu0 %v906
      %1141 = vmatpush2.bf16.msra.mxu0 %v905
      %1142 = vmatprep.subr.bf16.mxu0 %v904
      %1143 = vmatpush2.bf16.msra.mxu0 %v903
      %1144 = vmatprep.subr.bf16.mxu0 %v902
      %1145 = vmatpush2.bf16.msra.mxu0 %v901
      %1146 = vmatprep.subr.bf16.mxu0 %v900
      %1147 = vmatpush2.bf16.msra.mxu0 %v899
      %1148 = vmatprep.subr.bf16.mxu0 %v898
      %1149 = vmatpush2.bf16.msra.mxu0 %v897
      %1150 = vmatprep.subr.bf16.mxu0 %v896
      %1151 = vmatpush2.bf16.msra.mxu0 %v895
      %1152 = vmatprep.mubr.bf16.mxu0 %v391
      %1153 = vmatmul.mubr.bf16.gmra.mxu0 %v390
      %v1154 = vpop.f32.mrf.mxu0
      %v1155 = vadd.f32 0.0, %v1154
      %v1156 = vpop.f32.mrf.mxu0
      %v1157 = vadd.f32 0.0, %v1156
      %v1158 = vpop.f32.mrf.mxu0
      %v1159 = vadd.f32 0.0, %v1158
      %v1160 = vpop.f32.mrf.mxu0
      %v1161 = vadd.f32 0.0, %v1160
      %1162 = vmatprep.mubr.bf16.mxu0 %v399
      %1163 = vmatmul.mubr.bf16.gmra.mxu0 %v398
      %v1164 = vpop.f32.mrf.mxu0
      %v1165 = vadd.f32 0.0, %v1164
      %v1166 = vpop.f32.mrf.mxu0
      %v1167 = vadd.f32 0.0, %v1166
      %v1168 = vpop.f32.mrf.mxu0
      %v1169 = vadd.f32 0.0, %v1168
      %v1170 = vpop.f32.mrf.mxu0
      %v1171 = vadd.f32 0.0, %v1170
      %1172 = vmatprep.mubr.bf16.mxu0 %v407
      %1173 = vmatmul.mubr.bf16.gmra.mxu0 %v406
      %v1174 = vpop.f32.mrf.mxu0
      %v1175 = vadd.f32 0.0, %v1174
      %v1176 = vpop.f32.mrf.mxu0
      %v1177 = vadd.f32 0.0, %v1176
      %v1178 = vpop.f32.mrf.mxu0
      %v1179 = vadd.f32 0.0, %v1178
      %v1180 = vpop.f32.mrf.mxu0
      %v1181 = vadd.f32 0.0, %v1180
      %1182 = vmatprep.mubr.bf16.mxu0 %v415
      %1183 = vmatmul.mubr.bf16.gmra.mxu0 %v414
      %v1184 = vpop.f32.mrf.mxu0
      %v1185 = vadd.f32 0.0, %v1184
      %v1186 = vpop.f32.mrf.mxu0
      %v1187 = vadd.f32 0.0, %v1186
      %v1188 = vpop.f32.mrf.mxu0
      %v1189 = vadd.f32 0.0, %v1188
      %v1190 = vpop.f32.mrf.mxu0
      %v1191 = vadd.f32 0.0, %v1190
      %1192 = vdwg.mxu0
      %1193 = vmatprep.subr.bf16.mxu0 %v926
      %1194 = vmatpush1.bf16.msra.mxu0 %v925
      %1195 = vmatprep.subr.bf16.mxu0 %v924
      %1196 = vmatpush1.bf16.msra.mxu0 %v923
      %1197 = vmatprep.subr.bf16.mxu0 %v922
      %1198 = vmatpush1.bf16.msra.mxu0 %v921
      %1199 = vmatprep.subr.bf16.mxu0 %v920
      %1200 = vmatpush1.bf16.msra.mxu0 %v919
      %1201 = vmatprep.subr.bf16.mxu0 %v918
      %1202 = vmatpush1.bf16.msra.mxu0 %v917
      %1203 = vmatprep.subr.bf16.mxu0 %v916
      %1204 = vmatpush1.bf16.msra.mxu0 %v915
      %1205 = vmatprep.subr.bf16.mxu0 %v914
      %1206 = vmatpush1.bf16.msra.mxu0 %v913
      %1207 = vmatprep.subr.bf16.mxu0 %v912
      %1208 = vmatpush1.bf16.msra.mxu0 %v911
      %1209 = vmatprep.subr.bf16.mxu0 %v942
      %1210 = vmatpush2.bf16.msra.mxu0 %v941
      %1211 = vmatprep.subr.bf16.mxu0 %v940
      %1212 = vmatpush2.bf16.msra.mxu0 %v939
      %1213 = vmatprep.subr.bf16.mxu0 %v938
      %1214 = vmatpush2.bf16.msra.mxu0 %v937
      %1215 = vmatprep.subr.bf16.mxu0 %v936
      %1216 = vmatpush2.bf16.msra.mxu0 %v935
      %1217 = vmatprep.subr.bf16.mxu0 %v934
      %1218 = vmatpush2.bf16.msra.mxu0 %v933
      %1219 = vmatprep.subr.bf16.mxu0 %v932
      %1220 = vmatpush2.bf16.msra.mxu0 %v931
      %1221 = vmatprep.subr.bf16.mxu0 %v930
      %1222 = vmatpush2.bf16.msra.mxu0 %v929
      %1223 = vmatprep.subr.bf16.mxu0 %v928
      %1224 = vmatpush2.bf16.msra.mxu0 %v927
      %1225 = vmatprep.mubr.bf16.mxu0 %v393
      %1226 = vmatmul.mubr.bf16.gmra.mxu0 %v392
      %v1227 = vpop.f32.mrf.mxu0
      %v1228 = vadd.f32 %v1155, %v1227
      %v1229 = vpop.f32.mrf.mxu0
      %v1230 = vadd.f32 %v1157, %v1229
      %v1231 = vpop.f32.mrf.mxu0
      %v1232 = vadd.f32 %v1159, %v1231
      %v1233 = vpop.f32.mrf.mxu0
      %v1234 = vadd.f32 %v1161, %v1233
      %1235 = vmatprep.mubr.bf16.mxu0 %v401
      %1236 = vmatmul.mubr.bf16.gmra.mxu0 %v400
      %v1237 = vpop.f32.mrf.mxu0
      %v1238 = vadd.f32 %v1165, %v1237
      %v1239 = vpop.f32.mrf.mxu0
      %v1240 = vadd.f32 %v1167, %v1239
      %v1241 = vpop.f32.mrf.mxu0
      %v1242 = vadd.f32 %v1169, %v1241
      %v1243 = vpop.f32.mrf.mxu0
      %v1244 = vadd.f32 %v1171, %v1243
      %1245 = vmatprep.mubr.bf16.mxu0 %v409
      %1246 = vmatmul.mubr.bf16.gmra.mxu0 %v408
      %v1247 = vpop.f32.mrf.mxu0
      %v1248 = vadd.f32 %v1175, %v1247
      %v1249 = vpop.f32.mrf.mxu0
      %v1250 = vadd.f32 %v1177, %v1249
      %v1251 = vpop.f32.mrf.mxu0
      %v1252 = vadd.f32 %v1179, %v1251
      %v1253 = vpop.f32.mrf.mxu0
      %v1254 = vadd.f32 %v1181, %v1253
      %1255 = vmatprep.mubr.bf16.mxu0 %v417
      %1256 = vmatmul.mubr.bf16.gmra.mxu0 %v416
      %v1257 = vpop.f32.mrf.mxu0
      %v1258 = vadd.f32 %v1185, %v1257
      %v1259 = vpop.f32.mrf.mxu0
      %v1260 = vadd.f32 %v1187, %v1259
      %v1261 = vpop.f32.mrf.mxu0
      %v1262 = vadd.f32 %v1189, %v1261
      %v1263 = vpop.f32.mrf.mxu0
      %v1264 = vadd.f32 %v1191, %v1263
      %1265 = vdwg.mxu0
      %1266 = vmatprep.subr.bf16.mxu0 %v958
      %1267 = vmatpush1.bf16.msra.mxu0 %v957
      %1268 = vmatprep.subr.bf16.mxu0 %v956
      %1269 = vmatpush1.bf16.msra.mxu0 %v955
      %1270 = vmatprep.subr.bf16.mxu0 %v954
      %1271 = vmatpush1.bf16.msra.mxu0 %v953
      %1272 = vmatprep.subr.bf16.mxu0 %v952
      %1273 = vmatpush1.bf16.msra.mxu0 %v951
      %1274 = vmatprep.subr.bf16.mxu0 %v950
      %1275 = vmatpush1.bf16.msra.mxu0 %v949
      %1276 = vmatprep.subr.bf16.mxu0 %v948
      %1277 = vmatpush1.bf16.msra.mxu0 %v947
      %1278 = vmatprep.subr.bf16.mxu0 %v946
      %1279 = vmatpush1.bf16.msra.mxu0 %v945
      %1280 = vmatprep.subr.bf16.mxu0 %v944
      %1281 = vmatpush1.bf16.msra.mxu0 %v943
      %1282 = vmatprep.subr.bf16.mxu0 %v974
      %1283 = vmatpush2.bf16.msra.mxu0 %v973
      %1284 = vmatprep.subr.bf16.mxu0 %v972
      %1285 = vmatpush2.bf16.msra.mxu0 %v971
      %1286 = vmatprep.subr.bf16.mxu0 %v970
      %1287 = vmatpush2.bf16.msra.mxu0 %v969
      %1288 = vmatprep.subr.bf16.mxu0 %v968
      %1289 = vmatpush2.bf16.msra.mxu0 %v967
      %1290 = vmatprep.subr.bf16.mxu0 %v966
      %1291 = vmatpush2.bf16.msra.mxu0 %v965
      %1292 = vmatprep.subr.bf16.mxu0 %v964
      %1293 = vmatpush2.bf16.msra.mxu0 %v963
      %1294 = vmatprep.subr.bf16.mxu0 %v962
      %1295 = vmatpush2.bf16.msra.mxu0 %v961
      %1296 = vmatprep.subr.bf16.mxu0 %v960
      %1297 = vmatpush2.bf16.msra.mxu0 %v959
      %1298 = vmatprep.mubr.bf16.mxu0 %v395
      %1299 = vmatmul.mubr.bf16.gmra.mxu0 %v394
      %v1300 = vpop.f32.mrf.mxu0
      %v1301 = vadd.f32 %v1228, %v1300
      %v1302 = vpop.f32.mrf.mxu0
      %v1303 = vadd.f32 %v1230, %v1302
      %v1304 = vpop.f32.mrf.mxu0
      %v1305 = vadd.f32 %v1232, %v1304
      %v1306 = vpop.f32.mrf.mxu0
      %v1307 = vadd.f32 %v1234, %v1306
      %1308 = vmatprep.mubr.bf16.mxu0 %v403
      %1309 = vmatmul.mubr.bf16.gmra.mxu0 %v402
      %v1310 = vpop.f32.mrf.mxu0
      %v1311 = vadd.f32 %v1238, %v1310
      %v1312 = vpop.f32.mrf.mxu0
      %v1313 = vadd.f32 %v1240, %v1312
      %v1314 = vpop.f32.mrf.mxu0
      %v1315 = vadd.f32 %v1242, %v1314
      %v1316 = vpop.f32.mrf.mxu0
      %v1317 = vadd.f32 %v1244, %v1316
      %1318 = vmatprep.mubr.bf16.mxu0 %v411
      %1319 = vmatmul.mubr.bf16.gmra.mxu0 %v410
      %v1320 = vpop.f32.mrf.mxu0
      %v1321 = vadd.f32 %v1248, %v1320
      %v1322 = vpop.f32.mrf.mxu0
      %v1323 = vadd.f32 %v1250, %v1322
      %v1324 = vpop.f32.mrf.mxu0
      %v1325 = vadd.f32 %v1252, %v1324
      %v1326 = vpop.f32.mrf.mxu0
      %v1327 = vadd.f32 %v1254, %v1326
      %1328 = vmatprep.mubr.bf16.mxu0 %v419
      %1329 = vmatmul.mubr.bf16.gmra.mxu0 %v418
      %v1330 = vpop.f32.mrf.mxu0
      %v1331 = vadd.f32 %v1258, %v1330
      %v1332 = vpop.f32.mrf.mxu0
      %v1333 = vadd.f32 %v1260, %v1332
      %v1334 = vpop.f32.mrf.mxu0
      %v1335 = vadd.f32 %v1262, %v1334
      %v1336 = vpop.f32.mrf.mxu0
      %v1337 = vadd.f32 %v1264, %v1336
      %1338 = vdwg.mxu0
      %1339 = vmatprep.subr.bf16.mxu0 %v990
      %1340 = vmatpush1.bf16.msra.mxu0 %v989
      %1341 = vmatprep.subr.bf16.mxu0 %v988
      %1342 = vmatpush1.bf16.msra.mxu0 %v987
      %1343 = vmatprep.subr.bf16.mxu0 %v986
      %1344 = vmatpush1.bf16.msra.mxu0 %v985
      %1345 = vmatprep.subr.bf16.mxu0 %v984
      %1346 = vmatpush1.bf16.msra.mxu0 %v983
      %1347 = vmatprep.subr.bf16.mxu0 %v982
      %1348 = vmatpush1.bf16.msra.mxu0 %v981
      %1349 = vmatprep.subr.bf16.mxu0 %v980
      %1350 = vmatpush1.bf16.msra.mxu0 %v979
      %1351 = vmatprep.subr.bf16.mxu0 %v978
      %1352 = vmatpush1.bf16.msra.mxu0 %v977
      %1353 = vmatprep.subr.bf16.mxu0 %v976
      %1354 = vmatpush1.bf16.msra.mxu0 %v975
      %1355 = vmatprep.subr.bf16.mxu0 0
      %1356 = vmatpush2.bf16.msra.mxu0 0
      %1357 = vmatprep.subr.bf16.mxu0 0
      %1358 = vmatpush2.bf16.msra.mxu0 0
      %1359 = vmatprep.subr.bf16.mxu0 0
      %1360 = vmatpush2.bf16.msra.mxu0 0
      %1361 = vmatprep.subr.bf16.mxu0 0
      %1362 = vmatpush2.bf16.msra.mxu0 0
      %1363 = vmatprep.subr.bf16.mxu0 0
      %1364 = vmatpush2.bf16.msra.mxu0 0
      %1365 = vmatprep.subr.bf16.mxu0 0
      %1366 = vmatpush2.bf16.msra.mxu0 0
      %1367 = vmatprep.subr.bf16.mxu0 0
      %1368 = vmatpush2.bf16.msra.mxu0 0
      %1369 = vmatprep.subr.bf16.mxu0 %v992
      %1370 = vmatpush2.bf16.msra.mxu0 %v991
      %1371 = vmatprep.mubr.bf16.mxu0 %v1109
      %1372 = vmatmul.mubr.bf16.gmra.mxu0 %v396
      %v1373 = vpop.f32.mrf.mxu0
      %v1374 = vadd.f32 %v1301, %v1373
      %v1375 = vpop.f32.mrf.mxu0
      %v1376 = vadd.f32 %v1303, %v1375
      %v1377 = vpop.f32.mrf.mxu0
      %v1378 = vadd.f32 %v1305, %v1377
      %v1379 = vpop.f32.mrf.mxu0
      %v1380 = vadd.f32 %v1307, %v1379
      %1381 = vmatprep.mubr.bf16.mxu0 %v1112
      %1382 = vmatmul.mubr.bf16.gmra.mxu0 %v404
      %v1383 = vpop.f32.mrf.mxu0
      %v1384 = vadd.f32 %v1311, %v1383
      %v1385 = vpop.f32.mrf.mxu0
      %v1386 = vadd.f32 %v1313, %v1385
      %v1387 = vpop.f32.mrf.mxu0
      %v1388 = vadd.f32 %v1315, %v1387
      %v1389 = vpop.f32.mrf.mxu0
      %v1390 = vadd.f32 %v1317, %v1389
      %1391 = vmatprep.mubr.bf16.mxu0 %v1115
      %1392 = vmatmul.mubr.bf16.gmra.mxu0 %v412
      %v1393 = vpop.f32.mrf.mxu0
      %v1394 = vadd.f32 %v1321, %v1393
      %v1395 = vpop.f32.mrf.mxu0
      %v1396 = vadd.f32 %v1323, %v1395
      %v1397 = vpop.f32.mrf.mxu0
      %v1398 = vadd.f32 %v1325, %v1397
      %v1399 = vpop.f32.mrf.mxu0
      %v1400 = vadd.f32 %v1327, %v1399
      %1401 = vmatprep.mubr.bf16.mxu0 %v1118
      %1402 = vmatmul.mubr.bf16.gmra.mxu0 %v420
      %v1403 = vpop.f32.mrf.mxu0
      %v1404 = vadd.f32 %v1331, %v1403
      %v1405 = vpop.f32.mrf.mxu0
      %v1406 = vadd.f32 %v1333, %v1405
      %v1407 = vpop.f32.mrf.mxu0
      %v1408 = vadd.f32 %v1335, %v1407
      %v1409 = vpop.f32.mrf.mxu0
      %v1410 = vadd.f32 %v1337, %v1409
      %1411 = vdwg.mxu0
      %v1526 = vunpack.c.l.b16 %v268
      %v1527 = vunpack.c.h.b16 %v268
      %v1528 = vunpack.c.l.b16 %v269
      %v1529 = vunpack.c.h.b16 %v269
      %v1530 = vunpack.c.l.b16 %v270
      %v1531 = vunpack.c.h.b16 %v270
      %v1532 = vunpack.c.l.b16 %v271
      %v1533 = vunpack.c.h.b16 %v271
      %v1534 = vunpack.c.l.b16 %v272
      %v1535 = vunpack.c.h.b16 %v272
      %v1536 = vunpack.c.l.b16 %v273
      %v1537 = vunpack.c.h.b16 %v273
      %v1538 = vunpack.c.l.b16 %v274
      %v1539 = vunpack.c.h.b16 %v274
      %v1540 = vunpack.c.l.b16 %v275
      %v1541 = vunpack.c.h.b16 %v275
      %v1542 = vunpack.c.l.b16 %v276
      %v1543 = vunpack.c.h.b16 %v276
      %v1544 = vunpack.c.l.b16 %v277
      %v1545 = vunpack.c.h.b16 %v277
      %v1546 = vunpack.c.l.b16 %v278
      %v1547 = vunpack.c.h.b16 %v278
      %v1548 = vunpack.c.l.b16 %v279
      %v1549 = vunpack.c.h.b16 %v279
      %v1550 = vunpack.c.l.b16 %v280
      %v1551 = vunpack.c.h.b16 %v280
      %v1552 = vunpack.c.l.b16 %v281
      %v1553 = vunpack.c.h.b16 %v281
      %v1554 = vunpack.c.l.b16 %v282
      %v1555 = vunpack.c.h.b16 %v282
      %v1556 = vunpack.c.l.b16 %v283
      %v1557 = vunpack.c.h.b16 %v283
      %v1558 = vunpack.c.l.b16 %v284
      %v1559 = vunpack.c.h.b16 %v284
      %v1560 = vunpack.c.l.b16 %v285
      %v1561 = vunpack.c.h.b16 %v285
      %v1562 = vunpack.c.l.b16 %v286
      %v1563 = vunpack.c.h.b16 %v286
      %v1564 = vunpack.c.l.b16 %v287
      %v1565 = vunpack.c.h.b16 %v287
      %v1566 = vunpack.c.l.b16 %v288
      %v1567 = vunpack.c.h.b16 %v288
      %v1568 = vunpack.c.l.b16 %v289
      %v1569 = vunpack.c.h.b16 %v289
      %v1570 = vunpack.c.l.b16 %v290
      %v1571 = vunpack.c.h.b16 %v290
      %v1572 = vunpack.c.l.b16 %v291
      %v1573 = vunpack.c.h.b16 %v291
      %v1574 = vunpack.c.l.b16 %v292
      %v1575 = vunpack.c.h.b16 %v292
      %v1576 = vunpack.c.l.b16 %v293
      %v1577 = vunpack.c.h.b16 %v293
      %v1578 = vunpack.c.l.b16 %v294
      %v1579 = vunpack.c.h.b16 %v294
      %v1580 = vunpack.c.l.b16 %v295
      %v1581 = vunpack.c.h.b16 %v295
      %v1582 = vunpack.c.l.b16 %v296
      %v1583 = vunpack.c.h.b16 %v296
      %v1584 = vunpack.c.l.b16 %v297
      %v1585 = vunpack.c.h.b16 %v297
      %v1586 = vunpack.c.l.b16 %v298
      %v1587 = vunpack.c.h.b16 %v298
      %v1588 = vunpack.c.l.b16 %v299
      %v1589 = vunpack.c.h.b16 %v299
      %v1590 = vunpack.c.l.b16 %v300
      %v1591 = vunpack.c.h.b16 %v300
      %v1592 = vunpack.c.l.b16 %v301
      %v1593 = vunpack.c.h.b16 %v301
      %v1594 = vunpack.c.l.b16 %v302
      %v1595 = vunpack.c.h.b16 %v302
      %v1596 = vunpack.c.l.b16 %v303
      %v1597 = vunpack.c.h.b16 %v303
      %v1598 = vunpack.c.l.b16 %v304
      %v1599 = vunpack.c.h.b16 %v304
      %v1600 = vunpack.c.l.b16 %v305
      %v1601 = vunpack.c.h.b16 %v305
      %v1602 = vunpack.c.l.b16 %v306
      %v1603 = vunpack.c.h.b16 %v306
      %v1604 = vunpack.c.l.b16 %v307
      %v1605 = vunpack.c.h.b16 %v307
      %v1606 = vunpack.c.l.b16 %v308
      %v1607 = vunpack.c.h.b16 %v308
      %v1608 = vunpack.c.l.b16 %v309
      %v1609 = vunpack.c.h.b16 %v309
      %v1610 = vunpack.c.l.b16 %v310
      %v1611 = vunpack.c.h.b16 %v310
      %v1612 = vunpack.c.l.b16 %v311
      %v1613 = vunpack.c.h.b16 %v311
      %v1614 = vunpack.c.l.b16 %v312
      %v1615 = vunpack.c.h.b16 %v312
      %v1616 = vunpack.c.l.b16 %v313
      %v1617 = vunpack.c.h.b16 %v313
      %v1618 = vunpack.c.l.b16 %v314
      %v1619 = vunpack.c.h.b16 %v314
      %v1620 = vunpack.c.l.b16 %v315
      %v1621 = vunpack.c.h.b16 %v315
      %v1622 = vunpack.c.l.b16 %v316
      %v1623 = vunpack.c.h.b16 %v316
      %v1624 = vunpack.c.l.b16 %v317
      %v1625 = vunpack.c.h.b16 %v317
      %v1626 = vunpack.c.l.b16 %v318
      %v1627 = vunpack.c.h.b16 %v318
      %v1628 = vunpack.c.l.b16 %v319
      %v1629 = vunpack.c.h.b16 %v319
      %v1630 = vunpack.c.l.b16 %v320
      %v1631 = vunpack.c.h.b16 %v320
      %v1632 = vunpack.c.l.b16 %v321
      %v1633 = vunpack.c.h.b16 %v321
      %v1634 = vunpack.c.l.b16 %v322
      %v1635 = vunpack.c.h.b16 %v322
      %v1636 = vunpack.c.l.b16 %v323
      %v1637 = vunpack.c.h.b16 %v323
      %v1638 = vunpack.c.l.b16 %v324
      %v1639 = vunpack.c.h.b16 %v324
      %v1640 = vunpack.c.l.b16 %v325
      %v1641 = vunpack.c.h.b16 %v325
      %v1642 = vunpack.c.l.b16 %v326
      %v1643 = vunpack.c.h.b16 %v326
      %v1644 = vunpack.c.l.b16 %v327
      %v1645 = vunpack.c.h.b16 %v327
      %v1646 = vunpack.c.l.b16 %v328
      %v1647 = vunpack.c.h.b16 %v328
      %v1648 = vunpack.c.l.b16 %v329
      %v1649 = vunpack.c.h.b16 %v329
      %v1650 = vunpack.c.l.b16 %v330
      %v1651 = vunpack.c.h.b16 %v330
      %v1652 = vunpack.c.l.b16 %v331
      %v1653 = vunpack.c.h.b16 %v331
      %v1654 = vunpack.c.l.b16 %v332
      %v1655 = vunpack.c.h.b16 %v332
      %v1656 = vunpack.c.l.b16 %v333
      %v1657 = vunpack.c.h.b16 %v333
      %v1658 = vunpack.c.l.b16 %v334
      %v1659 = vunpack.c.h.b16 %v334
      %v1660 = vunpack.c.l.b16 %v335
      %v1661 = vunpack.c.h.b16 %v335
      %v1662 = vunpack.c.l.b16 %v336
      %v1663 = vunpack.c.h.b16 %v336
      %v1664 = vunpack.c.l.b16 %v337
      %v1665 = vunpack.c.h.b16 %v337
      %v1666 = vunpack.c.l.b16 %v338
      %v1667 = vunpack.c.h.b16 %v338
      %v1668 = vunpack.c.l.b16 %v339
      %v1669 = vunpack.c.h.b16 %v339
      %v1670 = vunpack.c.l.b16 %v340
      %v1671 = vunpack.c.h.b16 %v340
      %v1672 = vunpack.c.l.b16 %v341
      %v1673 = vunpack.c.h.b16 %v341
      %v1674 = vunpack.c.l.b16 %v342
      %v1675 = vunpack.c.h.b16 %v342
      %v1676 = vunpack.c.l.b16 %v343
      %v1677 = vunpack.c.h.b16 %v343
      %v1678 = vunpack.c.l.b16 %v344
      %v1679 = vunpack.c.h.b16 %v344
      %v1680 = vunpack.c.l.b16 %v345
      %v1681 = vunpack.c.h.b16 %v345
      %v1682 = vunpack.c.l.b16 %v346
      %v1683 = vunpack.c.h.b16 %v346
      %v1684 = vunpack.c.l.b16 %v347
      %v1685 = vunpack.c.h.b16 %v347
      %v1686 = vunpack.c.l.b16 %v348
      %v1687 = vunpack.c.h.b16 %v348
      %v1688 = vunpack.c.l.b16 %v349
      %v1689 = vunpack.c.h.b16 %v349
      %v1690 = vunpack.c.l.b16 %v350
      %v1691 = vunpack.c.h.b16 %v350
      %v1692 = vunpack.c.l.b16 %v351
      %v1693 = vunpack.c.h.b16 %v351
      %v1694 = vunpack.c.l.b16 %v352
      %v1695 = vunpack.c.h.b16 %v352
      %v1696 = vunpack.c.l.b16 %v353
      %v1697 = vunpack.c.h.b16 %v353
      %v1698 = vunpack.c.l.b16 %v354
      %v1699 = vunpack.c.h.b16 %v354
      %v1700 = vunpack.c.l.b16 %v355
      %v1701 = vunpack.c.h.b16 %v355
      %v1702 = vunpack.c.l.b16 %v356
      %v1703 = vunpack.c.h.b16 %v356
      %v1704 = vunpack.c.l.b16 %v357
      %v1705 = vunpack.c.h.b16 %v357
      %v1706 = vunpack.c.l.b16 %v358
      %v1707 = vunpack.c.h.b16 %v358
      %v1708 = vunpack.c.l.b16 %v359
      %v1709 = vunpack.c.h.b16 %v359
      %v1710 = vunpack.c.l.b16 %v360
      %v1711 = vunpack.c.h.b16 %v360
      %v1712 = vunpack.c.l.b16 %v361
      %v1713 = vunpack.c.h.b16 %v361
      %v1714 = vunpack.c.l.b16 %v362
      %v1715 = vunpack.c.h.b16 %v362
      %v1716 = vunpack.c.l.b16 %v363
      %v1717 = vunpack.c.h.b16 %v363
      %v1718 = vunpack.c.l.b16 %v364
      %v1719 = vunpack.c.h.b16 %v364
      %v1720 = vunpack.c.l.b16 %v365
      %v1721 = vunpack.c.h.b16 %v365
      %v1722 = vunpack.c.l.b16 %v366
      %v1723 = vunpack.c.h.b16 %v366
      %v1724 = vunpack.c.l.b16 %v367
      %v1725 = vunpack.c.h.b16 %v367
      %v1726 = vunpack.c.l.b16 %v368
      %v1727 = vunpack.c.h.b16 %v368
      %v1728 = vunpack.c.l.b16 %v369
      %v1729 = vunpack.c.h.b16 %v369
      %v1730 = vunpack.c.l.b16 %v370
      %v1731 = vunpack.c.h.b16 %v370
      %v1732 = vunpack.c.l.b16 %v371
      %v1733 = vunpack.c.h.b16 %v371
      %v1734 = vunpack.c.l.b16 %v372
      %v1735 = vunpack.c.h.b16 %v372
      %v1736 = vunpack.c.l.b16 %v373
      %v1737 = vunpack.c.h.b16 %v373
      %v1738 = vunpack.c.l.b16 %v374
      %v1739 = vunpack.c.h.b16 %v374
      %v1740 = vunpack.c.l.b16 %v375
      %v1741 = vunpack.c.h.b16 %v375
      %v1742 = vunpack.c.l.b16 %v376
      %v1743 = vunpack.c.h.b16 %v376
      %v1744 = vunpack.c.l.b16 %v377
      %v1745 = vunpack.c.h.b16 %v377
      %v1746 = vunpack.c.l.b16 %v378
      %v1747 = vunpack.c.h.b16 %v378
      %v1748 = vunpack.c.l.b16 %v379
      %v1749 = vunpack.c.h.b16 %v379
      %v1750 = vunpack.c.l.b16 %v380
      %v1751 = vunpack.c.h.b16 %v380
      %v1752 = vunpack.c.l.b16 %v381
      %v1753 = vunpack.c.h.b16 %v381
      %v1754 = vpack.c.b16 %v1528, %v1526
      %v1755 = vpack.c.b16 %v1529, %v1527
      %v1756 = vpack.c.b16 %v1532, %v1530
      %v1757 = vpack.c.b16 %v1533, %v1531
      %v1758 = vpack.c.b16 %v1536, %v1534
      %v1759 = vpack.c.b16 %v1537, %v1535
      %v1760 = vpack.c.b16 %v1540, %v1538
      %v1761 = vpack.c.b16 %v1541, %v1539
      %v1762 = vpack.c.b16 %v1544, %v1542
      %v1763 = vpack.c.b16 %v1545, %v1543
      %v1764 = vpack.c.b16 %v1548, %v1546
      %v1765 = vpack.c.b16 %v1549, %v1547
      %v1766 = vpack.c.b16 %v1552, %v1550
      %v1767 = vpack.c.b16 %v1553, %v1551
      %v1768 = vpack.c.b16 %v1556, %v1554
      %v1769 = vpack.c.b16 %v1557, %v1555
      %v1770 = vpack.c.b16 %v1560, %v1558
      %v1771 = vpack.c.b16 %v1561, %v1559
      %v1772 = vpack.c.b16 %v1564, %v1562
      %v1773 = vpack.c.b16 %v1565, %v1563
      %v1774 = vpack.c.b16 %v1568, %v1566
      %v1775 = vpack.c.b16 %v1569, %v1567
      %v1776 = vpack.c.b16 %v1572, %v1570
      %v1777 = vpack.c.b16 %v1573, %v1571
      %v1778 = vpack.c.b16 %v1576, %v1574
      %v1779 = vpack.c.b16 %v1577, %v1575
      %v1780 = vpack.c.b16 %v1580, %v1578
      %v1781 = vpack.c.b16 %v1581, %v1579
      %v1782 = vpack.c.b16 %v1584, %v1582
      %v1783 = vpack.c.b16 %v1585, %v1583
      %v1784 = vpack.c.b16 %v1588, %v1586
      %v1785 = vpack.c.b16 %v1589, %v1587
      %v1786 = vpack.c.b16 %v1592, %v1590
      %v1787 = vpack.c.b16 %v1593, %v1591
      %v1788 = vpack.c.b16 %v1596, %v1594
      %v1789 = vpack.c.b16 %v1597, %v1595
      %v1790 = vpack.c.b16 %v1600, %v1598
      %v1791 = vpack.c.b16 %v1601, %v1599
      %v1792 = vpack.c.b16 %v1604, %v1602
      %v1793 = vpack.c.b16 %v1605, %v1603
      %v1794 = vpack.c.b16 %v1608, %v1606
      %v1795 = vpack.c.b16 %v1609, %v1607
      %v1796 = vpack.c.b16 %v1612, %v1610
      %v1797 = vpack.c.b16 %v1613, %v1611
      %v1798 = vpack.c.b16 %v1616, %v1614
      %v1799 = vpack.c.b16 %v1617, %v1615
      %v1800 = vpack.c.b16 %v1620, %v1618
      %v1801 = vpack.c.b16 %v1621, %v1619
      %v1802 = vpack.c.b16 %v1624, %v1622
      %v1803 = vpack.c.b16 %v1625, %v1623
      %v1804 = vpack.c.b16 %v1628, %v1626
      %v1805 = vpack.c.b16 %v1629, %v1627
      %v1806 = vpack.c.b16 %v1632, %v1630
      %v1807 = vpack.c.b16 %v1633, %v1631
      %v1808 = vpack.c.b16 %v1636, %v1634
      %v1809 = vpack.c.b16 %v1637, %v1635
      %v1810 = vpack.c.b16 %v1640, %v1638
      %v1811 = vpack.c.b16 %v1641, %v1639
      %v1812 = vpack.c.b16 %v1644, %v1642
      %v1813 = vpack.c.b16 %v1645, %v1643
      %v1814 = vpack.c.b16 %v1648, %v1646
      %v1815 = vpack.c.b16 %v1649, %v1647
      %v1816 = vpack.c.b16 %v1652, %v1650
      %v1817 = vpack.c.b16 %v1653, %v1651
      %v1818 = vpack.c.b16 %v1656, %v1654
      %v1819 = vpack.c.b16 %v1657, %v1655
      %v1820 = vpack.c.b16 %v1660, %v1658
      %v1821 = vpack.c.b16 %v1661, %v1659
      %v1822 = vpack.c.b16 %v1664, %v1662
      %v1823 = vpack.c.b16 %v1665, %v1663
      %v1824 = vpack.c.b16 %v1668, %v1666
      %v1825 = vpack.c.b16 %v1669, %v1667
      %v1826 = vpack.c.b16 %v1672, %v1670
      %v1827 = vpack.c.b16 %v1673, %v1671
      %v1828 = vpack.c.b16 %v1676, %v1674
      %v1829 = vpack.c.b16 %v1677, %v1675
      %v1830 = vpack.c.b16 %v1680, %v1678
      %v1831 = vpack.c.b16 %v1681, %v1679
      %v1832 = vpack.c.b16 %v1684, %v1682
      %v1833 = vpack.c.b16 %v1685, %v1683
      %v1834 = vpack.c.b16 %v1688, %v1686
      %v1835 = vpack.c.b16 %v1689, %v1687
      %v1836 = vpack.c.b16 %v1692, %v1690
      %v1837 = vpack.c.b16 %v1693, %v1691
      %v1838 = vpack.c.b16 %v1696, %v1694
      %v1839 = vpack.c.b16 %v1697, %v1695
      %v1840 = vpack.c.b16 %v1700, %v1698
      %v1841 = vpack.c.b16 %v1701, %v1699
      %v1842 = vpack.c.b16 %v1704, %v1702
      %v1843 = vpack.c.b16 %v1705, %v1703
      %v1844 = vpack.c.b16 %v1708, %v1706
      %v1845 = vpack.c.b16 %v1709, %v1707
      %v1846 = vpack.c.b16 %v1712, %v1710
      %v1847 = vpack.c.b16 %v1713, %v1711
      %v1848 = vpack.c.b16 %v1716, %v1714
      %v1849 = vpack.c.b16 %v1717, %v1715
      %v1850 = vpack.c.b16 %v1720, %v1718
      %v1851 = vpack.c.b16 %v1721, %v1719
      %v1852 = vpack.c.b16 %v1724, %v1722
      %v1853 = vpack.c.b16 %v1725, %v1723
      %v1854 = vpack.c.b16 %v1728, %v1726
      %v1855 = vpack.c.b16 %v1729, %v1727
      %v1856 = vpack.c.b16 %v1732, %v1730
      %v1857 = vpack.c.b16 %v1733, %v1731
      %v1858 = vpack.c.b16 %v1736, %v1734
      %v1859 = vpack.c.b16 %v1737, %v1735
      %v1860 = vpack.c.b16 %v1740, %v1738
      %v1861 = vpack.c.b16 %v1741, %v1739
      %v1862 = vpack.c.b16 %v1744, %v1742
      %v1863 = vpack.c.b16 %v1745, %v1743
      %v1864 = vpack.c.b16 %v1748, %v1746
      %v1865 = vpack.c.b16 %v1749, %v1747
      %v1866 = vpack.c.b16 %v1752, %v1750
      %v1867 = vpack.c.b16 %v1753, %v1751
      %v1983 = vsel %vm1107, %v243, 0
      %v1986 = vsel %vm1107, %v251, 0
      %v1989 = vsel %vm1107, %v259, 0
      %v1992 = vsel %vm1107, %v267, 0
      %1994 = vmatprep.subr.bf16.mxu0 %v1769
      %1995 = vmatpush1.bf16.msra.mxu0 %v1768
      %1996 = vmatprep.subr.bf16.mxu0 %v1767
      %1997 = vmatpush1.bf16.msra.mxu0 %v1766
      %1998 = vmatprep.subr.bf16.mxu0 %v1765
      %1999 = vmatpush1.bf16.msra.mxu0 %v1764
      %2000 = vmatprep.subr.bf16.mxu0 %v1763
      %2001 = vmatpush1.bf16.msra.mxu0 %v1762
      %2002 = vmatprep.subr.bf16.mxu0 %v1761
      %2003 = vmatpush1.bf16.msra.mxu0 %v1760
      %2004 = vmatprep.subr.bf16.mxu0 %v1759
      %2005 = vmatpush1.bf16.msra.mxu0 %v1758
      %2006 = vmatprep.subr.bf16.mxu0 %v1757
      %2007 = vmatpush1.bf16.msra.mxu0 %v1756
      %2008 = vmatprep.subr.bf16.mxu0 %v1755
      %2009 = vmatpush1.bf16.msra.mxu0 %v1754
      %2010 = vmatprep.subr.bf16.mxu0 %v1785
      %2011 = vmatpush2.bf16.msra.mxu0 %v1784
      %2012 = vmatprep.subr.bf16.mxu0 %v1783
      %2013 = vmatpush2.bf16.msra.mxu0 %v1782
      %2014 = vmatprep.subr.bf16.mxu0 %v1781
      %2015 = vmatpush2.bf16.msra.mxu0 %v1780
      %2016 = vmatprep.subr.bf16.mxu0 %v1779
      %2017 = vmatpush2.bf16.msra.mxu0 %v1778
      %2018 = vmatprep.subr.bf16.mxu0 %v1777
      %2019 = vmatpush2.bf16.msra.mxu0 %v1776
      %2020 = vmatprep.subr.bf16.mxu0 %v1775
      %2021 = vmatpush2.bf16.msra.mxu0 %v1774
      %2022 = vmatprep.subr.bf16.mxu0 %v1773
      %2023 = vmatpush2.bf16.msra.mxu0 %v1772
      %2024 = vmatprep.subr.bf16.mxu0 %v1771
      %2025 = vmatpush2.bf16.msra.mxu0 %v1770
      %2026 = vmatprep.mubr.bf16.mxu0 %v237
      %2027 = vmatmul.mubr.bf16.gmra.mxu0 %v236
      %v2028 = vpop.f32.mrf.mxu0
      %v2029 = vadd.f32 %v1374, %v2028
      %v2030 = vpop.f32.mrf.mxu0
      %v2031 = vadd.f32 %v1376, %v2030
      %v2032 = vpop.f32.mrf.mxu0
      %v2033 = vadd.f32 %v1378, %v2032
      %v2034 = vpop.f32.mrf.mxu0
      %v2035 = vadd.f32 %v1380, %v2034
      %2036 = vmatprep.mubr.bf16.mxu0 %v245
      %2037 = vmatmul.mubr.bf16.gmra.mxu0 %v244
      %v2038 = vpop.f32.mrf.mxu0
      %v2039 = vadd.f32 %v1384, %v2038
      %v2040 = vpop.f32.mrf.mxu0
      %v2041 = vadd.f32 %v1386, %v2040
      %v2042 = vpop.f32.mrf.mxu0
      %v2043 = vadd.f32 %v1388, %v2042
      %v2044 = vpop.f32.mrf.mxu0
      %v2045 = vadd.f32 %v1390, %v2044
      %2046 = vmatprep.mubr.bf16.mxu0 %v253
      %2047 = vmatmul.mubr.bf16.gmra.mxu0 %v252
      %v2048 = vpop.f32.mrf.mxu0
      %v2049 = vadd.f32 %v1394, %v2048
      %v2050 = vpop.f32.mrf.mxu0
      %v2051 = vadd.f32 %v1396, %v2050
      %v2052 = vpop.f32.mrf.mxu0
      %v2053 = vadd.f32 %v1398, %v2052
      %v2054 = vpop.f32.mrf.mxu0
      %v2055 = vadd.f32 %v1400, %v2054
      %2056 = vmatprep.mubr.bf16.mxu0 %v261
      %2057 = vmatmul.mubr.bf16.gmra.mxu0 %v260
      %v2058 = vpop.f32.mrf.mxu0
      %v2059 = vadd.f32 %v1404, %v2058
      %v2060 = vpop.f32.mrf.mxu0
      %v2061 = vadd.f32 %v1406, %v2060
      %v2062 = vpop.f32.mrf.mxu0
      %v2063 = vadd.f32 %v1408, %v2062
      %v2064 = vpop.f32.mrf.mxu0
      %v2065 = vadd.f32 %v1410, %v2064
      %2066 = vdwg.mxu0
      %2067 = vmatprep.subr.bf16.mxu0 %v1801
      %2068 = vmatpush1.bf16.msra.mxu0 %v1800
      %2069 = vmatprep.subr.bf16.mxu0 %v1799
      %2070 = vmatpush1.bf16.msra.mxu0 %v1798
      %2071 = vmatprep.subr.bf16.mxu0 %v1797
      %2072 = vmatpush1.bf16.msra.mxu0 %v1796
      %2073 = vmatprep.subr.bf16.mxu0 %v1795
      %2074 = vmatpush1.bf16.msra.mxu0 %v1794
      %2075 = vmatprep.subr.bf16.mxu0 %v1793
      %2076 = vmatpush1.bf16.msra.mxu0 %v1792
      %2077 = vmatprep.subr.bf16.mxu0 %v1791
      %2078 = vmatpush1.bf16.msra.mxu0 %v1790
      %2079 = vmatprep.subr.bf16.mxu0 %v1789
      %2080 = vmatpush1.bf16.msra.mxu0 %v1788
      %2081 = vmatprep.subr.bf16.mxu0 %v1787
      %2082 = vmatpush1.bf16.msra.mxu0 %v1786
      %2083 = vmatprep.subr.bf16.mxu0 %v1817
      %2084 = vmatpush2.bf16.msra.mxu0 %v1816
      %2085 = vmatprep.subr.bf16.mxu0 %v1815
      %2086 = vmatpush2.bf16.msra.mxu0 %v1814
      %2087 = vmatprep.subr.bf16.mxu0 %v1813
      %2088 = vmatpush2.bf16.msra.mxu0 %v1812
      %2089 = vmatprep.subr.bf16.mxu0 %v1811
      %2090 = vmatpush2.bf16.msra.mxu0 %v1810
      %2091 = vmatprep.subr.bf16.mxu0 %v1809
      %2092 = vmatpush2.bf16.msra.mxu0 %v1808
      %2093 = vmatprep.subr.bf16.mxu0 %v1807
      %2094 = vmatpush2.bf16.msra.mxu0 %v1806
      %2095 = vmatprep.subr.bf16.mxu0 %v1805
      %2096 = vmatpush2.bf16.msra.mxu0 %v1804
      %2097 = vmatprep.subr.bf16.mxu0 %v1803
      %2098 = vmatpush2.bf16.msra.mxu0 %v1802
      %2099 = vmatprep.mubr.bf16.mxu0 %v239
      %2100 = vmatmul.mubr.bf16.gmra.mxu0 %v238
      %v2101 = vpop.f32.mrf.mxu0
      %v2102 = vadd.f32 %v2029, %v2101
      %v2103 = vpop.f32.mrf.mxu0
      %v2104 = vadd.f32 %v2031, %v2103
      %v2105 = vpop.f32.mrf.mxu0
      %v2106 = vadd.f32 %v2033, %v2105
      %v2107 = vpop.f32.mrf.mxu0
      %v2108 = vadd.f32 %v2035, %v2107
      %2109 = vmatprep.mubr.bf16.mxu0 %v247
      %2110 = vmatmul.mubr.bf16.gmra.mxu0 %v246
      %v2111 = vpop.f32.mrf.mxu0
      %v2112 = vadd.f32 %v2039, %v2111
      %v2113 = vpop.f32.mrf.mxu0
      %v2114 = vadd.f32 %v2041, %v2113
      %v2115 = vpop.f32.mrf.mxu0
      %v2116 = vadd.f32 %v2043, %v2115
      %v2117 = vpop.f32.mrf.mxu0
      %v2118 = vadd.f32 %v2045, %v2117
      %2119 = vmatprep.mubr.bf16.mxu0 %v255
      %2120 = vmatmul.mubr.bf16.gmra.mxu0 %v254
      %v2121 = vpop.f32.mrf.mxu0
      %v2122 = vadd.f32 %v2049, %v2121
      %v2123 = vpop.f32.mrf.mxu0
      %v2124 = vadd.f32 %v2051, %v2123
      %v2125 = vpop.f32.mrf.mxu0
      %v2126 = vadd.f32 %v2053, %v2125
      %v2127 = vpop.f32.mrf.mxu0
      %v2128 = vadd.f32 %v2055, %v2127
      %2129 = vmatprep.mubr.bf16.mxu0 %v263
      %2130 = vmatmul.mubr.bf16.gmra.mxu0 %v262
      %v2131 = vpop.f32.mrf.mxu0
      %v2132 = vadd.f32 %v2059, %v2131
      %v2133 = vpop.f32.mrf.mxu0
      %v2134 = vadd.f32 %v2061, %v2133
      %v2135 = vpop.f32.mrf.mxu0
      %v2136 = vadd.f32 %v2063, %v2135
      %v2137 = vpop.f32.mrf.mxu0
      %v2138 = vadd.f32 %v2065, %v2137
      %2139 = vdwg.mxu0
      %2140 = vmatprep.subr.bf16.mxu0 %v1833
      %2141 = vmatpush1.bf16.msra.mxu0 %v1832
      %2142 = vmatprep.subr.bf16.mxu0 %v1831
      %2143 = vmatpush1.bf16.msra.mxu0 %v1830
      %2144 = vmatprep.subr.bf16.mxu0 %v1829
      %2145 = vmatpush1.bf16.msra.mxu0 %v1828
      %2146 = vmatprep.subr.bf16.mxu0 %v1827
      %2147 = vmatpush1.bf16.msra.mxu0 %v1826
      %2148 = vmatprep.subr.bf16.mxu0 %v1825
      %2149 = vmatpush1.bf16.msra.mxu0 %v1824
      %2150 = vmatprep.subr.bf16.mxu0 %v1823
      %2151 = vmatpush1.bf16.msra.mxu0 %v1822
      %2152 = vmatprep.subr.bf16.mxu0 %v1821
      %2153 = vmatpush1.bf16.msra.mxu0 %v1820
      %2154 = vmatprep.subr.bf16.mxu0 %v1819
      %2155 = vmatpush1.bf16.msra.mxu0 %v1818
      %2156 = vmatprep.subr.bf16.mxu0 %v1849
      %2157 = vmatpush2.bf16.msra.mxu0 %v1848
      %2158 = vmatprep.subr.bf16.mxu0 %v1847
      %2159 = vmatpush2.bf16.msra.mxu0 %v1846
      %2160 = vmatprep.subr.bf16.mxu0 %v1845
      %2161 = vmatpush2.bf16.msra.mxu0 %v1844
      %2162 = vmatprep.subr.bf16.mxu0 %v1843
      %2163 = vmatpush2.bf16.msra.mxu0 %v1842
      %2164 = vmatprep.subr.bf16.mxu0 %v1841
      %2165 = vmatpush2.bf16.msra.mxu0 %v1840
      %2166 = vmatprep.subr.bf16.mxu0 %v1839
      %2167 = vmatpush2.bf16.msra.mxu0 %v1838
      %2168 = vmatprep.subr.bf16.mxu0 %v1837
      %2169 = vmatpush2.bf16.msra.mxu0 %v1836
      %2170 = vmatprep.subr.bf16.mxu0 %v1835
      %2171 = vmatpush2.bf16.msra.mxu0 %v1834
      %2172 = vmatprep.mubr.bf16.mxu0 %v241
      %2173 = vmatmul.mubr.bf16.gmra.mxu0 %v240
      %v2174 = vpop.f32.mrf.mxu0
      %v2175 = vadd.f32 %v2102, %v2174
      %v2176 = vpop.f32.mrf.mxu0
      %v2177 = vadd.f32 %v2104, %v2176
      %v2178 = vpop.f32.mrf.mxu0
      %v2179 = vadd.f32 %v2106, %v2178
      %v2180 = vpop.f32.mrf.mxu0
      %v2181 = vadd.f32 %v2108, %v2180
      %2182 = vmatprep.mubr.bf16.mxu0 %v249
      %2183 = vmatmul.mubr.bf16.gmra.mxu0 %v248
      %v2184 = vpop.f32.mrf.mxu0
      %v2185 = vadd.f32 %v2112, %v2184
      %v2186 = vpop.f32.mrf.mxu0
      %v2187 = vadd.f32 %v2114, %v2186
      %v2188 = vpop.f32.mrf.mxu0
      %v2189 = vadd.f32 %v2116, %v2188
      %v2190 = vpop.f32.mrf.mxu0
      %v2191 = vadd.f32 %v2118, %v2190
      %2192 = vmatprep.mubr.bf16.mxu0 %v257
      %2193 = vmatmul.mubr.bf16.gmra.mxu0 %v256
      %v2194 = vpop.f32.mrf.mxu0
      %v2195 = vadd.f32 %v2122, %v2194
      %v2196 = vpop.f32.mrf.mxu0
      %v2197 = vadd.f32 %v2124, %v2196
      %v2198 = vpop.f32.mrf.mxu0
      %v2199 = vadd.f32 %v2126, %v2198
      %v2200 = vpop.f32.mrf.mxu0
      %v2201 = vadd.f32 %v2128, %v2200
      %2202 = vmatprep.mubr.bf16.mxu0 %v265
      %2203 = vmatmul.mubr.bf16.gmra.mxu0 %v264
      %v2204 = vpop.f32.mrf.mxu0
      %v2205 = vadd.f32 %v2132, %v2204
      %v2206 = vpop.f32.mrf.mxu0
      %v2207 = vadd.f32 %v2134, %v2206
      %v2208 = vpop.f32.mrf.mxu0
      %v2209 = vadd.f32 %v2136, %v2208
      %v2210 = vpop.f32.mrf.mxu0
      %v2211 = vadd.f32 %v2138, %v2210
      %2212 = vdwg.mxu0
      %2213 = vmatprep.subr.bf16.mxu0 %v1865
      %2214 = vmatpush1.bf16.msra.mxu0 %v1864
      %2215 = vmatprep.subr.bf16.mxu0 %v1863
      %2216 = vmatpush1.bf16.msra.mxu0 %v1862
      %2217 = vmatprep.subr.bf16.mxu0 %v1861
      %2218 = vmatpush1.bf16.msra.mxu0 %v1860
      %2219 = vmatprep.subr.bf16.mxu0 %v1859
      %2220 = vmatpush1.bf16.msra.mxu0 %v1858
      %2221 = vmatprep.subr.bf16.mxu0 %v1857
      %2222 = vmatpush1.bf16.msra.mxu0 %v1856
      %2223 = vmatprep.subr.bf16.mxu0 %v1855
      %2224 = vmatpush1.bf16.msra.mxu0 %v1854
      %2225 = vmatprep.subr.bf16.mxu0 %v1853
      %2226 = vmatpush1.bf16.msra.mxu0 %v1852
      %2227 = vmatprep.subr.bf16.mxu0 %v1851
      %2228 = vmatpush1.bf16.msra.mxu0 %v1850
      %2229 = vmatprep.subr.bf16.mxu0 0
      %2230 = vmatpush2.bf16.msra.mxu0 0
      %2231 = vmatprep.subr.bf16.mxu0 0
      %2232 = vmatpush2.bf16.msra.mxu0 0
      %2233 = vmatprep.subr.bf16.mxu0 0
      %2234 = vmatpush2.bf16.msra.mxu0 0
      %2235 = vmatprep.subr.bf16.mxu0 0
      %2236 = vmatpush2.bf16.msra.mxu0 0
      %2237 = vmatprep.subr.bf16.mxu0 0
      %2238 = vmatpush2.bf16.msra.mxu0 0
      %2239 = vmatprep.subr.bf16.mxu0 0
      %2240 = vmatpush2.bf16.msra.mxu0 0
      %2241 = vmatprep.subr.bf16.mxu0 0
      %2242 = vmatpush2.bf16.msra.mxu0 0
      %2243 = vmatprep.subr.bf16.mxu0 %v1867
      %2244 = vmatpush2.bf16.msra.mxu0 %v1866
      %2245 = vmatprep.mubr.bf16.mxu0 %v1983
      %2246 = vmatmul.mubr.bf16.gmra.mxu0 %v242
      %v2247 = vpop.f32.mrf.mxu0
      %v2248 = vadd.f32 %v2175, %v2247
      %v2249 = vpop.f32.mrf.mxu0
      %v2250 = vadd.f32 %v2177, %v2249
      %v2251 = vpop.f32.mrf.mxu0
      %v2252 = vadd.f32 %v2179, %v2251
      %v2253 = vpop.f32.mrf.mxu0
      %v2254 = vadd.f32 %v2181, %v2253
      %2255 = vmatprep.mubr.bf16.mxu0 %v1986
      %2256 = vmatmul.mubr.bf16.gmra.mxu0 %v250
      %v2257 = vpop.f32.mrf.mxu0
      %v2258 = vadd.f32 %v2185, %v2257
      %v2259 = vpop.f32.mrf.mxu0
      %v2260 = vadd.f32 %v2187, %v2259
      %v2261 = vpop.f32.mrf.mxu0
      %v2262 = vadd.f32 %v2189, %v2261
      %v2263 = vpop.f32.mrf.mxu0
      %v2264 = vadd.f32 %v2191, %v2263
      %2265 = vmatprep.mubr.bf16.mxu0 %v1989
      %2266 = vmatmul.mubr.bf16.gmra.mxu0 %v258
      %v2267 = vpop.f32.mrf.mxu0
      %v2268 = vadd.f32 %v2195, %v2267
      %v2269 = vpop.f32.mrf.mxu0
      %v2270 = vadd.f32 %v2197, %v2269
      %v2271 = vpop.f32.mrf.mxu0
      %v2272 = vadd.f32 %v2199, %v2271
      %v2273 = vpop.f32.mrf.mxu0
      %v2274 = vadd.f32 %v2201, %v2273
      %2275 = vmatprep.mubr.bf16.mxu0 %v1992
      %2276 = vmatmul.mubr.bf16.gmra.mxu0 %v266
      %v2277 = vpop.f32.mrf.mxu0
      %v2278 = vadd.f32 %v2205, %v2277
      %v2279 = vpop.f32.mrf.mxu0
      %v2280 = vadd.f32 %v2207, %v2279
      %v2281 = vpop.f32.mrf.mxu0
      %v2282 = vadd.f32 %v2209, %v2281
      %v2283 = vpop.f32.mrf.mxu0
      %v2284 = vadd.f32 %v2211, %v2283
      %2285 = vdwg.mxu0
      %v2286 = vld [vmem:[%s165 + $0x80] sm:$0xff]
      %v2287 = vld [vmem:[%s165 + $0x88] sm:$0xff]
      %v2288 = vld [vmem:[%s165 + $0x90] sm:$0xff]
      %v2289 = vld [vmem:[%s165 + $0x98] sm:$0xff]
      %v2290 = vld [vmem:[%s165 + $0xa0] sm:$0xff]
      %v2291 = vld [vmem:[%s165 + $0xa8] sm:$0xff]
      %v2292 = vld [vmem:[%s165 + $0xb0] sm:$0xff]
      %v2293 = vld [vmem:[%s165 + $0xb8] sm:$0xff]
      %v2294 = vld [vmem:[%s165 + $0xc0] sm:$0xff]
      %v2295 = vld [vmem:[%s165 + $0xc8] sm:$0xff]
      %v2296 = vld [vmem:[%s165 + $0xd0] sm:$0xff]
      %v2297 = vld [vmem:[%s165 + $0xd8] sm:$0xff]
      %v2298 = vld [vmem:[%s165 + $0xe0] sm:$0xff]
      %v2299 = vld [vmem:[%s165 + $0xe8] sm:$0xff]
      %v2300 = vld [vmem:[%s165 + $0xf0] sm:$0xff]
      %v2301 = vld [vmem:[%s165 + $0xf8] sm:$0xff]
      %v2302 = vld [vmem:[%s165 + $0x100] sm:$0xff]
      %v2303 = vld [vmem:[%s165 + $0x108] sm:$0xff]
      %v2304 = vld [vmem:[%s165 + $0x110] sm:$0xff]
      %v2305 = vld [vmem:[%s165 + $0x118] sm:$0xff]
      %v2306 = vld [vmem:[%s165 + $0x120] sm:$0xff]
      %v2307 = vld [vmem:[%s165 + $0x128] sm:$0xff]
      %v2308 = vld [vmem:[%s165 + $0x130] sm:$0xff]
      %v2309 = vld [vmem:[%s165 + $0x138] sm:$0xff]
      %v2310 = vld [vmem:[%s165 + $0x140] sm:$0xff]
      %v2311 = vld [vmem:[%s165 + $0x148] sm:$0xff]
      %v2312 = vld [vmem:[%s165 + $0x150] sm:$0xff]
      %v2313 = vld [vmem:[%s165 + $0x158] sm:$0xff]
      %v2314 = vld [vmem:[%s165 + $0x160] sm:$0xff]
      %v2315 = vld [vmem:[%s165 + $0x168] sm:$0xff]
      %v2316 = vld [vmem:[%s165 + $0x170] sm:$0xff]
      %v2317 = vld [vmem:[%s165 + $0x178] sm:$0xff]
      %v2318 = vld [vmem:[%s165 + $0x180] sm:$0xff]
      %v2319 = vld [vmem:[%s165 + $0x188] sm:$0xff]
      %v2320 = vld [vmem:[%s165 + $0x190] sm:$0xff]
      %v2321 = vld [vmem:[%s165 + $0x198] sm:$0xff]
      %v2322 = vld [vmem:[%s165 + $0x1a0] sm:$0xff]
      %v2323 = vld [vmem:[%s165 + $0x1a8] sm:$0xff]
      %v2324 = vld [vmem:[%s165 + $0x1b0] sm:$0xff]
      %v2325 = vld [vmem:[%s165 + $0x1b8] sm:$0xff]
      %v2326 = vld [vmem:[%s165 + $0x1c0] sm:$0xff]
      %v2327 = vld [vmem:[%s165 + $0x1c8] sm:$0xff]
      %v2328 = vld [vmem:[%s165 + $0x1d0] sm:$0xff]
      %v2329 = vld [vmem:[%s165 + $0x1d8] sm:$0xff]
      %v2330 = vld [vmem:[%s165 + $0x1e0] sm:$0xff]
      %v2331 = vld [vmem:[%s165 + $0x1e8] sm:$0xff]
      %v2332 = vld [vmem:[%s165 + $0x1f0] sm:$0xff]
      %v2333 = vld [vmem:[%s165 + $0x1f8] sm:$0xff]
      %v2334 = vld [vmem:[%s165 + $0x200] sm:$0xff]
      %v2335 = vld [vmem:[%s165 + $0x208] sm:$0xff]
      %v2336 = vld [vmem:[%s165 + $0x210] sm:$0xff]
      %v2337 = vld [vmem:[%s165 + $0x218] sm:$0xff]
      %v2338 = vld [vmem:[%s165 + $0x220] sm:$0xff]
      %v2339 = vld [vmem:[%s165 + $0x228] sm:$0xff]
      %v2340 = vld [vmem:[%s165 + $0x230] sm:$0xff]
      %v2341 = vld [vmem:[%s165 + $0x238] sm:$0xff]
      %v2342 = vld [vmem:[%s165 + $0x240] sm:$0xff]
      %v2343 = vld [vmem:[%s165 + $0x248] sm:$0xff]
      %v2344 = vld [vmem:[%s165 + $0x250] sm:$0xff]
      %v2345 = vld [vmem:[%s165 + $0x258] sm:$0xff]
      %v2346 = vld [vmem:[%s165 + $0x260] sm:$0xff]
      %v2347 = vld [vmem:[%s165 + $0x268] sm:$0xff]
      %v2348 = vld [vmem:[%s165 + $0x270] sm:$0xff]
      %v2349 = vld [vmem:[%s165 + $0x278] sm:$0xff]
      %v2350 = vpack.c.bf16 %v2294, %v2286
      %v2351 = vpack.c.bf16 %v2295, %v2287
      %v2352 = vpack.c.bf16 %v2296, %v2288
      %v2353 = vpack.c.bf16 %v2297, %v2289
      %v2354 = vpack.c.bf16 %v2298, %v2290
      %v2355 = vpack.c.bf16 %v2299, %v2291
      %v2356 = vpack.c.bf16 %v2300, %v2292
      %v2357 = vpack.c.bf16 %v2301, %v2293
      %v2358 = vpack.c.bf16 %v2310, %v2302
      %v2359 = vpack.c.bf16 %v2311, %v2303
      %v2360 = vpack.c.bf16 %v2312, %v2304
      %v2361 = vpack.c.bf16 %v2313, %v2305
      %v2362 = vpack.c.bf16 %v2314, %v2306
      %v2363 = vpack.c.bf16 %v2315, %v2307
      %v2364 = vpack.c.bf16 %v2316, %v2308
      %v2365 = vpack.c.bf16 %v2317, %v2309
      %v2366 = vpack.c.bf16 %v2326, %v2318
      %v2367 = vpack.c.bf16 %v2327, %v2319
      %v2368 = vpack.c.bf16 %v2328, %v2320
      %v2369 = vpack.c.bf16 %v2329, %v2321
      %v2370 = vpack.c.bf16 %v2330, %v2322
      %v2371 = vpack.c.bf16 %v2331, %v2323
      %v2372 = vpack.c.bf16 %v2332, %v2324
      %v2373 = vpack.c.bf16 %v2333, %v2325
      %v2374 = vpack.c.bf16 %v2342, %v2334
      %v2375 = vpack.c.bf16 %v2343, %v2335
      %v2376 = vpack.c.bf16 %v2344, %v2336
      %v2377 = vpack.c.bf16 %v2345, %v2337
      %v2378 = vpack.c.bf16 %v2346, %v2338
      %v2379 = vpack.c.bf16 %v2347, %v2339
      %v2380 = vpack.c.bf16 %v2348, %v2340
      %v2381 = vpack.c.bf16 %v2349, %v2341
      %s2382 = scalar_lea.vmem %s1, 1824
      %v2383 = vld [vmem:[%s2382] sm:$0xff]
      %v2384 = vld [vmem:[%s2382 + $0x8] sm:$0xff]
      %v2385 = vld [vmem:[%s2382 + $0x10] sm:$0xff]
      %v2386 = vld [vmem:[%s2382 + $0x18] sm:$0xff]
      %v2387 = vld [vmem:[%s2382 + $0x20] sm:$0xff]
      %v2388 = vld [vmem:[%s2382 + $0x28] sm:$0xff]
      %v2389 = vld [vmem:[%s2382 + $0x30] sm:$0xff]
      %v2390 = vld [vmem:[%s2382 + $0x38] sm:$0xff]
      %v2391 = vld [vmem:[%s2382 + $0x40] sm:$0xff]
      %v2392 = vld [vmem:[%s2382 + $0x48] sm:$0xff]
      %v2393 = vld [vmem:[%s2382 + $0x50] sm:$0xff]
      %v2394 = vld [vmem:[%s2382 + $0x58] sm:$0xff]
      %v2395 = vld [vmem:[%s2382 + $0x60] sm:$0xff]
      %v2396 = vld [vmem:[%s2382 + $0x68] sm:$0xff]
      %v2397 = vld [vmem:[%s2382 + $0x70] sm:$0xff]
      %v2398 = vld [vmem:[%s2382 + $0x78] sm:$0xff]
      %v2399 = vld [vmem:[%s2382 + $0x80] sm:$0xff]
      %v2400 = vld [vmem:[%s2382 + $0x88] sm:$0xff]
      %v2401 = vld [vmem:[%s2382 + $0x90] sm:$0xff]
      %v2402 = vld [vmem:[%s2382 + $0x98] sm:$0xff]
      %v2403 = vld [vmem:[%s2382 + $0xa0] sm:$0xff]
      %v2404 = vld [vmem:[%s2382 + $0xa8] sm:$0xff]
      %v2405 = vld [vmem:[%s2382 + $0xb0] sm:$0xff]
      %v2406 = vld [vmem:[%s2382 + $0xb8] sm:$0xff]
      %v2407 = vld [vmem:[%s2382 + $0xc0] sm:$0xff]
      %v2408 = vld [vmem:[%s2382 + $0xc8] sm:$0xff]
      %v2409 = vld [vmem:[%s2382 + $0xd0] sm:$0xff]
      %v2410 = vld [vmem:[%s2382 + $0xd8] sm:$0xff]
      %v2411 = vld [vmem:[%s2382 + $0xe0] sm:$0xff]
      %v2412 = vld [vmem:[%s2382 + $0xe8] sm:$0xff]
      %v2413 = vld [vmem:[%s2382 + $0xf0] sm:$0xff]
      %v2414 = vld [vmem:[%s2382 + $0xf8] sm:$0xff]
      %v2415 = vld [vmem:[%s2382 + $0x100] sm:$0xff]
      %v2416 = vld [vmem:[%s2382 + $0x108] sm:$0xff]
      %v2417 = vld [vmem:[%s2382 + $0x110] sm:$0xff]
      %v2418 = vld [vmem:[%s2382 + $0x118] sm:$0xff]
      %v2419 = vld [vmem:[%s2382 + $0x120] sm:$0xff]
      %v2420 = vld [vmem:[%s2382 + $0x128] sm:$0xff]
      %v2421 = vld [vmem:[%s2382 + $0x130] sm:$0xff]
      %v2422 = vld [vmem:[%s2382 + $0x138] sm:$0xff]
      %v2423 = vld [vmem:[%s2382 + $0x140] sm:$0xff]
      %v2424 = vld [vmem:[%s2382 + $0x148] sm:$0xff]
      %v2425 = vld [vmem:[%s2382 + $0x150] sm:$0xff]
      %v2426 = vld [vmem:[%s2382 + $0x158] sm:$0xff]
      %v2427 = vld [vmem:[%s2382 + $0x160] sm:$0xff]
      %v2428 = vld [vmem:[%s2382 + $0x168] sm:$0xff]
      %v2429 = vld [vmem:[%s2382 + $0x170] sm:$0xff]
      %v2430 = vld [vmem:[%s2382 + $0x178] sm:$0xff]
      %v2431 = vld [vmem:[%s2382 + $0x180] sm:$0xff]
      %v2432 = vld [vmem:[%s2382 + $0x188] sm:$0xff]
      %v2433 = vld [vmem:[%s2382 + $0x190] sm:$0xff]
      %v2434 = vld [vmem:[%s2382 + $0x198] sm:$0xff]
      %v2435 = vld [vmem:[%s2382 + $0x1a0] sm:$0xff]
      %v2436 = vld [vmem:[%s2382 + $0x1a8] sm:$0xff]
      %v2437 = vld [vmem:[%s2382 + $0x1b0] sm:$0xff]
      %v2438 = vld [vmem:[%s2382 + $0x1b8] sm:$0xff]
      %v2439 = vld [vmem:[%s2382 + $0x1c0] sm:$0xff]
      %v2440 = vld [vmem:[%s2382 + $0x1c8] sm:$0xff]
      %v2441 = vld [vmem:[%s2382 + $0x1d0] sm:$0xff]
      %v2442 = vld [vmem:[%s2382 + $0x1d8] sm:$0xff]
      %v2443 = vld [vmem:[%s2382 + $0x1e0] sm:$0xff]
      %v2444 = vld [vmem:[%s2382 + $0x1e8] sm:$0xff]
      %v2445 = vld [vmem:[%s2382 + $0x1f0] sm:$0xff]
      %v2446 = vld [vmem:[%s2382 + $0x1f8] sm:$0xff]
      %v2447 = vld [vmem:[%s2382 + $0x200] sm:$0xff]
      %v2448 = vld [vmem:[%s2382 + $0x208] sm:$0xff]
      %v2449 = vld [vmem:[%s2382 + $0x210] sm:$0xff]
      %v2450 = vld [vmem:[%s2382 + $0x218] sm:$0xff]
      %v2451 = vld [vmem:[%s2382 + $0x220] sm:$0xff]
      %v2452 = vld [vmem:[%s2382 + $0x228] sm:$0xff]
      %v2453 = vld [vmem:[%s2382 + $0x230] sm:$0xff]
      %v2454 = vld [vmem:[%s2382 + $0x238] sm:$0xff]
      %v2455 = vld [vmem:[%s2382 + $0x240] sm:$0xff]
      %v2456 = vld [vmem:[%s2382 + $0x248] sm:$0xff]
      %v2457 = vld [vmem:[%s2382 + $0x250] sm:$0xff]
      %v2458 = vld [vmem:[%s2382 + $0x258] sm:$0xff]
      %v2459 = vld [vmem:[%s2382 + $0x260] sm:$0xff]
      %v2460 = vld [vmem:[%s2382 + $0x268] sm:$0xff]
      %v2461 = vld [vmem:[%s2382 + $0x270] sm:$0xff]
      %v2462 = vld [vmem:[%s2382 + $0x278] sm:$0xff]
      %v2463 = vld [vmem:[%s2382 + $0x280] sm:$0xff]
      %v2464 = vld [vmem:[%s2382 + $0x288] sm:$0xff]
      %v2465 = vld [vmem:[%s2382 + $0x290] sm:$0xff]
      %v2466 = vld [vmem:[%s2382 + $0x298] sm:$0xff]
      %v2467 = vld [vmem:[%s2382 + $0x2a0] sm:$0xff]
      %v2468 = vld [vmem:[%s2382 + $0x2a8] sm:$0xff]
      %v2469 = vld [vmem:[%s2382 + $0x2b0] sm:$0xff]
      %v2470 = vld [vmem:[%s2382 + $0x2b8] sm:$0xff]
      %v2471 = vld [vmem:[%s2382 + $0x2c0] sm:$0xff]
      %v2472 = vld [vmem:[%s2382 + $0x2c8] sm:$0xff]
      %v2473 = vld [vmem:[%s2382 + $0x2d0] sm:$0xff]
      %v2474 = vld [vmem:[%s2382 + $0x2d8] sm:$0xff]
      %v2475 = vld [vmem:[%s2382 + $0x2e0] sm:$0xff]
      %v2476 = vld [vmem:[%s2382 + $0x2e8] sm:$0xff]
      %v2477 = vld [vmem:[%s2382 + $0x2f0] sm:$0xff]
      %v2478 = vld [vmem:[%s2382 + $0x2f8] sm:$0xff]
      %v2479 = vld [vmem:[%s2382 + $0x300] sm:$0xff]
      %v2480 = vld [vmem:[%s2382 + $0x308] sm:$0xff]
      %v2481 = vld [vmem:[%s2382 + $0x310] sm:$0xff]
      %v2482 = vld [vmem:[%s2382 + $0x318] sm:$0xff]
      %v2483 = vld [vmem:[%s2382 + $0x320] sm:$0xff]
      %v2484 = vld [vmem:[%s2382 + $0x328] sm:$0xff]
      %v2485 = vld [vmem:[%s2382 + $0x330] sm:$0xff]
      %v2486 = vld [vmem:[%s2382 + $0x338] sm:$0xff]
      %v2487 = vld [vmem:[%s2382 + $0x340] sm:$0xff]
      %v2488 = vld [vmem:[%s2382 + $0x348] sm:$0xff]
      %v2489 = vld [vmem:[%s2382 + $0x350] sm:$0xff]
      %v2490 = vld [vmem:[%s2382 + $0x358] sm:$0xff]
      %v2491 = vld [vmem:[%s2382 + $0x360] sm:$0xff]
      %v2492 = vld [vmem:[%s2382 + $0x368] sm:$0xff]
      %v2493 = vld [vmem:[%s2382 + $0x370] sm:$0xff]
      %v2494 = vld [vmem:[%s2382 + $0x378] sm:$0xff]
      %v2495 = vld [vmem:[%s2382 + $0x380] sm:$0xff]
      %v2496 = vld [vmem:[%s2382 + $0x388] sm:$0xff]
      %v2611 = vunpack.c.l.b16 %v2383
      %v2612 = vunpack.c.h.b16 %v2383
      %v2613 = vunpack.c.l.b16 %v2384
      %v2614 = vunpack.c.h.b16 %v2384
      %v2615 = vunpack.c.l.b16 %v2385
      %v2616 = vunpack.c.h.b16 %v2385
      %v2617 = vunpack.c.l.b16 %v2386
      %v2618 = vunpack.c.h.b16 %v2386
      %v2619 = vunpack.c.l.b16 %v2387
      %v2620 = vunpack.c.h.b16 %v2387
      %v2621 = vunpack.c.l.b16 %v2388
      %v2622 = vunpack.c.h.b16 %v2388
      %v2623 = vunpack.c.l.b16 %v2389
      %v2624 = vunpack.c.h.b16 %v2389
      %v2625 = vunpack.c.l.b16 %v2390
      %v2626 = vunpack.c.h.b16 %v2390
      %v2627 = vunpack.c.l.b16 %v2391
      %v2628 = vunpack.c.h.b16 %v2391
      %v2629 = vunpack.c.l.b16 %v2392
      %v2630 = vunpack.c.h.b16 %v2392
      %v2631 = vunpack.c.l.b16 %v2393
      %v2632 = vunpack.c.h.b16 %v2393
      %v2633 = vunpack.c.l.b16 %v2394
      %v2634 = vunpack.c.h.b16 %v2394
      %v2635 = vunpack.c.l.b16 %v2395
      %v2636 = vunpack.c.h.b16 %v2395
      %v2637 = vunpack.c.l.b16 %v2396
      %v2638 = vunpack.c.h.b16 %v2396
      %v2639 = vunpack.c.l.b16 %v2397
      %v2640 = vunpack.c.h.b16 %v2397
      %v2641 = vunpack.c.l.b16 %v2398
      %v2642 = vunpack.c.h.b16 %v2398
      %v2643 = vunpack.c.l.b16 %v2399
      %v2644 = vunpack.c.h.b16 %v2399
      %v2645 = vunpack.c.l.b16 %v2400
      %v2646 = vunpack.c.h.b16 %v2400
      %v2647 = vunpack.c.l.b16 %v2401
      %v2648 = vunpack.c.h.b16 %v2401
      %v2649 = vunpack.c.l.b16 %v2402
      %v2650 = vunpack.c.h.b16 %v2402
      %v2651 = vunpack.c.l.b16 %v2403
      %v2652 = vunpack.c.h.b16 %v2403
      %v2653 = vunpack.c.l.b16 %v2404
      %v2654 = vunpack.c.h.b16 %v2404
      %v2655 = vunpack.c.l.b16 %v2405
      %v2656 = vunpack.c.h.b16 %v2405
      %v2657 = vunpack.c.l.b16 %v2406
      %v2658 = vunpack.c.h.b16 %v2406
      %v2659 = vunpack.c.l.b16 %v2407
      %v2660 = vunpack.c.h.b16 %v2407
      %v2661 = vunpack.c.l.b16 %v2408
      %v2662 = vunpack.c.h.b16 %v2408
      %v2663 = vunpack.c.l.b16 %v2409
      %v2664 = vunpack.c.h.b16 %v2409
      %v2665 = vunpack.c.l.b16 %v2410
      %v2666 = vunpack.c.h.b16 %v2410
      %v2667 = vunpack.c.l.b16 %v2411
      %v2668 = vunpack.c.h.b16 %v2411
      %v2669 = vunpack.c.l.b16 %v2412
      %v2670 = vunpack.c.h.b16 %v2412
      %v2671 = vunpack.c.l.b16 %v2413
      %v2672 = vunpack.c.h.b16 %v2413
      %v2673 = vunpack.c.l.b16 %v2414
      %v2674 = vunpack.c.h.b16 %v2414
      %v2675 = vunpack.c.l.b16 %v2415
      %v2676 = vunpack.c.h.b16 %v2415
      %v2677 = vunpack.c.l.b16 %v2416
      %v2678 = vunpack.c.h.b16 %v2416
      %v2679 = vunpack.c.l.b16 %v2417
      %v2680 = vunpack.c.h.b16 %v2417
      %v2681 = vunpack.c.l.b16 %v2418
      %v2682 = vunpack.c.h.b16 %v2418
      %v2683 = vunpack.c.l.b16 %v2419
      %v2684 = vunpack.c.h.b16 %v2419
      %v2685 = vunpack.c.l.b16 %v2420
      %v2686 = vunpack.c.h.b16 %v2420
      %v2687 = vunpack.c.l.b16 %v2421
      %v2688 = vunpack.c.h.b16 %v2421
      %v2689 = vunpack.c.l.b16 %v2422
      %v2690 = vunpack.c.h.b16 %v2422
      %v2691 = vunpack.c.l.b16 %v2423
      %v2692 = vunpack.c.h.b16 %v2423
      %v2693 = vunpack.c.l.b16 %v2424
      %v2694 = vunpack.c.h.b16 %v2424
      %v2695 = vunpack.c.l.b16 %v2425
      %v2696 = vunpack.c.h.b16 %v2425
      %v2697 = vunpack.c.l.b16 %v2426
      %v2698 = vunpack.c.h.b16 %v2426
      %v2699 = vunpack.c.l.b16 %v2427
      %v2700 = vunpack.c.h.b16 %v2427
      %v2701 = vunpack.c.l.b16 %v2428
      %v2702 = vunpack.c.h.b16 %v2428
      %v2703 = vunpack.c.l.b16 %v2429
      %v2704 = vunpack.c.h.b16 %v2429
      %v2705 = vunpack.c.l.b16 %v2430
      %v2706 = vunpack.c.h.b16 %v2430
      %v2707 = vunpack.c.l.b16 %v2431
      %v2708 = vunpack.c.h.b16 %v2431
      %v2709 = vunpack.c.l.b16 %v2432
      %v2710 = vunpack.c.h.b16 %v2432
      %v2711 = vunpack.c.l.b16 %v2433
      %v2712 = vunpack.c.h.b16 %v2433
      %v2713 = vunpack.c.l.b16 %v2434
      %v2714 = vunpack.c.h.b16 %v2434
      %v2715 = vunpack.c.l.b16 %v2435
      %v2716 = vunpack.c.h.b16 %v2435
      %v2717 = vunpack.c.l.b16 %v2436
      %v2718 = vunpack.c.h.b16 %v2436
      %v2719 = vunpack.c.l.b16 %v2437
      %v2720 = vunpack.c.h.b16 %v2437
      %v2721 = vunpack.c.l.b16 %v2438
      %v2722 = vunpack.c.h.b16 %v2438
      %v2723 = vunpack.c.l.b16 %v2439
      %v2724 = vunpack.c.h.b16 %v2439
      %v2725 = vunpack.c.l.b16 %v2440
      %v2726 = vunpack.c.h.b16 %v2440
      %v2727 = vunpack.c.l.b16 %v2441
      %v2728 = vunpack.c.h.b16 %v2441
      %v2729 = vunpack.c.l.b16 %v2442
      %v2730 = vunpack.c.h.b16 %v2442
      %v2731 = vunpack.c.l.b16 %v2443
      %v2732 = vunpack.c.h.b16 %v2443
      %v2733 = vunpack.c.l.b16 %v2444
      %v2734 = vunpack.c.h.b16 %v2444
      %v2735 = vunpack.c.l.b16 %v2445
      %v2736 = vunpack.c.h.b16 %v2445
      %v2737 = vunpack.c.l.b16 %v2446
      %v2738 = vunpack.c.h.b16 %v2446
      %v2739 = vunpack.c.l.b16 %v2447
      %v2740 = vunpack.c.h.b16 %v2447
      %v2741 = vunpack.c.l.b16 %v2448
      %v2742 = vunpack.c.h.b16 %v2448
      %v2743 = vunpack.c.l.b16 %v2449
      %v2744 = vunpack.c.h.b16 %v2449
      %v2745 = vunpack.c.l.b16 %v2450
      %v2746 = vunpack.c.h.b16 %v2450
      %v2747 = vunpack.c.l.b16 %v2451
      %v2748 = vunpack.c.h.b16 %v2451
      %v2749 = vunpack.c.l.b16 %v2452
      %v2750 = vunpack.c.h.b16 %v2452
      %v2751 = vunpack.c.l.b16 %v2453
      %v2752 = vunpack.c.h.b16 %v2453
      %v2753 = vunpack.c.l.b16 %v2454
      %v2754 = vunpack.c.h.b16 %v2454
      %v2755 = vunpack.c.l.b16 %v2455
      %v2756 = vunpack.c.h.b16 %v2455
      %v2757 = vunpack.c.l.b16 %v2456
      %v2758 = vunpack.c.h.b16 %v2456
      %v2759 = vunpack.c.l.b16 %v2457
      %v2760 = vunpack.c.h.b16 %v2457
      %v2761 = vunpack.c.l.b16 %v2458
      %v2762 = vunpack.c.h.b16 %v2458
      %v2763 = vunpack.c.l.b16 %v2459
      %v2764 = vunpack.c.h.b16 %v2459
      %v2765 = vunpack.c.l.b16 %v2460
      %v2766 = vunpack.c.h.b16 %v2460
      %v2767 = vunpack.c.l.b16 %v2461
      %v2768 = vunpack.c.h.b16 %v2461
      %v2769 = vunpack.c.l.b16 %v2462
      %v2770 = vunpack.c.h.b16 %v2462
      %v2771 = vunpack.c.l.b16 %v2463
      %v2772 = vunpack.c.h.b16 %v2463
      %v2773 = vunpack.c.l.b16 %v2464
      %v2774 = vunpack.c.h.b16 %v2464
      %v2775 = vunpack.c.l.b16 %v2465
      %v2776 = vunpack.c.h.b16 %v2465
      %v2777 = vunpack.c.l.b16 %v2466
      %v2778 = vunpack.c.h.b16 %v2466
      %v2779 = vunpack.c.l.b16 %v2467
      %v2780 = vunpack.c.h.b16 %v2467
      %v2781 = vunpack.c.l.b16 %v2468
      %v2782 = vunpack.c.h.b16 %v2468
      %v2783 = vunpack.c.l.b16 %v2469
      %v2784 = vunpack.c.h.b16 %v2469
      %v2785 = vunpack.c.l.b16 %v2470
      %v2786 = vunpack.c.h.b16 %v2470
      %v2787 = vunpack.c.l.b16 %v2471
      %v2788 = vunpack.c.h.b16 %v2471
      %v2789 = vunpack.c.l.b16 %v2472
      %v2790 = vunpack.c.h.b16 %v2472
      %v2791 = vunpack.c.l.b16 %v2473
      %v2792 = vunpack.c.h.b16 %v2473
      %v2793 = vunpack.c.l.b16 %v2474
      %v2794 = vunpack.c.h.b16 %v2474
      %v2795 = vunpack.c.l.b16 %v2475
      %v2796 = vunpack.c.h.b16 %v2475
      %v2797 = vunpack.c.l.b16 %v2476
      %v2798 = vunpack.c.h.b16 %v2476
      %v2799 = vunpack.c.l.b16 %v2477
      %v2800 = vunpack.c.h.b16 %v2477
      %v2801 = vunpack.c.l.b16 %v2478
      %v2802 = vunpack.c.h.b16 %v2478
      %v2803 = vunpack.c.l.b16 %v2479
      %v2804 = vunpack.c.h.b16 %v2479
      %v2805 = vunpack.c.l.b16 %v2480
      %v2806 = vunpack.c.h.b16 %v2480
      %v2807 = vunpack.c.l.b16 %v2481
      %v2808 = vunpack.c.h.b16 %v2481
      %v2809 = vunpack.c.l.b16 %v2482
      %v2810 = vunpack.c.h.b16 %v2482
      %v2811 = vunpack.c.l.b16 %v2483
      %v2812 = vunpack.c.h.b16 %v2483
      %v2813 = vunpack.c.l.b16 %v2484
      %v2814 = vunpack.c.h.b16 %v2484
      %v2815 = vunpack.c.l.b16 %v2485
      %v2816 = vunpack.c.h.b16 %v2485
      %v2817 = vunpack.c.l.b16 %v2486
      %v2818 = vunpack.c.h.b16 %v2486
      %v2819 = vunpack.c.l.b16 %v2487
      %v2820 = vunpack.c.h.b16 %v2487
      %v2821 = vunpack.c.l.b16 %v2488
      %v2822 = vunpack.c.h.b16 %v2488
      %v2823 = vunpack.c.l.b16 %v2489
      %v2824 = vunpack.c.h.b16 %v2489
      %v2825 = vunpack.c.l.b16 %v2490
      %v2826 = vunpack.c.h.b16 %v2490
      %v2827 = vunpack.c.l.b16 %v2491
      %v2828 = vunpack.c.h.b16 %v2491
      %v2829 = vunpack.c.l.b16 %v2492
      %v2830 = vunpack.c.h.b16 %v2492
      %v2831 = vunpack.c.l.b16 %v2493
      %v2832 = vunpack.c.h.b16 %v2493
      %v2833 = vunpack.c.l.b16 %v2494
      %v2834 = vunpack.c.h.b16 %v2494
      %v2835 = vunpack.c.l.b16 %v2495
      %v2836 = vunpack.c.h.b16 %v2495
      %v2837 = vunpack.c.l.b16 %v2496
      %v2838 = vunpack.c.h.b16 %v2496
      %v2839 = vpack.c.b16 %v2613, %v2611
      %v2840 = vpack.c.b16 %v2614, %v2612
      %v2841 = vpack.c.b16 %v2617, %v2615
      %v2842 = vpack.c.b16 %v2618, %v2616
      %v2843 = vpack.c.b16 %v2621, %v2619
      %v2844 = vpack.c.b16 %v2622, %v2620
      %v2845 = vpack.c.b16 %v2625, %v2623
      %v2846 = vpack.c.b16 %v2626, %v2624
      %v2847 = vpack.c.b16 %v2629, %v2627
      %v2848 = vpack.c.b16 %v2630, %v2628
      %v2849 = vpack.c.b16 %v2633, %v2631
      %v2850 = vpack.c.b16 %v2634, %v2632
      %v2851 = vpack.c.b16 %v2637, %v2635
      %v2852 = vpack.c.b16 %v2638, %v2636
      %v2853 = vpack.c.b16 %v2641, %v2639
      %v2854 = vpack.c.b16 %v2642, %v2640
      %v2855 = vpack.c.b16 %v2645, %v2643
      %v2856 = vpack.c.b16 %v2646, %v2644
      %v2857 = vpack.c.b16 %v2649, %v2647
      %v2858 = vpack.c.b16 %v2650, %v2648
      %v2859 = vpack.c.b16 %v2653, %v2651
      %v2860 = vpack.c.b16 %v2654, %v2652
      %v2861 = vpack.c.b16 %v2657, %v2655
      %v2862 = vpack.c.b16 %v2658, %v2656
      %v2863 = vpack.c.b16 %v2661, %v2659
      %v2864 = vpack.c.b16 %v2662, %v2660
      %v2865 = vpack.c.b16 %v2665, %v2663
      %v2866 = vpack.c.b16 %v2666, %v2664
      %v2867 = vpack.c.b16 %v2669, %v2667
      %v2868 = vpack.c.b16 %v2670, %v2668
      %v2869 = vpack.c.b16 %v2673, %v2671
      %v2870 = vpack.c.b16 %v2674, %v2672
      %v2871 = vpack.c.b16 %v2677, %v2675
      %v2872 = vpack.c.b16 %v2678, %v2676
      %v2873 = vpack.c.b16 %v2681, %v2679
      %v2874 = vpack.c.b16 %v2682, %v2680
      %v2875 = vpack.c.b16 %v2685, %v2683
      %v2876 = vpack.c.b16 %v2686, %v2684
      %v2877 = vpack.c.b16 %v2689, %v2687
      %v2878 = vpack.c.b16 %v2690, %v2688
      %v2879 = vpack.c.b16 %v2693, %v2691
      %v2880 = vpack.c.b16 %v2694, %v2692
      %v2881 = vpack.c.b16 %v2697, %v2695
      %v2882 = vpack.c.b16 %v2698, %v2696
      %v2883 = vpack.c.b16 %v2701, %v2699
      %v2884 = vpack.c.b16 %v2702, %v2700
      %v2885 = vpack.c.b16 %v2705, %v2703
      %v2886 = vpack.c.b16 %v2706, %v2704
      %v2887 = vpack.c.b16 %v2709, %v2707
      %v2888 = vpack.c.b16 %v2710, %v2708
      %v2889 = vpack.c.b16 %v2713, %v2711
      %v2890 = vpack.c.b16 %v2714, %v2712
      %v2891 = vpack.c.b16 %v2717, %v2715
      %v2892 = vpack.c.b16 %v2718, %v2716
      %v2893 = vpack.c.b16 %v2721, %v2719
      %v2894 = vpack.c.b16 %v2722, %v2720
      %v2895 = vpack.c.b16 %v2725, %v2723
      %v2896 = vpack.c.b16 %v2726, %v2724
      %v2897 = vpack.c.b16 %v2729, %v2727
      %v2898 = vpack.c.b16 %v2730, %v2728
      %v2899 = vpack.c.b16 %v2733, %v2731
      %v2900 = vpack.c.b16 %v2734, %v2732
      %v2901 = vpack.c.b16 %v2737, %v2735
      %v2902 = vpack.c.b16 %v2738, %v2736
      %v2903 = vpack.c.b16 %v2741, %v2739
      %v2904 = vpack.c.b16 %v2742, %v2740
      %v2905 = vpack.c.b16 %v2745, %v2743
      %v2906 = vpack.c.b16 %v2746, %v2744
      %v2907 = vpack.c.b16 %v2749, %v2747
      %v2908 = vpack.c.b16 %v2750, %v2748
      %v2909 = vpack.c.b16 %v2753, %v2751
      %v2910 = vpack.c.b16 %v2754, %v2752
      %v2911 = vpack.c.b16 %v2757, %v2755
      %v2912 = vpack.c.b16 %v2758, %v2756
      %v2913 = vpack.c.b16 %v2761, %v2759
      %v2914 = vpack.c.b16 %v2762, %v2760
      %v2915 = vpack.c.b16 %v2765, %v2763
      %v2916 = vpack.c.b16 %v2766, %v2764
      %v2917 = vpack.c.b16 %v2769, %v2767
      %v2918 = vpack.c.b16 %v2770, %v2768
      %v2919 = vpack.c.b16 %v2773, %v2771
      %v2920 = vpack.c.b16 %v2774, %v2772
      %v2921 = vpack.c.b16 %v2777, %v2775
      %v2922 = vpack.c.b16 %v2778, %v2776
      %v2923 = vpack.c.b16 %v2781, %v2779
      %v2924 = vpack.c.b16 %v2782, %v2780
      %v2925 = vpack.c.b16 %v2785, %v2783
      %v2926 = vpack.c.b16 %v2786, %v2784
      %v2927 = vpack.c.b16 %v2789, %v2787
      %v2928 = vpack.c.b16 %v2790, %v2788
      %v2929 = vpack.c.b16 %v2793, %v2791
      %v2930 = vpack.c.b16 %v2794, %v2792
      %v2931 = vpack.c.b16 %v2797, %v2795
      %v2932 = vpack.c.b16 %v2798, %v2796
      %v2933 = vpack.c.b16 %v2801, %v2799
      %v2934 = vpack.c.b16 %v2802, %v2800
      %v2935 = vpack.c.b16 %v2805, %v2803
      %v2936 = vpack.c.b16 %v2806, %v2804
      %v2937 = vpack.c.b16 %v2809, %v2807
      %v2938 = vpack.c.b16 %v2810, %v2808
      %v2939 = vpack.c.b16 %v2813, %v2811
      %v2940 = vpack.c.b16 %v2814, %v2812
      %v2941 = vpack.c.b16 %v2817, %v2815
      %v2942 = vpack.c.b16 %v2818, %v2816
      %v2943 = vpack.c.b16 %v2821, %v2819
      %v2944 = vpack.c.b16 %v2822, %v2820
      %v2945 = vpack.c.b16 %v2825, %v2823
      %v2946 = vpack.c.b16 %v2826, %v2824
      %v2947 = vpack.c.b16 %v2829, %v2827
      %v2948 = vpack.c.b16 %v2830, %v2828
      %v2949 = vpack.c.b16 %v2833, %v2831
      %v2950 = vpack.c.b16 %v2834, %v2832
      %v2951 = vpack.c.b16 %v2837, %v2835
      %v2952 = vpack.c.b16 %v2838, %v2836
      %v3068 = vsel %vm1107, %v2357, 0
      %v3071 = vsel %vm1107, %v2365, 0
      %v3074 = vsel %vm1107, %v2373, 0
      %v3077 = vsel %vm1107, %v2381, 0
      %3079 = vmatprep.subr.bf16.mxu0 %v2854
      %3080 = vmatpush1.bf16.msra.mxu0 %v2853
      %3081 = vmatprep.subr.bf16.mxu0 %v2852
      %3082 = vmatpush1.bf16.msra.mxu0 %v2851
      %3083 = vmatprep.subr.bf16.mxu0 %v2850
      %3084 = vmatpush1.bf16.msra.mxu0 %v2849
      %3085 = vmatprep.subr.bf16.mxu0 %v2848
      %3086 = vmatpush1.bf16.msra.mxu0 %v2847
      %3087 = vmatprep.subr.bf16.mxu0 %v2846
      %3088 = vmatpush1.bf16.msra.mxu0 %v2845
      %3089 = vmatprep.subr.bf16.mxu0 %v2844
      %3090 = vmatpush1.bf16.msra.mxu0 %v2843
      %3091 = vmatprep.subr.bf16.mxu0 %v2842
      %3092 = vmatpush1.bf16.msra.mxu0 %v2841
      %3093 = vmatprep.subr.bf16.mxu0 %v2840
      %3094 = vmatpush1.bf16.msra.mxu0 %v2839
      %3095 = vmatprep.subr.bf16.mxu0 %v2870
      %3096 = vmatpush2.bf16.msra.mxu0 %v2869
      %3097 = vmatprep.subr.bf16.mxu0 %v2868
      %3098 = vmatpush2.bf16.msra.mxu0 %v2867
      %3099 = vmatprep.subr.bf16.mxu0 %v2866
      %3100 = vmatpush2.bf16.msra.mxu0 %v2865
      %3101 = vmatprep.subr.bf16.mxu0 %v2864
      %3102 = vmatpush2.bf16.msra.mxu0 %v2863
      %3103 = vmatprep.subr.bf16.mxu0 %v2862
      %3104 = vmatpush2.bf16.msra.mxu0 %v2861
      %3105 = vmatprep.subr.bf16.mxu0 %v2860
      %3106 = vmatpush2.bf16.msra.mxu0 %v2859
      %3107 = vmatprep.subr.bf16.mxu0 %v2858
      %3108 = vmatpush2.bf16.msra.mxu0 %v2857
      %3109 = vmatprep.subr.bf16.mxu0 %v2856
      %3110 = vmatpush2.bf16.msra.mxu0 %v2855
      %3111 = vmatprep.mubr.bf16.mxu0 %v2351
      %3112 = vmatmul.mubr.bf16.gmra.mxu0 %v2350
      %v3113 = vpop.f32.mrf.mxu0
      %v3114 = vadd.f32 0.0, %v3113
      %v3115 = vpop.f32.mrf.mxu0
      %v3116 = vadd.f32 0.0, %v3115
      %v3117 = vpop.f32.mrf.mxu0
      %v3118 = vadd.f32 0.0, %v3117
      %v3119 = vpop.f32.mrf.mxu0
      %v3120 = vadd.f32 0.0, %v3119
      %3121 = vmatprep.mubr.bf16.mxu0 %v2359
      %3122 = vmatmul.mubr.bf16.gmra.mxu0 %v2358
      %v3123 = vpop.f32.mrf.mxu0
      %v3124 = vadd.f32 0.0, %v3123
      %v3125 = vpop.f32.mrf.mxu0
      %v3126 = vadd.f32 0.0, %v3125
      %v3127 = vpop.f32.mrf.mxu0
      %v3128 = vadd.f32 0.0, %v3127
      %v3129 = vpop.f32.mrf.mxu0
      %v3130 = vadd.f32 0.0, %v3129
      %3131 = vmatprep.mubr.bf16.mxu0 %v2367
      %3132 = vmatmul.mubr.bf16.gmra.mxu0 %v2366
      %v3133 = vpop.f32.mrf.mxu0
      %v3134 = vadd.f32 0.0, %v3133
      %v3135 = vpop.f32.mrf.mxu0
      %v3136 = vadd.f32 0.0, %v3135
      %v3137 = vpop.f32.mrf.mxu0
      %v3138 = vadd.f32 0.0, %v3137
      %v3139 = vpop.f32.mrf.mxu0
      %v3140 = vadd.f32 0.0, %v3139
      %3141 = vmatprep.mubr.bf16.mxu0 %v2375
      %3142 = vmatmul.mubr.bf16.gmra.mxu0 %v2374
      %v3143 = vpop.f32.mrf.mxu0
      %v3144 = vadd.f32 0.0, %v3143
      %v3145 = vpop.f32.mrf.mxu0
      %v3146 = vadd.f32 0.0, %v3145
      %v3147 = vpop.f32.mrf.mxu0
      %v3148 = vadd.f32 0.0, %v3147
      %v3149 = vpop.f32.mrf.mxu0
      %v3150 = vadd.f32 0.0, %v3149
      %3151 = vdwg.mxu0
      %3152 = vmatprep.subr.bf16.mxu0 %v2886
      %3153 = vmatpush1.bf16.msra.mxu0 %v2885
      %3154 = vmatprep.subr.bf16.mxu0 %v2884
      %3155 = vmatpush1.bf16.msra.mxu0 %v2883
      %3156 = vmatprep.subr.bf16.mxu0 %v2882
      %3157 = vmatpush1.bf16.msra.mxu0 %v2881
      %3158 = vmatprep.subr.bf16.mxu0 %v2880
      %3159 = vmatpush1.bf16.msra.mxu0 %v2879
      %3160 = vmatprep.subr.bf16.mxu0 %v2878
      %3161 = vmatpush1.bf16.msra.mxu0 %v2877
      %3162 = vmatprep.subr.bf16.mxu0 %v2876
      %3163 = vmatpush1.bf16.msra.mxu0 %v2875
      %3164 = vmatprep.subr.bf16.mxu0 %v2874
      %3165 = vmatpush1.bf16.msra.mxu0 %v2873
      %3166 = vmatprep.subr.bf16.mxu0 %v2872
      %3167 = vmatpush1.bf16.msra.mxu0 %v2871
      %3168 = vmatprep.subr.bf16.mxu0 %v2902
      %3169 = vmatpush2.bf16.msra.mxu0 %v2901
      %3170 = vmatprep.subr.bf16.mxu0 %v2900
      %3171 = vmatpush2.bf16.msra.mxu0 %v2899
      %3172 = vmatprep.subr.bf16.mxu0 %v2898
      %3173 = vmatpush2.bf16.msra.mxu0 %v2897
      %3174 = vmatprep.subr.bf16.mxu0 %v2896
      %3175 = vmatpush2.bf16.msra.mxu0 %v2895
      %3176 = vmatprep.subr.bf16.mxu0 %v2894
      %3177 = vmatpush2.bf16.msra.mxu0 %v2893
      %3178 = vmatprep.subr.bf16.mxu0 %v2892
      %3179 = vmatpush2.bf16.msra.mxu0 %v2891
      %3180 = vmatprep.subr.bf16.mxu0 %v2890
      %3181 = vmatpush2.bf16.msra.mxu0 %v2889
      %3182 = vmatprep.subr.bf16.mxu0 %v2888
      %3183 = vmatpush2.bf16.msra.mxu0 %v2887
      %3184 = vmatprep.mubr.bf16.mxu0 %v2353
      %3185 = vmatmul.mubr.bf16.gmra.mxu0 %v2352
      %v3186 = vpop.f32.mrf.mxu0
      %v3187 = vadd.f32 %v3114, %v3186
      %v3188 = vpop.f32.mrf.mxu0
      %v3189 = vadd.f32 %v3116, %v3188
      %v3190 = vpop.f32.mrf.mxu0
      %v3191 = vadd.f32 %v3118, %v3190
      %v3192 = vpop.f32.mrf.mxu0
      %v3193 = vadd.f32 %v3120, %v3192
      %3194 = vmatprep.mubr.bf16.mxu0 %v2361
      %3195 = vmatmul.mubr.bf16.gmra.mxu0 %v2360
      %v3196 = vpop.f32.mrf.mxu0
      %v3197 = vadd.f32 %v3124, %v3196
      %v3198 = vpop.f32.mrf.mxu0
      %v3199 = vadd.f32 %v3126, %v3198
      %v3200 = vpop.f32.mrf.mxu0
      %v3201 = vadd.f32 %v3128, %v3200
      %v3202 = vpop.f32.mrf.mxu0
      %v3203 = vadd.f32 %v3130, %v3202
      %3204 = vmatprep.mubr.bf16.mxu0 %v2369
      %3205 = vmatmul.mubr.bf16.gmra.mxu0 %v2368
      %v3206 = vpop.f32.mrf.mxu0
      %v3207 = vadd.f32 %v3134, %v3206
      %v3208 = vpop.f32.mrf.mxu0
      %v3209 = vadd.f32 %v3136, %v3208
      %v3210 = vpop.f32.mrf.mxu0
      %v3211 = vadd.f32 %v3138, %v3210
      %v3212 = vpop.f32.mrf.mxu0
      %v3213 = vadd.f32 %v3140, %v3212
      %3214 = vmatprep.mubr.bf16.mxu0 %v2377
      %3215 = vmatmul.mubr.bf16.gmra.mxu0 %v2376
      %v3216 = vpop.f32.mrf.mxu0
      %v3217 = vadd.f32 %v3144, %v3216
      %v3218 = vpop.f32.mrf.mxu0
      %v3219 = vadd.f32 %v3146, %v3218
      %v3220 = vpop.f32.mrf.mxu0
      %v3221 = vadd.f32 %v3148, %v3220
      %v3222 = vpop.f32.mrf.mxu0
      %v3223 = vadd.f32 %v3150, %v3222
      %3224 = vdwg.mxu0
      %3225 = vmatprep.subr.bf16.mxu0 %v2918
      %3226 = vmatpush1.bf16.msra.mxu0 %v2917
      %3227 = vmatprep.subr.bf16.mxu0 %v2916
      %3228 = vmatpush1.bf16.msra.mxu0 %v2915
      %3229 = vmatprep.subr.bf16.mxu0 %v2914
      %3230 = vmatpush1.bf16.msra.mxu0 %v2913
      %3231 = vmatprep.subr.bf16.mxu0 %v2912
      %3232 = vmatpush1.bf16.msra.mxu0 %v2911
      %3233 = vmatprep.subr.bf16.mxu0 %v2910
      %3234 = vmatpush1.bf16.msra.mxu0 %v2909
      %3235 = vmatprep.subr.bf16.mxu0 %v2908
      %3236 = vmatpush1.bf16.msra.mxu0 %v2907
      %3237 = vmatprep.subr.bf16.mxu0 %v2906
      %3238 = vmatpush1.bf16.msra.mxu0 %v2905
      %3239 = vmatprep.subr.bf16.mxu0 %v2904
      %3240 = vmatpush1.bf16.msra.mxu0 %v2903
      %3241 = vmatprep.subr.bf16.mxu0 %v2934
      %3242 = vmatpush2.bf16.msra.mxu0 %v2933
      %3243 = vmatprep.subr.bf16.mxu0 %v2932
      %3244 = vmatpush2.bf16.msra.mxu0 %v2931
      %3245 = vmatprep.subr.bf16.mxu0 %v2930
      %3246 = vmatpush2.bf16.msra.mxu0 %v2929
      %3247 = vmatprep.subr.bf16.mxu0 %v2928
      %3248 = vmatpush2.bf16.msra.mxu0 %v2927
      %3249 = vmatprep.subr.bf16.mxu0 %v2926
      %3250 = vmatpush2.bf16.msra.mxu0 %v2925
      %3251 = vmatprep.subr.bf16.mxu0 %v2924
      %3252 = vmatpush2.bf16.msra.mxu0 %v2923
      %3253 = vmatprep.subr.bf16.mxu0 %v2922
      %3254 = vmatpush2.bf16.msra.mxu0 %v2921
      %3255 = vmatprep.subr.bf16.mxu0 %v2920
      %3256 = vmatpush2.bf16.msra.mxu0 %v2919
      %3257 = vmatprep.mubr.bf16.mxu0 %v2355
      %3258 = vmatmul.mubr.bf16.gmra.mxu0 %v2354
      %v3259 = vpop.f32.mrf.mxu0
      %v3260 = vadd.f32 %v3187, %v3259
      %v3261 = vpop.f32.mrf.mxu0
      %v3262 = vadd.f32 %v3189, %v3261
      %v3263 = vpop.f32.mrf.mxu0
      %v3264 = vadd.f32 %v3191, %v3263
      %v3265 = vpop.f32.mrf.mxu0
      %v3266 = vadd.f32 %v3193, %v3265
      %3267 = vmatprep.mubr.bf16.mxu0 %v2363
      %3268 = vmatmul.mubr.bf16.gmra.mxu0 %v2362
      %v3269 = vpop.f32.mrf.mxu0
      %v3270 = vadd.f32 %v3197, %v3269
      %v3271 = vpop.f32.mrf.mxu0
      %v3272 = vadd.f32 %v3199, %v3271
      %v3273 = vpop.f32.mrf.mxu0
      %v3274 = vadd.f32 %v3201, %v3273
      %v3275 = vpop.f32.mrf.mxu0
      %v3276 = vadd.f32 %v3203, %v3275
      %3277 = vmatprep.mubr.bf16.mxu0 %v2371
      %3278 = vmatmul.mubr.bf16.gmra.mxu0 %v2370
      %v3279 = vpop.f32.mrf.mxu0
      %v3280 = vadd.f32 %v3207, %v3279
      %v3281 = vpop.f32.mrf.mxu0
      %v3282 = vadd.f32 %v3209, %v3281
      %v3283 = vpop.f32.mrf.mxu0
      %v3284 = vadd.f32 %v3211, %v3283
      %v3285 = vpop.f32.mrf.mxu0
      %v3286 = vadd.f32 %v3213, %v3285
      %3287 = vmatprep.mubr.bf16.mxu0 %v2379
      %3288 = vmatmul.mubr.bf16.gmra.mxu0 %v2378
      %v3289 = vpop.f32.mrf.mxu0
      %v3290 = vadd.f32 %v3217, %v3289
      %v3291 = vpop.f32.mrf.mxu0
      %v3292 = vadd.f32 %v3219, %v3291
      %v3293 = vpop.f32.mrf.mxu0
      %v3294 = vadd.f32 %v3221, %v3293
      %v3295 = vpop.f32.mrf.mxu0
      %v3296 = vadd.f32 %v3223, %v3295
      %3297 = vdwg.mxu0
      %3298 = vmatprep.subr.bf16.mxu0 %v2950
      %3299 = vmatpush1.bf16.msra.mxu0 %v2949
      %3300 = vmatprep.subr.bf16.mxu0 %v2948
      %3301 = vmatpush1.bf16.msra.mxu0 %v2947
      %3302 = vmatprep.subr.bf16.mxu0 %v2946
      %3303 = vmatpush1.bf16.msra.mxu0 %v2945
      %3304 = vmatprep.subr.bf16.mxu0 %v2944
      %3305 = vmatpush1.bf16.msra.mxu0 %v2943
      %3306 = vmatprep.subr.bf16.mxu0 %v2942
      %3307 = vmatpush1.bf16.msra.mxu0 %v2941
      %3308 = vmatprep.subr.bf16.mxu0 %v2940
      %3309 = vmatpush1.bf16.msra.mxu0 %v2939
      %3310 = vmatprep.subr.bf16.mxu0 %v2938
      %3311 = vmatpush1.bf16.msra.mxu0 %v2937
      %3312 = vmatprep.subr.bf16.mxu0 %v2936
      %3313 = vmatpush1.bf16.msra.mxu0 %v2935
      %3314 = vmatprep.subr.bf16.mxu0 0
      %3315 = vmatpush2.bf16.msra.mxu0 0
      %3316 = vmatprep.subr.bf16.mxu0 0
      %3317 = vmatpush2.bf16.msra.mxu0 0
      %3318 = vmatprep.subr.bf16.mxu0 0
      %3319 = vmatpush2.bf16.msra.mxu0 0
      %3320 = vmatprep.subr.bf16.mxu0 0
      %3321 = vmatpush2.bf16.msra.mxu0 0
      %3322 = vmatprep.subr.bf16.mxu0 0
      %3323 = vmatpush2.bf16.msra.mxu0 0
      %3324 = vmatprep.subr.bf16.mxu0 0
      %3325 = vmatpush2.bf16.msra.mxu0 0
      %3326 = vmatprep.subr.bf16.mxu0 0
      %3327 = vmatpush2.bf16.msra.mxu0 0
      %3328 = vmatprep.subr.bf16.mxu0 %v2952
      %3329 = vmatpush2.bf16.msra.mxu0 %v2951
      %3330 = vmatprep.mubr.bf16.mxu0 %v3068
      %3331 = vmatmul.mubr.bf16.gmra.mxu0 %v2356
      %v3332 = vpop.f32.mrf.mxu0
      %v3333 = vadd.f32 %v3260, %v3332
      %v3334 = vpop.f32.mrf.mxu0
      %v3335 = vadd.f32 %v3262, %v3334
      %v3336 = vpop.f32.mrf.mxu0
      %v3337 = vadd.f32 %v3264, %v3336
      %v3338 = vpop.f32.mrf.mxu0
      %v3339 = vadd.f32 %v3266, %v3338
      %3340 = vmatprep.mubr.bf16.mxu0 %v3071
      %3341 = vmatmul.mubr.bf16.gmra.mxu0 %v2364
      %v3342 = vpop.f32.mrf.mxu0
      %v3343 = vadd.f32 %v3270, %v3342
      %v3344 = vpop.f32.mrf.mxu0
      %v3345 = vadd.f32 %v3272, %v3344
      %v3346 = vpop.f32.mrf.mxu0
      %v3347 = vadd.f32 %v3274, %v3346
      %v3348 = vpop.f32.mrf.mxu0
      %v3349 = vadd.f32 %v3276, %v3348
      %3350 = vmatprep.mubr.bf16.mxu0 %v3074
      %3351 = vmatmul.mubr.bf16.gmra.mxu0 %v2372
      %v3352 = vpop.f32.mrf.mxu0
      %v3353 = vadd.f32 %v3280, %v3352
      %v3354 = vpop.f32.mrf.mxu0
      %v3355 = vadd.f32 %v3282, %v3354
      %v3356 = vpop.f32.mrf.mxu0
      %v3357 = vadd.f32 %v3284, %v3356
      %v3358 = vpop.f32.mrf.mxu0
      %v3359 = vadd.f32 %v3286, %v3358
      %3360 = vmatprep.mubr.bf16.mxu0 %v3077
      %3361 = vmatmul.mubr.bf16.gmra.mxu0 %v2380
      %v3362 = vpop.f32.mrf.mxu0
      %v3363 = vadd.f32 %v3290, %v3362
      %v3364 = vpop.f32.mrf.mxu0
      %v3365 = vadd.f32 %v3292, %v3364
      %v3366 = vpop.f32.mrf.mxu0
      %v3367 = vadd.f32 %v3294, %v3366
      %v3368 = vpop.f32.mrf.mxu0
      %v3369 = vadd.f32 %v3296, %v3368
      %3370 = vdwg.mxu0
      %v3371 = vadd.f32 %v2248, %v3333
      %v3372 = vadd.f32 %v2250, %v3335
      %v3373 = vadd.f32 %v2252, %v3337
      %v3374 = vadd.f32 %v2254, %v3339
      %v3375 = vadd.f32 %v2258, %v3343
      %v3376 = vadd.f32 %v2260, %v3345
      %v3377 = vadd.f32 %v2262, %v3347
      %v3378 = vadd.f32 %v2264, %v3349
      %v3379 = vadd.f32 %v2268, %v3353
      %v3380 = vadd.f32 %v2270, %v3355
      %v3381 = vadd.f32 %v2272, %v3357
      %v3382 = vadd.f32 %v2274, %v3359
      %v3383 = vadd.f32 %v2278, %v3363
      %v3384 = vadd.f32 %v2280, %v3365
      %v3385 = vadd.f32 %v2282, %v3367
      %v3386 = vadd.f32 %v2284, %v3369
      %v3387 = vld [vmem:[%s2] ss:$2 sm:$0x3]
      %v3389 = vlaneseq
      %v3390 = vshrl.u32 %v3389, 7
      %v3391 = vsub.s32 0, %v3390
      %v3392 = vrot.slane %v3387, %v3391
      %v3393 = vlaneseq
      %v3394 = vshrl.u32 %v3393, 7
      %v3395 = vsub.s32 1, %v3394
      %v3396 = vrot.slane %v3387, %v3395
      %v3399 = vmul.f32 %v3371, %v3392
      %v3400 = vmul.f32 %v3372, %v3396
      %v3401 = vmul.f32 %v3373, %v3392
      %v3402 = vmul.f32 %v3374, %v3396
      %v3403 = vmul.f32 %v3375, %v3392
      %v3404 = vmul.f32 %v3376, %v3396
      %v3405 = vmul.f32 %v3377, %v3392
      %v3406 = vmul.f32 %v3378, %v3396
      %v3407 = vmul.f32 %v3379, %v3392
      %v3408 = vmul.f32 %v3380, %v3396
      %v3409 = vmul.f32 %v3381, %v3392
      %v3410 = vmul.f32 %v3382, %v3396
      %v3411 = vmul.f32 %v3383, %v3392
      %v3412 = vmul.f32 %v3384, %v3396
      %v3413 = vmul.f32 %v3385, %v3392
      %v3414 = vmul.f32 %v3386, %v3396
      %s3415 = scalar_lea.vmem %s2, 1
      %v3416 = vld [vmem:[%s3415] ss:$2 sm:$0x3]
      %v3418 = vlaneseq
      %v3419 = vshrl.u32 %v3418, 7
      %v3420 = vsub.s32 0, %v3419
      %v3421 = vrot.slane %v3416, %v3420
      %v3422 = vlaneseq
      %v3423 = vshrl.u32 %v3422, 7
      %v3424 = vsub.s32 1, %v3423
      %v3425 = vrot.slane %v3416, %v3424
      %v3428 = vadd.f32 %v3399, %v3421
      %v3429 = vadd.f32 %v3400, %v3425
      %v3430 = vadd.f32 %v3401, %v3421
      %v3431 = vadd.f32 %v3402, %v3425
      %v3432 = vadd.f32 %v3403, %v3421
      %v3433 = vadd.f32 %v3404, %v3425
      %v3434 = vadd.f32 %v3405, %v3421
      %v3435 = vadd.f32 %v3406, %v3425
      %v3436 = vadd.f32 %v3407, %v3421
      %v3437 = vadd.f32 %v3408, %v3425
      %v3438 = vadd.f32 %v3409, %v3421
      %v3439 = vadd.f32 %v3410, %v3425
      %v3440 = vadd.f32 %v3411, %v3421
      %v3441 = vadd.f32 %v3412, %v3425
      %v3442 = vadd.f32 %v3413, %v3421
      %v3443 = vadd.f32 %v3414, %v3425
      %v3444 = vmax.f32 %v3428, 0.0
      %v3445 = vmax.f32 %v3429, 0.0
      %v3446 = vmax.f32 %v3430, 0.0
      %v3447 = vmax.f32 %v3431, 0.0
      %v3448 = vmax.f32 %v3432, 0.0
      %v3449 = vmax.f32 %v3433, 0.0
      %v3450 = vmax.f32 %v3434, 0.0
      %v3451 = vmax.f32 %v3435, 0.0
      %v3452 = vmax.f32 %v3436, 0.0
      %v3453 = vmax.f32 %v3437, 0.0
      %v3454 = vmax.f32 %v3438, 0.0
      %v3455 = vmax.f32 %v3439, 0.0
      %v3456 = vmax.f32 %v3440, 0.0
      %v3457 = vmax.f32 %v3441, 0.0
      %v3458 = vmax.f32 %v3442, 0.0
      %v3459 = vmax.f32 %v3443, 0.0
      %3460 = vst [vmem:[%s170] sm:$0xff] %v3444
      %3461 = vst [vmem:[%s170 + $0x8] sm:$0xff] %v3445
      %3462 = vst [vmem:[%s170 + $0x10] sm:$0xff] %v3446
      %3463 = vst [vmem:[%s170 + $0x18] sm:$0xff] %v3447
      %3464 = vst [vmem:[%s170 + $0x20] sm:$0xff] %v3448
      %3465 = vst [vmem:[%s170 + $0x28] sm:$0xff] %v3449
      %3466 = vst [vmem:[%s170 + $0x30] sm:$0xff] %v3450
      %3467 = vst [vmem:[%s170 + $0x38] sm:$0xff] %v3451
      %3468 = vst [vmem:[%s170 + $0x40] sm:$0xff] %v3452
      %3469 = vst [vmem:[%s170 + $0x48] sm:$0xff] %v3453
      %3470 = vst [vmem:[%s170 + $0x50] sm:$0xff] %v3454
      %3471 = vst [vmem:[%s170 + $0x58] sm:$0xff] %v3455
      %3472 = vst [vmem:[%s170 + $0x60] sm:$0xff] %v3456
      %3473 = vst [vmem:[%s170 + $0x68] sm:$0xff] %v3457
      %3474 = vst [vmem:[%s170 + $0x70] sm:$0xff] %v3458
      %3475 = vst [vmem:[%s170 + $0x78] sm:$0xff] %v3459
      %p3476 = scmp.lt.s32.totalorder %s14, 1
      %s3477 = scalar_select %p3476, %s14, 1
      %s3478 = smul.addr %s3477, 16
      %s3479 = smul.addr %s3478, 8
      %s3480 = scalar_lea.vmem %s3, %s3479
      // Predicated region
      $region33: #{decoder_forward.4} parent=31 // pred_check
        %p3481 = pneg %p100
      $region34: #{decoder_forward.4} parent=31 // pred_check_branch
        %3483 = sbr.rel (%p3481) target = $region36
      $region35: #{decoder_forward.4} parent=31 // pred_region
        _
      $region36: #{decoder_forward.4} parent=31 // pred_fallthru
        _
    $region32: #{decoder_forward.4} parent=5 // pred_fallthru
      _
    %p3484 = scmp.le.s32.totalorder 2, %s9
    // Predicated region
    $region37: #{decoder_forward.4} parent=5 // pred_check
      %p3485 = pneg %p3484
    $region38: #{decoder_forward.4} parent=5 // pred_check_branch
      %3487 = sbr.rel (%p3485) target = $region40
    $region39: #{decoder_forward.4} parent=5 // pred_region
      %s3488 = ssub.s32 %s9, 2
      // Predicated region
      $region41: #{decoder_forward.4} parent=39 // pred_check
        %p3489 = pneg %p106
      $region42: #{decoder_forward.4} parent=39 // pred_check_branch
        %3491 = sbr.rel (%p3489) target = $region44
      $region43: #{decoder_forward.4} parent=39 // pred_region
        %p3492 = scmp.lt.s32.totalorder %s15, 1
        %s3493 = scalar_select %p3492, %s15, 1
        %s3494 = smul.addr %s3493, 16
        %s3495 = smul.addr %s3494, 8
        %s3496 = scalar_lea.vmem %s3, %s3495
      $region44: #{decoder_forward.4} parent=39 // pred_fallthru
        _
    $region40: #{decoder_forward.4} parent=5 // pred_fallthru
      _
  $region6: #{decoder_forward.4} parent=0 // loop_footer
    %s13 = sadd.s32 1, %s9
  $region7: #{decoder_forward.4} parent=0 // loop_footer_branch
    %8 = sbr.rel target = $region3
  $region8: #{decoder_forward.4} parent=0 // loop_exit
    _

</llo_original>
